<compile_context>
chip_gen: v7x
topology: tpu7x:2x2x1
jax: 0.10.0
libtpu: 0.0.40
codegen_flags: <defaults>
</compile_context>

<pallas_src>
import math

import jax
import jax.numpy as jnp
from jax.experimental import pallas as pl
from jax.experimental.pallas import tpu as pltpu

LANE = 128


def _rup(n, m):
    return ((n + m - 1) // m) * m


def _pad_w(w, rows, cols):
    r, c = w.shape
    if r == rows and c == cols:
        return w
    return jnp.pad(w, ((0, rows - r), (0, cols - c)))


def _pad_b(b, cols):
    b = b.reshape(1, -1)
    if b.shape[1] == cols:
        return b
    return jnp.pad(b, ((0, 0), (0, cols - b.shape[1])))


def _make_kernel(n_ch, n_enc_rest, n_dec_rest):
    """Builds the fused autocoder kernel for a fixed (static) layer structure."""

    def _linear(h, w, b, relu):
        # MXU matmul with f32 accumulation; lhs is cast to the weight dtype so a
        # bf16 weight path uses bf16 x bf16 -> f32 on the MXU.
        y = jnp.dot(h.astype(w.dtype), w, preferred_element_type=jnp.float32) + b
        return jnp.maximum(y, 0.0) if relu else y

    def kernel(*refs):
        o_ref = refs[-1]
        it = iter(refs[:-1])
        x_ref = next(it)
        w1_ref = next(it); b1_ref = next(it)          # down layer 1 (stacked over channel)
        w2_ref = next(it); b2_ref = next(it)          # down layer 2 (stacked over channel)
        we0_ref = next(it); be0_ref = next(it)        # encoder layer 0, per-channel row blocks
        enc_rest = [(next(it), next(it)) for _ in range(n_enc_rest)]
        dec_rest = [(next(it), next(it)) for _ in range(n_dec_rest)]
        wdl_ref = next(it); bdl_ref = next(it)        # decoder last layer, per-channel col blocks
        wu1_ref = next(it); bu1_ref = next(it)        # up layer 1 (stacked over channel)
        wu2_ref = next(it); bu2_ref = next(it)        # up layer 2 (stacked over channel)

        vp = w1_ref.shape[1]   # padded per-channel vector length (multiple of 128)

        # --- per-channel "down" DNNs + encoder layer 0 as a row-block accumulation
        acc = None
        for c in range(n_ch):
            xc = x_ref[:, c * vp:(c + 1) * vp]                 # lane-aligned slice
            h = _linear(xc, w1_ref[c], b1_ref[c], relu=True)
            z = _linear(h, w2_ref[c], b2_ref[c], relu=True)
            wb = we0_ref[c]
            p = jnp.dot(z.astype(wb.dtype), wb, preferred_element_type=jnp.float32)
            acc = p if acc is None else acc + p
        h = acc + be0_ref[...]
        if n_enc_rest > 0:            # encoder layer 0 has a ReLU unless it is the final layer
            h = jnp.maximum(h, 0.0)

        # --- remaining encoder layers (last one emits the code; no ReLU)
        for i, (w_ref, b_ref) in enumerate(enc_rest):
            h = _linear(h, w_ref[...], b_ref[...], relu=(i < n_enc_rest - 1))

        # --- decoder layers except the last (all carry a ReLU)
        for (w_ref, b_ref) in dec_rest:
            h = _linear(h, w_ref[...], b_ref[...], relu=True)

        # --- last decoder layer split per channel + "up" DNNs; lane-dense stores
        for c in range(n_ch):
            dec_c = _linear(h, wdl_ref[c], bdl_ref[c], relu=False)
            u = _linear(dec_c, wu1_ref[c], bu1_ref[c], relu=True)
            y = _linear(u, wu2_ref[c], bu2_ref[c], relu=False)
            o_ref[:, c * vp:(c + 1) * vp] = y.astype(o_ref.dtype)

    return kernel


def blocked_autocoder_forward(x, params, *, tile_batch=512, param_dtype=jnp.float32):
    """Fused forward of blocked_AUTOCODER (training/full autoencode path).

    x: (B, 6, vect_length) float32.   Returns (B, 6, vect_length) float32.
    """
    down, enc, dec, up = params["down"], params["encoder"], params["decoder"], params["up"]
    n_ch = len(down)
    B = x.shape[0]
    V = down[0][0][0].shape[0]          # vect_length
    Q = down[0][0][0].shape[1]          # vect_length // 4
    S = down[0][1][0].shape[1]          # vect_length // 8  (step)
    Vp, Qp, Sp = _rup(V, LANE), _rup(Q, LANE), _rup(S, LANE)
    f32 = jnp.float32
    wdt = param_dtype

    # ---- pack + zero-pad parameters into the kernel's flat operand list --------
    flat = []
    flat.append(jnp.stack([_pad_w(down[c][0][0], Vp, Qp) for c in range(n_ch)]).astype(wdt))
    flat.append(jnp.stack([_pad_b(down[c][0][1], Qp) for c in range(n_ch)]).astype(f32))
    flat.append(jnp.stack([_pad_w(down[c][1][0], Qp, Sp) for c in range(n_ch)]).astype(wdt))
    flat.append(jnp.stack([_pad_b(down[c][1][1], Sp) for c in range(n_ch)]).astype(f32))

    we0, be0 = enc[0]
    E0p = _rup(we0.shape[1], LANE)
    flat.append(jnp.stack([_pad_w(we0[c * S:(c + 1) * S, :], Sp, E0p)
                           for c in range(n_ch)]).astype(wdt))
    flat.append(_pad_b(be0, E0p).astype(f32))
    for w, b in enc[1:]:
        op = _rup(w.shape[1], LANE)
        flat.append(_pad_w(w, _rup(w.shape[0], LANE), op).astype(wdt))
        flat.append(_pad_b(b, op).astype(f32))
    for w, b in dec[:-1]:
        op = _rup(w.shape[1], LANE)
        flat.append(_pad_w(w, _rup(w.shape[0], LANE), op).astype(wdt))
        flat.append(_pad_b(b, op).astype(f32))
    wdl, bdl = dec[-1]
    Dp = _rup(wdl.shape[0], LANE)
    flat.append(jnp.stack([_pad_w(wdl[:, c * S:(c + 1) * S], Dp, Sp)
                           for c in range(n_ch)]).astype(wdt))
    flat.append(jnp.stack([_pad_b(bdl[c * S:(c + 1) * S], Sp) for c in range(n_ch)]).astype(f32))
    flat.append(jnp.stack([_pad_w(up[c][0][0], Sp, Qp) for c in range(n_ch)]).astype(wdt))
    flat.append(jnp.stack([_pad_b(up[c][0][1], Qp) for c in range(n_ch)]).astype(f32))
    flat.append(jnp.stack([_pad_w(up[c][1][0], Qp, Vp) for c in range(n_ch)]).astype(wdt))
    flat.append(jnp.stack([_pad_b(up[c][1][1], Vp) for c in range(n_ch)]).astype(f32))

    weight_bytes = sum(int(a.size) * a.dtype.itemsize for a in flat)
    max_feat = max([Vp] + [int(a.shape[-1]) for a in flat])

    # ---- batch tile: as large as the VMEM budget allows (multiple of 8) --------
    TB = min(int(tile_batch), _rup(B, 8))

    def _budget(tb):
        io = tb * n_ch * Vp * 4            # one (TB, 6*Vp) f32 tile
        act = 16 * tb * max_feat * 4       # live-activation estimate
        return 2 * weight_bytes + 4 * io + act + (8 << 20)

    while TB > 8 and _budget(TB) > (48 << 20):
        TB = max(8, _rup(TB // 2, 8))
    # Computed VMEM budget, clamped well below v7x's 64 MiB physical VMEM.
    vmem_limit = int(min(max(_budget(TB), 32 << 20), 48 << 20))

    Bp = _rup(B, TB)
    if Bp != B or Vp != V:
        x = jnp.pad(x, ((0, Bp - B), (0, 0), (0, Vp - V)))
    x_flat = x.reshape(Bp, n_ch * Vp)

    def _resident_spec(a):
        zeros = (0,) * a.ndim
        return pl.BlockSpec(a.shape, lambda i: zeros)   # constant -> fetched once, stays in VMEM

    io_spec = pl.BlockSpec((TB, n_ch * Vp), lambda i: (i, 0))
    in_specs = [io_spec] + [_resident_spec(a) for a in flat]

    kernel = _make_kernel(n_ch, n_enc_rest=len(enc) - 1, n_dec_rest=len(dec) - 1)

    out_flat = pl.pallas_call(
        kernel,
        out_shape=jax.ShapeDtypeStruct((Bp, n_ch * Vp), jnp.float32),
        grid=(Bp // TB,),
        in_specs=in_specs,
        out_specs=io_spec,
        compiler_params=pltpu.CompilerParams(
            dimension_semantics=("parallel",),
            vmem_limit_bytes=vmem_limit,
        ),
    )(x_flat, *flat)

    return out_flat.reshape(Bp, n_ch, Vp)[:B, :, :V]


def init_blocked_autocoder_params(key, vect_length, num_layer=3, code_length=72):
    """Parameters matching blocked_AUTOCODER's layer shapes.

    Weights are stored as (in, out) (the transpose of torch.nn.Linear.weight),
    biases as (out,), with torch's default uniform(+-1/sqrt(fan_in)) init.
    """
    assert vect_length % 8 == 0
    n_ch = 6                       # the torch module hard-codes 6 branches
    V, Q, S = vect_length, vect_length // 4, vect_length // 8
    stacked = 6 * vect_length // 8
    ds = (stacked / code_length) ** (1.0 / num_layer)
    enc_dims = [int(stacked // ds ** i) for i in range(num_layer)] + [code_length]
    dec_dims = [int(code_length * ds ** i) for i in range(num_layer)] + [stacked]

    def next_key():
        nonlocal key
        key, sub = jax.random.split(key)
        return sub

    def linear(k, fan_in, fan_out):
        kw, kb = jax.random.split(k)
        bound = 1.0 / math.sqrt(fan_in)
        w = jax.random.uniform(kw, (fan_in, fan_out), jnp.float32, -bound, bound)
        b = jax.random.uniform(kb, (fan_out,), jnp.float32, -bound, bound)
        return w, b

    down = [(linear(next_key(), V, Q), linear(next_key(), Q, S)) for _ in range(n_ch)]
    encoder = [linear(next_key(), enc_dims[i], enc_dims[i + 1]) for i in range(num_layer)]
    decoder = [linear(next_key(), dec_dims[i], dec_dims[i + 1]) for i in range(num_layer)]
    up = [(linear(next_key(), S, Q), linear(next_key(), Q, V)) for _ in range(n_ch)]
    return {"down": down, "encoder": encoder, "decoder": decoder, "up": up}


def blocked_autocoder_reference(x, params):
    """Pure-JAX reference mirroring the PyTorch forward (training/full path)."""
    down, enc, dec, up = params["down"], params["encoder"], params["decoder"], params["up"]
    n_ch = len(down)
    codes = []
    for c in range(n_ch):
        h = x[:, c, :]
        for w, b in down[c]:
            h = jnp.maximum(h @ w + b, 0.0)
        codes.append(h)
    h = jnp.concatenate(codes, axis=-1)
    for i, (w, b) in enumerate(enc):
        h = h @ w + b
        if i < len(enc) - 1:
            h = jnp.maximum(h, 0.0)
    for i, (w, b) in enumerate(dec):
        h = h @ w + b
        if i < len(dec) - 1:
            h = jnp.maximum(h, 0.0)
    S = up[0][0][0].shape[0]
    outs = []
    for c in range(n_ch):
        (w1, b1), (w2, b2) = up[c]
        u = jnp.maximum(h[:, c * S:(c + 1) * S] @ w1 + b1, 0.0)
        outs.append((u @ w2 + b2)[:, None, :])
    return jnp.concatenate(outs, axis=1)


if __name__ == "__main__":
    batch = 16
    vect_length = 128      # -> V//4 = 32, V//8 = 16, stacked = 96
    num_layer = 3
    code_length = 72

    key = jax.random.PRNGKey(0)
    key, kx = jax.random.split(key)
    x = jax.random.normal(kx, (batch, 6, vect_length), jnp.float32)
    params = init_blocked_autocoder_params(key, vect_length, num_layer, code_length)

    ref = blocked_autocoder_reference(x, params)

    out = blocked_autocoder_forward(x, params)
    out = jax.block_until_ready(out)
    assert out.shape == (batch, 6, vect_length)
    err = float(jnp.max(jnp.abs(out - ref)))
    assert jnp.allclose(out, ref, atol=1e-4, rtol=1e-4), f"f32 max abs err {err}"

    # bf16-weight fast path (v6e/v7x MXU peak); f32 accumulation, loose tolerance.
    out_bf16 = blocked_autocoder_forward(x, params, param_dtype=jnp.bfloat16)
    out_bf16 = jax.block_until_ready(out_bf16)
    err16 = float(jnp.max(jnp.abs(out_bf16 - ref)))
    assert jnp.allclose(out_bf16, ref, atol=2e-1, rtol=2e-1), f"bf16 max abs err {err16}"

    print("KERNEL_OK")
</pallas_src>

<mosaic_0001>
module attributes {stable_mosaic.version = 11 : i64} {
  func.func @kernel(%arg0: i32, %arg1: memref<16x768xf32, #tpu.memory_space<vmem>>, %arg2: memref<6x128x128xf32, #tpu.memory_space<vmem>>, %arg3: memref<6x1x128xf32, #tpu.memory_space<vmem>>, %arg4: memref<6x128x128xf32, #tpu.memory_space<vmem>>, %arg5: memref<6x1x128xf32, #tpu.memory_space<vmem>>, %arg6: memref<6x128x128xf32, #tpu.memory_space<vmem>>, %arg7: memref<1x128xf32, #tpu.memory_space<vmem>>, %arg8: memref<128x128xf32, #tpu.memory_space<vmem>>, %arg9: memref<1x128xf32, #tpu.memory_space<vmem>>, %arg10: memref<128x128xf32, #tpu.memory_space<vmem>>, %arg11: memref<1x128xf32, #tpu.memory_space<vmem>>, %arg12: memref<128x128xf32, #tpu.memory_space<vmem>>, %arg13: memref<1x128xf32, #tpu.memory_space<vmem>>, %arg14: memref<128x128xf32, #tpu.memory_space<vmem>>, %arg15: memref<1x128xf32, #tpu.memory_space<vmem>>, %arg16: memref<6x128x128xf32, #tpu.memory_space<vmem>>, %arg17: memref<6x1x128xf32, #tpu.memory_space<vmem>>, %arg18: memref<6x128x128xf32, #tpu.memory_space<vmem>>, %arg19: memref<6x1x128xf32, #tpu.memory_space<vmem>>, %arg20: memref<6x128x128xf32, #tpu.memory_space<vmem>>, %arg21: memref<6x1x128xf32, #tpu.memory_space<vmem>>, %arg22: memref<16x768xf32, #tpu.memory_space<vmem>>) attributes {dimension_semantics = [#tpu.dimension_semantics<parallel>], iteration_bounds = array<i64: 1>, scalar_prefetch = 0 : i64, scratch_operands = 0 : i64, tpu.core_type = #tpu.core_type<tc>, window_params = [{transform_indices = @transform_0, window_bounds = array<i64: 16, 768>}, {pipeline_mode = #tpu.pipeline_mode<synchronous>, transform_indices = @transform_1, window_bounds = array<i64: 6, 128, 128>}, {pipeline_mode = #tpu.pipeline_mode<synchronous>, transform_indices = @transform_2, window_bounds = array<i64: 6, 1, 128>}, {pipeline_mode = #tpu.pipeline_mode<synchronous>, transform_indices = @transform_3, window_bounds = array<i64: 6, 128, 128>}, {pipeline_mode = #tpu.pipeline_mode<synchronous>, transform_indices = @transform_4, window_bounds = array<i64: 6, 1, 128>}, {pipeline_mode = #tpu.pipeline_mode<synchronous>, transform_indices = @transform_5, window_bounds = array<i64: 6, 128, 128>}, {pipeline_mode = #tpu.pipeline_mode<synchronous>, transform_indices = @transform_6, window_bounds = array<i64: 1, 128>}, {pipeline_mode = #tpu.pipeline_mode<synchronous>, transform_indices = @transform_7, window_bounds = array<i64: 128, 128>}, {pipeline_mode = #tpu.pipeline_mode<synchronous>, transform_indices = @transform_8, window_bounds = array<i64: 1, 128>}, {pipeline_mode = #tpu.pipeline_mode<synchronous>, transform_indices = @transform_9, window_bounds = array<i64: 128, 128>}, {pipeline_mode = #tpu.pipeline_mode<synchronous>, transform_indices = @transform_10, window_bounds = array<i64: 1, 128>}, {pipeline_mode = #tpu.pipeline_mode<synchronous>, transform_indices = @transform_11, window_bounds = array<i64: 128, 128>}, {pipeline_mode = #tpu.pipeline_mode<synchronous>, transform_indices = @transform_12, window_bounds = array<i64: 1, 128>}, {pipeline_mode = #tpu.pipeline_mode<synchronous>, transform_indices = @transform_13, window_bounds = array<i64: 128, 128>}, {pipeline_mode = #tpu.pipeline_mode<synchronous>, transform_indices = @transform_14, window_bounds = array<i64: 1, 128>}, {pipeline_mode = #tpu.pipeline_mode<synchronous>, transform_indices = @transform_15, window_bounds = array<i64: 6, 128, 128>}, {pipeline_mode = #tpu.pipeline_mode<synchronous>, transform_indices = @transform_16, window_bounds = array<i64: 6, 1, 128>}, {pipeline_mode = #tpu.pipeline_mode<synchronous>, transform_indices = @transform_17, window_bounds = array<i64: 6, 128, 128>}, {pipeline_mode = #tpu.pipeline_mode<synchronous>, transform_indices = @transform_18, window_bounds = array<i64: 6, 1, 128>}, {pipeline_mode = #tpu.pipeline_mode<synchronous>, transform_indices = @transform_19, window_bounds = array<i64: 6, 128, 128>}, {pipeline_mode = #tpu.pipeline_mode<synchronous>, transform_indices = @transform_20, window_bounds = array<i64: 6, 1, 128>}, {transform_indices = @transform_21, window_bounds = array<i64: 16, 768>}]} {
    %c0 = arith.constant 0 : index
    %c0_0 = arith.constant 0 : index
    %0 = vector.load %arg1[%c0, %c0_0] : memref<16x768xf32, #tpu.memory_space<vmem>>, vector<16x128xf32>
    %c0_1 = arith.constant 0 : index
    %c0_2 = arith.constant 0 : index
    %c0_3 = arith.constant 0 : index
    %1 = vector.load %arg2[%c0_1, %c0_2, %c0_3] : memref<6x128x128xf32, #tpu.memory_space<vmem>>, vector<1x128x128xf32>
    %2 = vector.shape_cast %1 : vector<1x128x128xf32> to vector<128x128xf32>
    %c0_4 = arith.constant 0 : index
    %c0_5 = arith.constant 0 : index
    %c0_6 = arith.constant 0 : index
    %3 = vector.load %arg3[%c0_4, %c0_5, %c0_6] : memref<6x1x128xf32, #tpu.memory_space<vmem>>, vector<1x1x128xf32>
    %4 = vector.shape_cast %3 : vector<1x1x128xf32> to vector<1x128xf32>
    %cst = arith.constant dense<0.000000e+00> : vector<16x128xf32>
    %5 = tpu.matmul %0, %2, %cst {dimension_numbers = #tpu.dot_dimension_numbers<[1], [0], [0], [1], [0, 0, 1, 1], [], []>} : vector<16x128xf32>, vector<128x128xf32>, vector<16x128xf32> -> vector<16x128xf32>
    %6 = vector.broadcast %4 : vector<1x128xf32> to vector<16x128xf32>
    %7 = arith.addf %5, %6 : vector<16x128xf32>
    %cst_7 = arith.constant 0.000000e+00 : f32
    %8 = vector.broadcast %cst_7 : f32 to vector<16x128xf32>
    %9 = arith.maximumf %7, %8 : vector<16x128xf32>
    %c0_8 = arith.constant 0 : index
    %c0_9 = arith.constant 0 : index
    %c0_10 = arith.constant 0 : index
    %10 = vector.load %arg4[%c0_8, %c0_9, %c0_10] : memref<6x128x128xf32, #tpu.memory_space<vmem>>, vector<1x128x128xf32>
    %11 = vector.shape_cast %10 : vector<1x128x128xf32> to vector<128x128xf32>
    %c0_11 = arith.constant 0 : index
    %c0_12 = arith.constant 0 : index
    %c0_13 = arith.constant 0 : index
    %12 = vector.load %arg5[%c0_11, %c0_12, %c0_13] : memref<6x1x128xf32, #tpu.memory_space<vmem>>, vector<1x1x128xf32>
    %13 = vector.shape_cast %12 : vector<1x1x128xf32> to vector<1x128xf32>
    %cst_14 = arith.constant dense<0.000000e+00> : vector<16x128xf32>
    %14 = tpu.matmul %9, %11, %cst_14 {dimension_numbers = #tpu.dot_dimension_numbers<[1], [0], [0], [1], [0, 0, 1, 1], [], []>} : vector<16x128xf32>, vector<128x128xf32>, vector<16x128xf32> -> vector<16x128xf32>
    %15 = vector.broadcast %13 : vector<1x128xf32> to vector<16x128xf32>
    %16 = arith.addf %14, %15 : vector<16x128xf32>
    %cst_15 = arith.constant 0.000000e+00 : f32
    %17 = vector.broadcast %cst_15 : f32 to vector<16x128xf32>
    %18 = arith.maximumf %16, %17 : vector<16x128xf32>
    %c0_16 = arith.constant 0 : index
    %c0_17 = arith.constant 0 : index
    %c0_18 = arith.constant 0 : index
    %19 = vector.load %arg6[%c0_16, %c0_17, %c0_18] : memref<6x128x128xf32, #tpu.memory_space<vmem>>, vector<1x128x128xf32>
    %20 = vector.shape_cast %19 : vector<1x128x128xf32> to vector<128x128xf32>
    %cst_19 = arith.constant dense<0.000000e+00> : vector<16x128xf32>
    %21 = tpu.matmul %18, %20, %cst_19 {dimension_numbers = #tpu.dot_dimension_numbers<[1], [0], [0], [1], [0, 0, 1, 1], [], []>} : vector<16x128xf32>, vector<128x128xf32>, vector<16x128xf32> -> vector<16x128xf32>
    %c0_20 = arith.constant 0 : index
    %c128 = arith.constant 128 : index
    %22 = vector.load %arg1[%c0_20, %c128] : memref<16x768xf32, #tpu.memory_space<vmem>>, vector<16x128xf32>
    %c1 = arith.constant 1 : index
    %c0_21 = arith.constant 0 : index
    %c0_22 = arith.constant 0 : index
    %23 = vector.load %arg2[%c1, %c0_21, %c0_22] : memref<6x128x128xf32, #tpu.memory_space<vmem>>, vector<1x128x128xf32>
    %24 = vector.shape_cast %23 : vector<1x128x128xf32> to vector<128x128xf32>
    %c1_23 = arith.constant 1 : index
    %c0_24 = arith.constant 0 : index
    %c0_25 = arith.constant 0 : index
    %25 = vector.load %arg3[%c1_23, %c0_24, %c0_25] : memref<6x1x128xf32, #tpu.memory_space<vmem>>, vector<1x1x128xf32>
    %26 = vector.shape_cast %25 : vector<1x1x128xf32> to vector<1x128xf32>
    %cst_26 = arith.constant dense<0.000000e+00> : vector<16x128xf32>
    %27 = tpu.matmul %22, %24, %cst_26 {dimension_numbers = #tpu.dot_dimension_numbers<[1], [0], [0], [1], [0, 0, 1, 1], [], []>} : vector<16x128xf32>, vector<128x128xf32>, vector<16x128xf32> -> vector<16x128xf32>
    %28 = vector.broadcast %26 : vector<1x128xf32> to vector<16x128xf32>
    %29 = arith.addf %27, %28 : vector<16x128xf32>
    %cst_27 = arith.constant 0.000000e+00 : f32
    %30 = vector.broadcast %cst_27 : f32 to vector<16x128xf32>
    %31 = arith.maximumf %29, %30 : vector<16x128xf32>
    %c1_28 = arith.constant 1 : index
    %c0_29 = arith.constant 0 : index
    %c0_30 = arith.constant 0 : index
    %32 = vector.load %arg4[%c1_28, %c0_29, %c0_30] : memref<6x128x128xf32, #tpu.memory_space<vmem>>, vector<1x128x128xf32>
    %33 = vector.shape_cast %32 : vector<1x128x128xf32> to vector<128x128xf32>
    %c1_31 = arith.constant 1 : index
    %c0_32 = arith.constant 0 : index
    %c0_33 = arith.constant 0 : index
    %34 = vector.load %arg5[%c1_31, %c0_32, %c0_33] : memref<6x1x128xf32, #tpu.memory_space<vmem>>, vector<1x1x128xf32>
    %35 = vector.shape_cast %34 : vector<1x1x128xf32> to vector<1x128xf32>
    %cst_34 = arith.constant dense<0.000000e+00> : vector<16x128xf32>
    %36 = tpu.matmul %31, %33, %cst_34 {dimension_numbers = #tpu.dot_dimension_numbers<[1], [0], [0], [1], [0, 0, 1, 1], [], []>} : vector<16x128xf32>, vector<128x128xf32>, vector<16x128xf32> -> vector<16x128xf32>
    %37 = vector.broadcast %35 : vector<1x128xf32> to vector<16x128xf32>
    %38 = arith.addf %36, %37 : vector<16x128xf32>
    %cst_35 = arith.constant 0.000000e+00 : f32
    %39 = vector.broadcast %cst_35 : f32 to vector<16x128xf32>
    %40 = arith.maximumf %38, %39 : vector<16x128xf32>
    %c1_36 = arith.constant 1 : index
    %c0_37 = arith.constant 0 : index
    %c0_38 = arith.constant 0 : index
    %41 = vector.load %arg6[%c1_36, %c0_37, %c0_38] : memref<6x128x128xf32, #tpu.memory_space<vmem>>, vector<1x128x128xf32>
    %42 = vector.shape_cast %41 : vector<1x128x128xf32> to vector<128x128xf32>
    %cst_39 = arith.constant dense<0.000000e+00> : vector<16x128xf32>
    %43 = tpu.matmul %40, %42, %cst_39 {dimension_numbers = #tpu.dot_dimension_numbers<[1], [0], [0], [1], [0, 0, 1, 1], [], []>} : vector<16x128xf32>, vector<128x128xf32>, vector<16x128xf32> -> vector<16x128xf32>
    %44 = arith.addf %21, %43 : vector<16x128xf32>
    %c0_40 = arith.constant 0 : index
    %c256 = arith.constant 256 : index
    %45 = vector.load %arg1[%c0_40, %c256] : memref<16x768xf32, #tpu.memory_space<vmem>>, vector<16x128xf32>
    %c2 = arith.constant 2 : index
    %c0_41 = arith.constant 0 : index
    %c0_42 = arith.constant 0 : index
    %46 = vector.load %arg2[%c2, %c0_41, %c0_42] : memref<6x128x128xf32, #tpu.memory_space<vmem>>, vector<1x128x128xf32>
    %47 = vector.shape_cast %46 : vector<1x128x128xf32> to vector<128x128xf32>
    %c2_43 = arith.constant 2 : index
    %c0_44 = arith.constant 0 : index
    %c0_45 = arith.constant 0 : index
    %48 = vector.load %arg3[%c2_43, %c0_44, %c0_45] : memref<6x1x128xf32, #tpu.memory_space<vmem>>, vector<1x1x128xf32>
    %49 = vector.shape_cast %48 : vector<1x1x128xf32> to vector<1x128xf32>
    %cst_46 = arith.constant dense<0.000000e+00> : vector<16x128xf32>
    %50 = tpu.matmul %45, %47, %cst_46 {dimension_numbers = #tpu.dot_dimension_numbers<[1], [0], [0], [1], [0, 0, 1, 1], [], []>} : vector<16x128xf32>, vector<128x128xf32>, vector<16x128xf32> -> vector<16x128xf32>
    %51 = vector.broadcast %49 : vector<1x128xf32> to vector<16x128xf32>
    %52 = arith.addf %50, %51 : vector<16x128xf32>
    %cst_47 = arith.constant 0.000000e+00 : f32
    %53 = vector.broadcast %cst_47 : f32 to vector<16x128xf32>
    %54 = arith.maximumf %52, %53 : vector<16x128xf32>
    %c2_48 = arith.constant 2 : index
    %c0_49 = arith.constant 0 : index
    %c0_50 = arith.constant 0 : index
    %55 = vector.load %arg4[%c2_48, %c0_49, %c0_50] : memref<6x128x128xf32, #tpu.memory_space<vmem>>, vector<1x128x128xf32>
    %56 = vector.shape_cast %55 : vector<1x128x128xf32> to vector<128x128xf32>
    %c2_51 = arith.constant 2 : index
    %c0_52 = arith.constant 0 : index
    %c0_53 = arith.constant 0 : index
    %57 = vector.load %arg5[%c2_51, %c0_52, %c0_53] : memref<6x1x128xf32, #tpu.memory_space<vmem>>, vector<1x1x128xf32>
    %58 = vector.shape_cast %57 : vector<1x1x128xf32> to vector<1x128xf32>
    %cst_54 = arith.constant dense<0.000000e+00> : vector<16x128xf32>
    %59 = tpu.matmul %54, %56, %cst_54 {dimension_numbers = #tpu.dot_dimension_numbers<[1], [0], [0], [1], [0, 0, 1, 1], [], []>} : vector<16x128xf32>, vector<128x128xf32>, vector<16x128xf32> -> vector<16x128xf32>
    %60 = vector.broadcast %58 : vector<1x128xf32> to vector<16x128xf32>
    %61 = arith.addf %59, %60 : vector<16x128xf32>
    %cst_55 = arith.constant 0.000000e+00 : f32
    %62 = vector.broadcast %cst_55 : f32 to vector<16x128xf32>
    %63 = arith.maximumf %61, %62 : vector<16x128xf32>
    %c2_56 = arith.constant 2 : index
    %c0_57 = arith.constant 0 : index
    %c0_58 = arith.constant 0 : index
    %64 = vector.load %arg6[%c2_56, %c0_57, %c0_58] : memref<6x128x128xf32, #tpu.memory_space<vmem>>, vector<1x128x128xf32>
    %65 = vector.shape_cast %64 : vector<1x128x128xf32> to vector<128x128xf32>
    %cst_59 = arith.constant dense<0.000000e+00> : vector<16x128xf32>
    %66 = tpu.matmul %63, %65, %cst_59 {dimension_numbers = #tpu.dot_dimension_numbers<[1], [0], [0], [1], [0, 0, 1, 1], [], []>} : vector<16x128xf32>, vector<128x128xf32>, vector<16x128xf32> -> vector<16x128xf32>
    %67 = arith.addf %44, %66 : vector<16x128xf32>
    %c0_60 = arith.constant 0 : index
    %c384 = arith.constant 384 : index
    %68 = vector.load %arg1[%c0_60, %c384] : memref<16x768xf32, #tpu.memory_space<vmem>>, vector<16x128xf32>
    %c3 = arith.constant 3 : index
    %c0_61 = arith.constant 0 : index
    %c0_62 = arith.constant 0 : index
    %69 = vector.load %arg2[%c3, %c0_61, %c0_62] : memref<6x128x128xf32, #tpu.memory_space<vmem>>, vector<1x128x128xf32>
    %70 = vector.shape_cast %69 : vector<1x128x128xf32> to vector<128x128xf32>
    %c3_63 = arith.constant 3 : index
    %c0_64 = arith.constant 0 : index
    %c0_65 = arith.constant 0 : index
    %71 = vector.load %arg3[%c3_63, %c0_64, %c0_65] : memref<6x1x128xf32, #tpu.memory_space<vmem>>, vector<1x1x128xf32>
    %72 = vector.shape_cast %71 : vector<1x1x128xf32> to vector<1x128xf32>
    %cst_66 = arith.constant dense<0.000000e+00> : vector<16x128xf32>
    %73 = tpu.matmul %68, %70, %cst_66 {dimension_numbers = #tpu.dot_dimension_numbers<[1], [0], [0], [1], [0, 0, 1, 1], [], []>} : vector<16x128xf32>, vector<128x128xf32>, vector<16x128xf32> -> vector<16x128xf32>
    %74 = vector.broadcast %72 : vector<1x128xf32> to vector<16x128xf32>
    %75 = arith.addf %73, %74 : vector<16x128xf32>
    %cst_67 = arith.constant 0.000000e+00 : f32
    %76 = vector.broadcast %cst_67 : f32 to vector<16x128xf32>
    %77 = arith.maximumf %75, %76 : vector<16x128xf32>
    %c3_68 = arith.constant 3 : index
    %c0_69 = arith.constant 0 : index
    %c0_70 = arith.constant 0 : index
    %78 = vector.load %arg4[%c3_68, %c0_69, %c0_70] : memref<6x128x128xf32, #tpu.memory_space<vmem>>, vector<1x128x128xf32>
    %79 = vector.shape_cast %78 : vector<1x128x128xf32> to vector<128x128xf32>
    %c3_71 = arith.constant 3 : index
    %c0_72 = arith.constant 0 : index
    %c0_73 = arith.constant 0 : index
    %80 = vector.load %arg5[%c3_71, %c0_72, %c0_73] : memref<6x1x128xf32, #tpu.memory_space<vmem>>, vector<1x1x128xf32>
    %81 = vector.shape_cast %80 : vector<1x1x128xf32> to vector<1x128xf32>
    %cst_74 = arith.constant dense<0.000000e+00> : vector<16x128xf32>
    %82 = tpu.matmul %77, %79, %cst_74 {dimension_numbers = #tpu.dot_dimension_numbers<[1], [0], [0], [1], [0, 0, 1, 1], [], []>} : vector<16x128xf32>, vector<128x128xf32>, vector<16x128xf32> -> vector<16x128xf32>
    %83 = vector.broadcast %81 : vector<1x128xf32> to vector<16x128xf32>
    %84 = arith.addf %82, %83 : vector<16x128xf32>
    %cst_75 = arith.constant 0.000000e+00 : f32
    %85 = vector.broadcast %cst_75 : f32 to vector<16x128xf32>
    %86 = arith.maximumf %84, %85 : vector<16x128xf32>
    %c3_76 = arith.constant 3 : index
    %c0_77 = arith.constant 0 : index
    %c0_78 = arith.constant 0 : index
    %87 = vector.load %arg6[%c3_76, %c0_77, %c0_78] : memref<6x128x128xf32, #tpu.memory_space<vmem>>, vector<1x128x128xf32>
    %88 = vector.shape_cast %87 : vector<1x128x128xf32> to vector<128x128xf32>
    %cst_79 = arith.constant dense<0.000000e+00> : vector<16x128xf32>
    %89 = tpu.matmul %86, %88, %cst_79 {dimension_numbers = #tpu.dot_dimension_numbers<[1], [0], [0], [1], [0, 0, 1, 1], [], []>} : vector<16x128xf32>, vector<128x128xf32>, vector<16x128xf32> -> vector<16x128xf32>
    %90 = arith.addf %67, %89 : vector<16x128xf32>
    %c0_80 = arith.constant 0 : index
    %c512 = arith.constant 512 : index
    %91 = vector.load %arg1[%c0_80, %c512] : memref<16x768xf32, #tpu.memory_space<vmem>>, vector<16x128xf32>
    %c4 = arith.constant 4 : index
    %c0_81 = arith.constant 0 : index
    %c0_82 = arith.constant 0 : index
    %92 = vector.load %arg2[%c4, %c0_81, %c0_82] : memref<6x128x128xf32, #tpu.memory_space<vmem>>, vector<1x128x128xf32>
    %93 = vector.shape_cast %92 : vector<1x128x128xf32> to vector<128x128xf32>
    %c4_83 = arith.constant 4 : index
    %c0_84 = arith.constant 0 : index
    %c0_85 = arith.constant 0 : index
    %94 = vector.load %arg3[%c4_83, %c0_84, %c0_85] : memref<6x1x128xf32, #tpu.memory_space<vmem>>, vector<1x1x128xf32>
    %95 = vector.shape_cast %94 : vector<1x1x128xf32> to vector<1x128xf32>
    %cst_86 = arith.constant dense<0.000000e+00> : vector<16x128xf32>
    %96 = tpu.matmul %91, %93, %cst_86 {dimension_numbers = #tpu.dot_dimension_numbers<[1], [0], [0], [1], [0, 0, 1, 1], [], []>} : vector<16x128xf32>, vector<128x128xf32>, vector<16x128xf32> -> vector<16x128xf32>
    %97 = vector.broadcast %95 : vector<1x128xf32> to vector<16x128xf32>
    %98 = arith.addf %96, %97 : vector<16x128xf32>
    %cst_87 = arith.constant 0.000000e+00 : f32
    %99 = vector.broadcast %cst_87 : f32 to vector<16x128xf32>
    %100 = arith.maximumf %98, %99 : vector<16x128xf32>
    %c4_88 = arith.constant 4 : index
    %c0_89 = arith.constant 0 : index
    %c0_90 = arith.constant 0 : index
    %101 = vector.load %arg4[%c4_88, %c0_89, %c0_90] : memref<6x128x128xf32, #tpu.memory_space<vmem>>, vector<1x128x128xf32>
    %102 = vector.shape_cast %101 : vector<1x128x128xf32> to vector<128x128xf32>
    %c4_91 = arith.constant 4 : index
    %c0_92 = arith.constant 0 : index
    %c0_93 = arith.constant 0 : index
    %103 = vector.load %arg5[%c4_91, %c0_92, %c0_93] : memref<6x1x128xf32, #tpu.memory_space<vmem>>, vector<1x1x128xf32>
    %104 = vector.shape_cast %103 : vector<1x1x128xf32> to vector<1x128xf32>
    %cst_94 = arith.constant dense<0.000000e+00> : vector<16x128xf32>
    %105 = tpu.matmul %100, %102, %cst_94 {dimension_numbers = #tpu.dot_dimension_numbers<[1], [0], [0], [1], [0, 0, 1, 1], [], []>} : vector<16x128xf32>, vector<128x128xf32>, vector<16x128xf32> -> vector<16x128xf32>
    %106 = vector.broadcast %104 : vector<1x128xf32> to vector<16x128xf32>
    %107 = arith.addf %105, %106 : vector<16x128xf32>
    %cst_95 = arith.constant 0.000000e+00 : f32
    %108 = vector.broadcast %cst_95 : f32 to vector<16x128xf32>
    %109 = arith.maximumf %107, %108 : vector<16x128xf32>
    %c4_96 = arith.constant 4 : index
    %c0_97 = arith.constant 0 : index
    %c0_98 = arith.constant 0 : index
    %110 = vector.load %arg6[%c4_96, %c0_97, %c0_98] : memref<6x128x128xf32, #tpu.memory_space<vmem>>, vector<1x128x128xf32>
    %111 = vector.shape_cast %110 : vector<1x128x128xf32> to vector<128x128xf32>
    %cst_99 = arith.constant dense<0.000000e+00> : vector<16x128xf32>
    %112 = tpu.matmul %109, %111, %cst_99 {dimension_numbers = #tpu.dot_dimension_numbers<[1], [0], [0], [1], [0, 0, 1, 1], [], []>} : vector<16x128xf32>, vector<128x128xf32>, vector<16x128xf32> -> vector<16x128xf32>
    %113 = arith.addf %90, %112 : vector<16x128xf32>
    %c0_100 = arith.constant 0 : index
    %c640 = arith.constant 640 : index
    %114 = vector.load %arg1[%c0_100, %c640] : memref<16x768xf32, #tpu.memory_space<vmem>>, vector<16x128xf32>
    %c5 = arith.constant 5 : index
    %c0_101 = arith.constant 0 : index
    %c0_102 = arith.constant 0 : index
    %115 = vector.load %arg2[%c5, %c0_101, %c0_102] : memref<6x128x128xf32, #tpu.memory_space<vmem>>, vector<1x128x128xf32>
    %116 = vector.shape_cast %115 : vector<1x128x128xf32> to vector<128x128xf32>
    %c5_103 = arith.constant 5 : index
    %c0_104 = arith.constant 0 : index
    %c0_105 = arith.constant 0 : index
    %117 = vector.load %arg3[%c5_103, %c0_104, %c0_105] : memref<6x1x128xf32, #tpu.memory_space<vmem>>, vector<1x1x128xf32>
    %118 = vector.shape_cast %117 : vector<1x1x128xf32> to vector<1x128xf32>
    %cst_106 = arith.constant dense<0.000000e+00> : vector<16x128xf32>
    %119 = tpu.matmul %114, %116, %cst_106 {dimension_numbers = #tpu.dot_dimension_numbers<[1], [0], [0], [1], [0, 0, 1, 1], [], []>} : vector<16x128xf32>, vector<128x128xf32>, vector<16x128xf32> -> vector<16x128xf32>
    %120 = vector.broadcast %118 : vector<1x128xf32> to vector<16x128xf32>
    %121 = arith.addf %119, %120 : vector<16x128xf32>
    %cst_107 = arith.constant 0.000000e+00 : f32
    %122 = vector.broadcast %cst_107 : f32 to vector<16x128xf32>
    %123 = arith.maximumf %121, %122 : vector<16x128xf32>
    %c5_108 = arith.constant 5 : index
    %c0_109 = arith.constant 0 : index
    %c0_110 = arith.constant 0 : index
    %124 = vector.load %arg4[%c5_108, %c0_109, %c0_110] : memref<6x128x128xf32, #tpu.memory_space<vmem>>, vector<1x128x128xf32>
    %125 = vector.shape_cast %124 : vector<1x128x128xf32> to vector<128x128xf32>
    %c5_111 = arith.constant 5 : index
    %c0_112 = arith.constant 0 : index
    %c0_113 = arith.constant 0 : index
    %126 = vector.load %arg5[%c5_111, %c0_112, %c0_113] : memref<6x1x128xf32, #tpu.memory_space<vmem>>, vector<1x1x128xf32>
    %127 = vector.shape_cast %126 : vector<1x1x128xf32> to vector<1x128xf32>
    %cst_114 = arith.constant dense<0.000000e+00> : vector<16x128xf32>
    %128 = tpu.matmul %123, %125, %cst_114 {dimension_numbers = #tpu.dot_dimension_numbers<[1], [0], [0], [1], [0, 0, 1, 1], [], []>} : vector<16x128xf32>, vector<128x128xf32>, vector<16x128xf32> -> vector<16x128xf32>
    %129 = vector.broadcast %127 : vector<1x128xf32> to vector<16x128xf32>
    %130 = arith.addf %128, %129 : vector<16x128xf32>
    %cst_115 = arith.constant 0.000000e+00 : f32
    %131 = vector.broadcast %cst_115 : f32 to vector<16x128xf32>
    %132 = arith.maximumf %130, %131 : vector<16x128xf32>
    %c5_116 = arith.constant 5 : index
    %c0_117 = arith.constant 0 : index
    %c0_118 = arith.constant 0 : index
    %133 = vector.load %arg6[%c5_116, %c0_117, %c0_118] : memref<6x128x128xf32, #tpu.memory_space<vmem>>, vector<1x128x128xf32>
    %134 = vector.shape_cast %133 : vector<1x128x128xf32> to vector<128x128xf32>
    %cst_119 = arith.constant dense<0.000000e+00> : vector<16x128xf32>
    %135 = tpu.matmul %132, %134, %cst_119 {dimension_numbers = #tpu.dot_dimension_numbers<[1], [0], [0], [1], [0, 0, 1, 1], [], []>} : vector<16x128xf32>, vector<128x128xf32>, vector<16x128xf32> -> vector<16x128xf32>
    %136 = arith.addf %113, %135 : vector<16x128xf32>
    %c0_120 = arith.constant 0 : index
    %c0_121 = arith.constant 0 : index
    %137 = vector.load %arg7[%c0_120, %c0_121] : memref<1x128xf32, #tpu.memory_space<vmem>>, vector<1x128xf32>
    %138 = vector.broadcast %137 : vector<1x128xf32> to vector<16x128xf32>
    %139 = arith.addf %136, %138 : vector<16x128xf32>
    %cst_122 = arith.constant 0.000000e+00 : f32
    %140 = vector.broadcast %cst_122 : f32 to vector<16x128xf32>
    %141 = arith.maximumf %139, %140 : vector<16x128xf32>
    %c0_123 = arith.constant 0 : index
    %c0_124 = arith.constant 0 : index
    %142 = vector.load %arg8[%c0_123, %c0_124] : memref<128x128xf32, #tpu.memory_space<vmem>>, vector<128x128xf32>
    %c0_125 = arith.constant 0 : index
    %c0_126 = arith.constant 0 : index
    %143 = vector.load %arg9[%c0_125, %c0_126] : memref<1x128xf32, #tpu.memory_space<vmem>>, vector<1x128xf32>
    %cst_127 = arith.constant dense<0.000000e+00> : vector<16x128xf32>
    %144 = tpu.matmul %141, %142, %cst_127 {dimension_numbers = #tpu.dot_dimension_numbers<[1], [0], [0], [1], [0, 0, 1, 1], [], []>} : vector<16x128xf32>, vector<128x128xf32>, vector<16x128xf32> -> vector<16x128xf32>
    %145 = vector.broadcast %143 : vector<1x128xf32> to vector<16x128xf32>
    %146 = arith.addf %144, %145 : vector<16x128xf32>
    %cst_128 = arith.constant 0.000000e+00 : f32
    %147 = vector.broadcast %cst_128 : f32 to vector<16x128xf32>
    %148 = arith.maximumf %146, %147 : vector<16x128xf32>
    %c0_129 = arith.constant 0 : index
    %c0_130 = arith.constant 0 : index
    %149 = vector.load %arg10[%c0_129, %c0_130] : memref<128x128xf32, #tpu.memory_space<vmem>>, vector<128x128xf32>
    %c0_131 = arith.constant 0 : index
    %c0_132 = arith.constant 0 : index
    %150 = vector.load %arg11[%c0_131, %c0_132] : memref<1x128xf32, #tpu.memory_space<vmem>>, vector<1x128xf32>
    %cst_133 = arith.constant dense<0.000000e+00> : vector<16x128xf32>
    %151 = tpu.matmul %148, %149, %cst_133 {dimension_numbers = #tpu.dot_dimension_numbers<[1], [0], [0], [1], [0, 0, 1, 1], [], []>} : vector<16x128xf32>, vector<128x128xf32>, vector<16x128xf32> -> vector<16x128xf32>
    %152 = vector.broadcast %150 : vector<1x128xf32> to vector<16x128xf32>
    %153 = arith.addf %151, %152 : vector<16x128xf32>
    %c0_134 = arith.constant 0 : index
    %c0_135 = arith.constant 0 : index
    %154 = vector.load %arg12[%c0_134, %c0_135] : memref<128x128xf32, #tpu.memory_space<vmem>>, vector<128x128xf32>
    %c0_136 = arith.constant 0 : index
    %c0_137 = arith.constant 0 : index
    %155 = vector.load %arg13[%c0_136, %c0_137] : memref<1x128xf32, #tpu.memory_space<vmem>>, vector<1x128xf32>
    %cst_138 = arith.constant dense<0.000000e+00> : vector<16x128xf32>
    %156 = tpu.matmul %153, %154, %cst_138 {dimension_numbers = #tpu.dot_dimension_numbers<[1], [0], [0], [1], [0, 0, 1, 1], [], []>} : vector<16x128xf32>, vector<128x128xf32>, vector<16x128xf32> -> vector<16x128xf32>
    %157 = vector.broadcast %155 : vector<1x128xf32> to vector<16x128xf32>
    %158 = arith.addf %156, %157 : vector<16x128xf32>
    %cst_139 = arith.constant 0.000000e+00 : f32
    %159 = vector.broadcast %cst_139 : f32 to vector<16x128xf32>
    %160 = arith.maximumf %158, %159 : vector<16x128xf32>
    %c0_140 = arith.constant 0 : index
    %c0_141 = arith.constant 0 : index
    %161 = vector.load %arg14[%c0_140, %c0_141] : memref<128x128xf32, #tpu.memory_space<vmem>>, vector<128x128xf32>
    %c0_142 = arith.constant 0 : index
    %c0_143 = arith.constant 0 : index
    %162 = vector.load %arg15[%c0_142, %c0_143] : memref<1x128xf32, #tpu.memory_space<vmem>>, vector<1x128xf32>
    %cst_144 = arith.constant dense<0.000000e+00> : vector<16x128xf32>
    %163 = tpu.matmul %160, %161, %cst_144 {dimension_numbers = #tpu.dot_dimension_numbers<[1], [0], [0], [1], [0, 0, 1, 1], [], []>} : vector<16x128xf32>, vector<128x128xf32>, vector<16x128xf32> -> vector<16x128xf32>
    %164 = vector.broadcast %162 : vector<1x128xf32> to vector<16x128xf32>
    %165 = arith.addf %163, %164 : vector<16x128xf32>
    %cst_145 = arith.constant 0.000000e+00 : f32
    %166 = vector.broadcast %cst_145 : f32 to vector<16x128xf32>
    %167 = arith.maximumf %165, %166 : vector<16x128xf32>
    %c0_146 = arith.constant 0 : index
    %c0_147 = arith.constant 0 : index
    %c0_148 = arith.constant 0 : index
    %168 = vector.load %arg16[%c0_146, %c0_147, %c0_148] : memref<6x128x128xf32, #tpu.memory_space<vmem>>, vector<1x128x128xf32>
    %169 = vector.shape_cast %168 : vector<1x128x128xf32> to vector<128x128xf32>
    %c0_149 = arith.constant 0 : index
    %c0_150 = arith.constant 0 : index
    %c0_151 = arith.constant 0 : index
    %170 = vector.load %arg17[%c0_149, %c0_150, %c0_151] : memref<6x1x128xf32, #tpu.memory_space<vmem>>, vector<1x1x128xf32>
    %171 = vector.shape_cast %170 : vector<1x1x128xf32> to vector<1x128xf32>
    %cst_152 = arith.constant dense<0.000000e+00> : vector<16x128xf32>
    %172 = tpu.matmul %167, %169, %cst_152 {dimension_numbers = #tpu.dot_dimension_numbers<[1], [0], [0], [1], [0, 0, 1, 1], [], []>} : vector<16x128xf32>, vector<128x128xf32>, vector<16x128xf32> -> vector<16x128xf32>
    %173 = vector.broadcast %171 : vector<1x128xf32> to vector<16x128xf32>
    %174 = arith.addf %172, %173 : vector<16x128xf32>
    %c0_153 = arith.constant 0 : index
    %c0_154 = arith.constant 0 : index
    %c0_155 = arith.constant 0 : index
    %175 = vector.load %arg18[%c0_153, %c0_154, %c0_155] : memref<6x128x128xf32, #tpu.memory_space<vmem>>, vector<1x128x128xf32>
    %176 = vector.shape_cast %175 : vector<1x128x128xf32> to vector<128x128xf32>
    %c0_156 = arith.constant 0 : index
    %c0_157 = arith.constant 0 : index
    %c0_158 = arith.constant 0 : index
    %177 = vector.load %arg19[%c0_156, %c0_157, %c0_158] : memref<6x1x128xf32, #tpu.memory_space<vmem>>, vector<1x1x128xf32>
    %178 = vector.shape_cast %177 : vector<1x1x128xf32> to vector<1x128xf32>
    %cst_159 = arith.constant dense<0.000000e+00> : vector<16x128xf32>
    %179 = tpu.matmul %174, %176, %cst_159 {dimension_numbers = #tpu.dot_dimension_numbers<[1], [0], [0], [1], [0, 0, 1, 1], [], []>} : vector<16x128xf32>, vector<128x128xf32>, vector<16x128xf32> -> vector<16x128xf32>
    %180 = vector.broadcast %178 : vector<1x128xf32> to vector<16x128xf32>
    %181 = arith.addf %179, %180 : vector<16x128xf32>
    %cst_160 = arith.constant 0.000000e+00 : f32
    %182 = vector.broadcast %cst_160 : f32 to vector<16x128xf32>
    %183 = arith.maximumf %181, %182 : vector<16x128xf32>
    %c0_161 = arith.constant 0 : index
    %c0_162 = arith.constant 0 : index
    %c0_163 = arith.constant 0 : index
    %184 = vector.load %arg20[%c0_161, %c0_162, %c0_163] : memref<6x128x128xf32, #tpu.memory_space<vmem>>, vector<1x128x128xf32>
    %185 = vector.shape_cast %184 : vector<1x128x128xf32> to vector<128x128xf32>
    %c0_164 = arith.constant 0 : index
    %c0_165 = arith.constant 0 : index
    %c0_166 = arith.constant 0 : index
    %186 = vector.load %arg21[%c0_164, %c0_165, %c0_166] : memref<6x1x128xf32, #tpu.memory_space<vmem>>, vector<1x1x128xf32>
    %187 = vector.shape_cast %186 : vector<1x1x128xf32> to vector<1x128xf32>
    %cst_167 = arith.constant dense<0.000000e+00> : vector<16x128xf32>
    %188 = tpu.matmul %183, %185, %cst_167 {dimension_numbers = #tpu.dot_dimension_numbers<[1], [0], [0], [1], [0, 0, 1, 1], [], []>} : vector<16x128xf32>, vector<128x128xf32>, vector<16x128xf32> -> vector<16x128xf32>
    %189 = vector.broadcast %187 : vector<1x128xf32> to vector<16x128xf32>
    %190 = arith.addf %188, %189 : vector<16x128xf32>
    %c0_168 = arith.constant 0 : index
    %c0_169 = arith.constant 0 : index
    %191 = vector.load %arg22[%c0_168, %c0_169] : memref<16x768xf32, #tpu.memory_space<vmem>>, vector<16x128xf32>
    tpu.vector_store %arg22[%c0_168, %c0_169], %190 {strides = array<i32>} : memref<16x768xf32, #tpu.memory_space<vmem>>, vector<16x128xf32>,
    %c1_170 = arith.constant 1 : index
    %c0_171 = arith.constant 0 : index
    %c0_172 = arith.constant 0 : index
    %192 = vector.load %arg16[%c1_170, %c0_171, %c0_172] : memref<6x128x128xf32, #tpu.memory_space<vmem>>, vector<1x128x128xf32>
    %193 = vector.shape_cast %192 : vector<1x128x128xf32> to vector<128x128xf32>
    %c1_173 = arith.constant 1 : index
    %c0_174 = arith.constant 0 : index
    %c0_175 = arith.constant 0 : index
    %194 = vector.load %arg17[%c1_173, %c0_174, %c0_175] : memref<6x1x128xf32, #tpu.memory_space<vmem>>, vector<1x1x128xf32>
    %195 = vector.shape_cast %194 : vector<1x1x128xf32> to vector<1x128xf32>
    %cst_176 = arith.constant dense<0.000000e+00> : vector<16x128xf32>
    %196 = tpu.matmul %167, %193, %cst_176 {dimension_numbers = #tpu.dot_dimension_numbers<[1], [0], [0], [1], [0, 0, 1, 1], [], []>} : vector<16x128xf32>, vector<128x128xf32>, vector<16x128xf32> -> vector<16x128xf32>
    %197 = vector.broadcast %195 : vector<1x128xf32> to vector<16x128xf32>
    %198 = arith.addf %196, %197 : vector<16x128xf32>
    %c1_177 = arith.constant 1 : index
    %c0_178 = arith.constant 0 : index
    %c0_179 = arith.constant 0 : index
    %199 = vector.load %arg18[%c1_177, %c0_178, %c0_179] : memref<6x128x128xf32, #tpu.memory_space<vmem>>, vector<1x128x128xf32>
    %200 = vector.shape_cast %199 : vector<1x128x128xf32> to vector<128x128xf32>
    %c1_180 = arith.constant 1 : index
    %c0_181 = arith.constant 0 : index
    %c0_182 = arith.constant 0 : index
    %201 = vector.load %arg19[%c1_180, %c0_181, %c0_182] : memref<6x1x128xf32, #tpu.memory_space<vmem>>, vector<1x1x128xf32>
    %202 = vector.shape_cast %201 : vector<1x1x128xf32> to vector<1x128xf32>
    %cst_183 = arith.constant dense<0.000000e+00> : vector<16x128xf32>
    %203 = tpu.matmul %198, %200, %cst_183 {dimension_numbers = #tpu.dot_dimension_numbers<[1], [0], [0], [1], [0, 0, 1, 1], [], []>} : vector<16x128xf32>, vector<128x128xf32>, vector<16x128xf32> -> vector<16x128xf32>
    %204 = vector.broadcast %202 : vector<1x128xf32> to vector<16x128xf32>
    %205 = arith.addf %203, %204 : vector<16x128xf32>
    %cst_184 = arith.constant 0.000000e+00 : f32
    %206 = vector.broadcast %cst_184 : f32 to vector<16x128xf32>
    %207 = arith.maximumf %205, %206 : vector<16x128xf32>
    %c1_185 = arith.constant 1 : index
    %c0_186 = arith.constant 0 : index
    %c0_187 = arith.constant 0 : index
    %208 = vector.load %arg20[%c1_185, %c0_186, %c0_187] : memref<6x128x128xf32, #tpu.memory_space<vmem>>, vector<1x128x128xf32>
    %209 = vector.shape_cast %208 : vector<1x128x128xf32> to vector<128x128xf32>
    %c1_188 = arith.constant 1 : index
    %c0_189 = arith.constant 0 : index
    %c0_190 = arith.constant 0 : index
    %210 = vector.load %arg21[%c1_188, %c0_189, %c0_190] : memref<6x1x128xf32, #tpu.memory_space<vmem>>, vector<1x1x128xf32>
    %211 = vector.shape_cast %210 : vector<1x1x128xf32> to vector<1x128xf32>
    %cst_191 = arith.constant dense<0.000000e+00> : vector<16x128xf32>
    %212 = tpu.matmul %207, %209, %cst_191 {dimension_numbers = #tpu.dot_dimension_numbers<[1], [0], [0], [1], [0, 0, 1, 1], [], []>} : vector<16x128xf32>, vector<128x128xf32>, vector<16x128xf32> -> vector<16x128xf32>
    %213 = vector.broadcast %211 : vector<1x128xf32> to vector<16x128xf32>
    %214 = arith.addf %212, %213 : vector<16x128xf32>
    %c0_192 = arith.constant 0 : index
    %c128_193 = arith.constant 128 : index
    %215 = vector.load %arg22[%c0_192, %c128_193] : memref<16x768xf32, #tpu.memory_space<vmem>>, vector<16x128xf32>
    tpu.vector_store %arg22[%c0_192, %c128_193], %214 {strides = array<i32>} : memref<16x768xf32, #tpu.memory_space<vmem>>, vector<16x128xf32>,
    %c2_194 = arith.constant 2 : index
    %c0_195 = arith.constant 0 : index
    %c0_196 = arith.constant 0 : index
    %216 = vector.load %arg16[%c2_194, %c0_195, %c0_196] : memref<6x128x128xf32, #tpu.memory_space<vmem>>, vector<1x128x128xf32>
    %217 = vector.shape_cast %216 : vector<1x128x128xf32> to vector<128x128xf32>
    %c2_197 = arith.constant 2 : index
    %c0_198 = arith.constant 0 : index
    %c0_199 = arith.constant 0 : index
    %218 = vector.load %arg17[%c2_197, %c0_198, %c0_199] : memref<6x1x128xf32, #tpu.memory_space<vmem>>, vector<1x1x128xf32>
    %219 = vector.shape_cast %218 : vector<1x1x128xf32> to vector<1x128xf32>
    %cst_200 = arith.constant dense<0.000000e+00> : vector<16x128xf32>
    %220 = tpu.matmul %167, %217, %cst_200 {dimension_numbers = #tpu.dot_dimension_numbers<[1], [0], [0], [1], [0, 0, 1, 1], [], []>} : vector<16x128xf32>, vector<128x128xf32>, vector<16x128xf32> -> vector<16x128xf32>
    %221 = vector.broadcast %219 : vector<1x128xf32> to vector<16x128xf32>
    %222 = arith.addf %220, %221 : vector<16x128xf32>
    %c2_201 = arith.constant 2 : index
    %c0_202 = arith.constant 0 : index
    %c0_203 = arith.constant 0 : index
    %223 = vector.load %arg18[%c2_201, %c0_202, %c0_203] : memref<6x128x128xf32, #tpu.memory_space<vmem>>, vector<1x128x128xf32>
    %224 = vector.shape_cast %223 : vector<1x128x128xf32> to vector<128x128xf32>
    %c2_204 = arith.constant 2 : index
    %c0_205 = arith.constant 0 : index
    %c0_206 = arith.constant 0 : index
    %225 = vector.load %arg19[%c2_204, %c0_205, %c0_206] : memref<6x1x128xf32, #tpu.memory_space<vmem>>, vector<1x1x128xf32>
    %226 = vector.shape_cast %225 : vector<1x1x128xf32> to vector<1x128xf32>
    %cst_207 = arith.constant dense<0.000000e+00> : vector<16x128xf32>
    %227 = tpu.matmul %222, %224, %cst_207 {dimension_numbers = #tpu.dot_dimension_numbers<[1], [0], [0], [1], [0, 0, 1, 1], [], []>} : vector<16x128xf32>, vector<128x128xf32>, vector<16x128xf32> -> vector<16x128xf32>
    %228 = vector.broadcast %226 : vector<1x128xf32> to vector<16x128xf32>
    %229 = arith.addf %227, %228 : vector<16x128xf32>
    %cst_208 = arith.constant 0.000000e+00 : f32
    %230 = vector.broadcast %cst_208 : f32 to vector<16x128xf32>
    %231 = arith.maximumf %229, %230 : vector<16x128xf32>
    %c2_209 = arith.constant 2 : index
    %c0_210 = arith.constant 0 : index
    %c0_211 = arith.constant 0 : index
    %232 = vector.load %arg20[%c2_209, %c0_210, %c0_211] : memref<6x128x128xf32, #tpu.memory_space<vmem>>, vector<1x128x128xf32>
    %233 = vector.shape_cast %232 : vector<1x128x128xf32> to vector<128x128xf32>
    %c2_212 = arith.constant 2 : index
    %c0_213 = arith.constant 0 : index
    %c0_214 = arith.constant 0 : index
    %234 = vector.load %arg21[%c2_212, %c0_213, %c0_214] : memref<6x1x128xf32, #tpu.memory_space<vmem>>, vector<1x1x128xf32>
    %235 = vector.shape_cast %234 : vector<1x1x128xf32> to vector<1x128xf32>
    %cst_215 = arith.constant dense<0.000000e+00> : vector<16x128xf32>
    %236 = tpu.matmul %231, %233, %cst_215 {dimension_numbers = #tpu.dot_dimension_numbers<[1], [0], [0], [1], [0, 0, 1, 1], [], []>} : vector<16x128xf32>, vector<128x128xf32>, vector<16x128xf32> -> vector<16x128xf32>
    %237 = vector.broadcast %235 : vector<1x128xf32> to vector<16x128xf32>
    %238 = arith.addf %236, %237 : vector<16x128xf32>
    %c0_216 = arith.constant 0 : index
    %c256_217 = arith.constant 256 : index
    %239 = vector.load %arg22[%c0_216, %c256_217] : memref<16x768xf32, #tpu.memory_space<vmem>>, vector<16x128xf32>
    tpu.vector_store %arg22[%c0_216, %c256_217], %238 {strides = array<i32>} : memref<16x768xf32, #tpu.memory_space<vmem>>, vector<16x128xf32>,
    %c3_218 = arith.constant 3 : index
    %c0_219 = arith.constant 0 : index
    %c0_220 = arith.constant 0 : index
    %240 = vector.load %arg16[%c3_218, %c0_219, %c0_220] : memref<6x128x128xf32, #tpu.memory_space<vmem>>, vector<1x128x128xf32>
    %241 = vector.shape_cast %240 : vector<1x128x128xf32> to vector<128x128xf32>
    %c3_221 = arith.constant 3 : index
    %c0_222 = arith.constant 0 : index
    %c0_223 = arith.constant 0 : index
    %242 = vector.load %arg17[%c3_221, %c0_222, %c0_223] : memref<6x1x128xf32, #tpu.memory_space<vmem>>, vector<1x1x128xf32>
    %243 = vector.shape_cast %242 : vector<1x1x128xf32> to vector<1x128xf32>
    %cst_224 = arith.constant dense<0.000000e+00> : vector<16x128xf32>
    %244 = tpu.matmul %167, %241, %cst_224 {dimension_numbers = #tpu.dot_dimension_numbers<[1], [0], [0], [1], [0, 0, 1, 1], [], []>} : vector<16x128xf32>, vector<128x128xf32>, vector<16x128xf32> -> vector<16x128xf32>
    %245 = vector.broadcast %243 : vector<1x128xf32> to vector<16x128xf32>
    %246 = arith.addf %244, %245 : vector<16x128xf32>
    %c3_225 = arith.constant 3 : index
    %c0_226 = arith.constant 0 : index
    %c0_227 = arith.constant 0 : index
    %247 = vector.load %arg18[%c3_225, %c0_226, %c0_227] : memref<6x128x128xf32, #tpu.memory_space<vmem>>, vector<1x128x128xf32>
    %248 = vector.shape_cast %247 : vector<1x128x128xf32> to vector<128x128xf32>
    %c3_228 = arith.constant 3 : index
    %c0_229 = arith.constant 0 : index
    %c0_230 = arith.constant 0 : index
    %249 = vector.load %arg19[%c3_228, %c0_229, %c0_230] : memref<6x1x128xf32, #tpu.memory_space<vmem>>, vector<1x1x128xf32>
    %250 = vector.shape_cast %249 : vector<1x1x128xf32> to vector<1x128xf32>
    %cst_231 = arith.constant dense<0.000000e+00> : vector<16x128xf32>
    %251 = tpu.matmul %246, %248, %cst_231 {dimension_numbers = #tpu.dot_dimension_numbers<[1], [0], [0], [1], [0, 0, 1, 1], [], []>} : vector<16x128xf32>, vector<128x128xf32>, vector<16x128xf32> -> vector<16x128xf32>
    %252 = vector.broadcast %250 : vector<1x128xf32> to vector<16x128xf32>
    %253 = arith.addf %251, %252 : vector<16x128xf32>
    %cst_232 = arith.constant 0.000000e+00 : f32
    %254 = vector.broadcast %cst_232 : f32 to vector<16x128xf32>
    %255 = arith.maximumf %253, %254 : vector<16x128xf32>
    %c3_233 = arith.constant 3 : index
    %c0_234 = arith.constant 0 : index
    %c0_235 = arith.constant 0 : index
    %256 = vector.load %arg20[%c3_233, %c0_234, %c0_235] : memref<6x128x128xf32, #tpu.memory_space<vmem>>, vector<1x128x128xf32>
    %257 = vector.shape_cast %256 : vector<1x128x128xf32> to vector<128x128xf32>
    %c3_236 = arith.constant 3 : index
    %c0_237 = arith.constant 0 : index
    %c0_238 = arith.constant 0 : index
    %258 = vector.load %arg21[%c3_236, %c0_237, %c0_238] : memref<6x1x128xf32, #tpu.memory_space<vmem>>, vector<1x1x128xf32>
    %259 = vector.shape_cast %258 : vector<1x1x128xf32> to vector<1x128xf32>
    %cst_239 = arith.constant dense<0.000000e+00> : vector<16x128xf32>
    %260 = tpu.matmul %255, %257, %cst_239 {dimension_numbers = #tpu.dot_dimension_numbers<[1], [0], [0], [1], [0, 0, 1, 1], [], []>} : vector<16x128xf32>, vector<128x128xf32>, vector<16x128xf32> -> vector<16x128xf32>
    %261 = vector.broadcast %259 : vector<1x128xf32> to vector<16x128xf32>
    %262 = arith.addf %260, %261 : vector<16x128xf32>
    %c0_240 = arith.constant 0 : index
    %c384_241 = arith.constant 384 : index
    %263 = vector.load %arg22[%c0_240, %c384_241] : memref<16x768xf32, #tpu.memory_space<vmem>>, vector<16x128xf32>
    tpu.vector_store %arg22[%c0_240, %c384_241], %262 {strides = array<i32>} : memref<16x768xf32, #tpu.memory_space<vmem>>, vector<16x128xf32>,
    %c4_242 = arith.constant 4 : index
    %c0_243 = arith.constant 0 : index
    %c0_244 = arith.constant 0 : index
    %264 = vector.load %arg16[%c4_242, %c0_243, %c0_244] : memref<6x128x128xf32, #tpu.memory_space<vmem>>, vector<1x128x128xf32>
    %265 = vector.shape_cast %264 : vector<1x128x128xf32> to vector<128x128xf32>
    %c4_245 = arith.constant 4 : index
    %c0_246 = arith.constant 0 : index
    %c0_247 = arith.constant 0 : index
    %266 = vector.load %arg17[%c4_245, %c0_246, %c0_247] : memref<6x1x128xf32, #tpu.memory_space<vmem>>, vector<1x1x128xf32>
    %267 = vector.shape_cast %266 : vector<1x1x128xf32> to vector<1x128xf32>
    %cst_248 = arith.constant dense<0.000000e+00> : vector<16x128xf32>
    %268 = tpu.matmul %167, %265, %cst_248 {dimension_numbers = #tpu.dot_dimension_numbers<[1], [0], [0], [1], [0, 0, 1, 1], [], []>} : vector<16x128xf32>, vector<128x128xf32>, vector<16x128xf32> -> vector<16x128xf32>
    %269 = vector.broadcast %267 : vector<1x128xf32> to vector<16x128xf32>
    %270 = arith.addf %268, %269 : vector<16x128xf32>
    %c4_249 = arith.constant 4 : index
    %c0_250 = arith.constant 0 : index
    %c0_251 = arith.constant 0 : index
    %271 = vector.load %arg18[%c4_249, %c0_250, %c0_251] : memref<6x128x128xf32, #tpu.memory_space<vmem>>, vector<1x128x128xf32>
    %272 = vector.shape_cast %271 : vector<1x128x128xf32> to vector<128x128xf32>
    %c4_252 = arith.constant 4 : index
    %c0_253 = arith.constant 0 : index
    %c0_254 = arith.constant 0 : index
    %273 = vector.load %arg19[%c4_252, %c0_253, %c0_254] : memref<6x1x128xf32, #tpu.memory_space<vmem>>, vector<1x1x128xf32>
    %274 = vector.shape_cast %273 : vector<1x1x128xf32> to vector<1x128xf32>
    %cst_255 = arith.constant dense<0.000000e+00> : vector<16x128xf32>
    %275 = tpu.matmul %270, %272, %cst_255 {dimension_numbers = #tpu.dot_dimension_numbers<[1], [0], [0], [1], [0, 0, 1, 1], [], []>} : vector<16x128xf32>, vector<128x128xf32>, vector<16x128xf32> -> vector<16x128xf32>
    %276 = vector.broadcast %274 : vector<1x128xf32> to vector<16x128xf32>
    %277 = arith.addf %275, %276 : vector<16x128xf32>
    %cst_256 = arith.constant 0.000000e+00 : f32
    %278 = vector.broadcast %cst_256 : f32 to vector<16x128xf32>
    %279 = arith.maximumf %277, %278 : vector<16x128xf32>
    %c4_257 = arith.constant 4 : index
    %c0_258 = arith.constant 0 : index
    %c0_259 = arith.constant 0 : index
    %280 = vector.load %arg20[%c4_257, %c0_258, %c0_259] : memref<6x128x128xf32, #tpu.memory_space<vmem>>, vector<1x128x128xf32>
    %281 = vector.shape_cast %280 : vector<1x128x128xf32> to vector<128x128xf32>
    %c4_260 = arith.constant 4 : index
    %c0_261 = arith.constant 0 : index
    %c0_262 = arith.constant 0 : index
    %282 = vector.load %arg21[%c4_260, %c0_261, %c0_262] : memref<6x1x128xf32, #tpu.memory_space<vmem>>, vector<1x1x128xf32>
    %283 = vector.shape_cast %282 : vector<1x1x128xf32> to vector<1x128xf32>
    %cst_263 = arith.constant dense<0.000000e+00> : vector<16x128xf32>
    %284 = tpu.matmul %279, %281, %cst_263 {dimension_numbers = #tpu.dot_dimension_numbers<[1], [0], [0], [1], [0, 0, 1, 1], [], []>} : vector<16x128xf32>, vector<128x128xf32>, vector<16x128xf32> -> vector<16x128xf32>
    %285 = vector.broadcast %283 : vector<1x128xf32> to vector<16x128xf32>
    %286 = arith.addf %284, %285 : vector<16x128xf32>
    %c0_264 = arith.constant 0 : index
    %c512_265 = arith.constant 512 : index
    %287 = vector.load %arg22[%c0_264, %c512_265] : memref<16x768xf32, #tpu.memory_space<vmem>>, vector<16x128xf32>
    tpu.vector_store %arg22[%c0_264, %c512_265], %286 {strides = array<i32>} : memref<16x768xf32, #tpu.memory_space<vmem>>, vector<16x128xf32>,
    %c5_266 = arith.constant 5 : index
    %c0_267 = arith.constant 0 : index
    %c0_268 = arith.constant 0 : index
    %288 = vector.load %arg16[%c5_266, %c0_267, %c0_268] : memref<6x128x128xf32, #tpu.memory_space<vmem>>, vector<1x128x128xf32>
    %289 = vector.shape_cast %288 : vector<1x128x128xf32> to vector<128x128xf32>
    %c5_269 = arith.constant 5 : index
    %c0_270 = arith.constant 0 : index
    %c0_271 = arith.constant 0 : index
    %290 = vector.load %arg17[%c5_269, %c0_270, %c0_271] : memref<6x1x128xf32, #tpu.memory_space<vmem>>, vector<1x1x128xf32>
    %291 = vector.shape_cast %290 : vector<1x1x128xf32> to vector<1x128xf32>
    %cst_272 = arith.constant dense<0.000000e+00> : vector<16x128xf32>
    %292 = tpu.matmul %167, %289, %cst_272 {dimension_numbers = #tpu.dot_dimension_numbers<[1], [0], [0], [1], [0, 0, 1, 1], [], []>} : vector<16x128xf32>, vector<128x128xf32>, vector<16x128xf32> -> vector<16x128xf32>
    %293 = vector.broadcast %291 : vector<1x128xf32> to vector<16x128xf32>
    %294 = arith.addf %292, %293 : vector<16x128xf32>
    %c5_273 = arith.constant 5 : index
    %c0_274 = arith.constant 0 : index
    %c0_275 = arith.constant 0 : index
    %295 = vector.load %arg18[%c5_273, %c0_274, %c0_275] : memref<6x128x128xf32, #tpu.memory_space<vmem>>, vector<1x128x128xf32>
    %296 = vector.shape_cast %295 : vector<1x128x128xf32> to vector<128x128xf32>
    %c5_276 = arith.constant 5 : index
    %c0_277 = arith.constant 0 : index
    %c0_278 = arith.constant 0 : index
    %297 = vector.load %arg19[%c5_276, %c0_277, %c0_278] : memref<6x1x128xf32, #tpu.memory_space<vmem>>, vector<1x1x128xf32>
    %298 = vector.shape_cast %297 : vector<1x1x128xf32> to vector<1x128xf32>
    %cst_279 = arith.constant dense<0.000000e+00> : vector<16x128xf32>
    %299 = tpu.matmul %294, %296, %cst_279 {dimension_numbers = #tpu.dot_dimension_numbers<[1], [0], [0], [1], [0, 0, 1, 1], [], []>} : vector<16x128xf32>, vector<128x128xf32>, vector<16x128xf32> -> vector<16x128xf32>
    %300 = vector.broadcast %298 : vector<1x128xf32> to vector<16x128xf32>
    %301 = arith.addf %299, %300 : vector<16x128xf32>
    %cst_280 = arith.constant 0.000000e+00 : f32
    %302 = vector.broadcast %cst_280 : f32 to vector<16x128xf32>
    %303 = arith.maximumf %301, %302 : vector<16x128xf32>
    %c5_281 = arith.constant 5 : index
    %c0_282 = arith.constant 0 : index
    %c0_283 = arith.constant 0 : index
    %304 = vector.load %arg20[%c5_281, %c0_282, %c0_283] : memref<6x128x128xf32, #tpu.memory_space<vmem>>, vector<1x128x128xf32>
    %305 = vector.shape_cast %304 : vector<1x128x128xf32> to vector<128x128xf32>
    %c5_284 = arith.constant 5 : index
    %c0_285 = arith.constant 0 : index
    %c0_286 = arith.constant 0 : index
    %306 = vector.load %arg21[%c5_284, %c0_285, %c0_286] : memref<6x1x128xf32, #tpu.memory_space<vmem>>, vector<1x1x128xf32>
    %307 = vector.shape_cast %306 : vector<1x1x128xf32> to vector<1x128xf32>
    %cst_287 = arith.constant dense<0.000000e+00> : vector<16x128xf32>
    %308 = tpu.matmul %303, %305, %cst_287 {dimension_numbers = #tpu.dot_dimension_numbers<[1], [0], [0], [1], [0, 0, 1, 1], [], []>} : vector<16x128xf32>, vector<128x128xf32>, vector<16x128xf32> -> vector<16x128xf32>
    %309 = vector.broadcast %307 : vector<1x128xf32> to vector<16x128xf32>
    %310 = arith.addf %308, %309 : vector<16x128xf32>
    %c0_288 = arith.constant 0 : index
    %c640_289 = arith.constant 640 : index
    %311 = vector.load %arg22[%c0_288, %c640_289] : memref<16x768xf32, #tpu.memory_space<vmem>>, vector<16x128xf32>
    tpu.vector_store %arg22[%c0_288, %c640_289], %310 {strides = array<i32>} : memref<16x768xf32, #tpu.memory_space<vmem>>, vector<16x128xf32>,
    return
  }
  func.func @transform_0(%arg0: i32) -> (i32, i32) {
    %c0_i32 = arith.constant 0 : i32
    %c0_i32_0 = arith.constant 0 : i32
    return %arg0, %c0_i32 : i32, i32
  }
  func.func @transform_1(%arg0: i32) -> (i32, i32, i32) {
    %c0_i32 = arith.constant 0 : i32
    %c0_i32_0 = arith.constant 0 : i32
    %c0_i32_1 = arith.constant 0 : i32
    %c0_i32_2 = arith.constant 0 : i32
    return %c0_i32, %c0_i32_0, %c0_i32_1 : i32, i32, i32
  }
  func.func @transform_2(%arg0: i32) -> (i32, i32, i32) {
    %c0_i32 = arith.constant 0 : i32
    %c0_i32_0 = arith.constant 0 : i32
    %c0_i32_1 = arith.constant 0 : i32
    %c0_i32_2 = arith.constant 0 : i32
    return %c0_i32, %c0_i32_0, %c0_i32_1 : i32, i32, i32
  }
  func.func @transform_3(%arg0: i32) -> (i32, i32, i32) {
    %c0_i32 = arith.constant 0 : i32
    %c0_i32_0 = arith.constant 0 : i32
    %c0_i32_1 = arith.constant 0 : i32
    %c0_i32_2 = arith.constant 0 : i32
    return %c0_i32, %c0_i32_0, %c0_i32_1 : i32, i32, i32
  }
  func.func @transform_4(%arg0: i32) -> (i32, i32, i32) {
    %c0_i32 = arith.constant 0 : i32
    %c0_i32_0 = arith.constant 0 : i32
    %c0_i32_1 = arith.constant 0 : i32
    %c0_i32_2 = arith.constant 0 : i32
    return %c0_i32, %c0_i32_0, %c0_i32_1 : i32, i32, i32
  }
  func.func @transform_5(%arg0: i32) -> (i32, i32, i32) {
    %c0_i32 = arith.constant 0 : i32
    %c0_i32_0 = arith.constant 0 : i32
    %c0_i32_1 = arith.constant 0 : i32
    %c0_i32_2 = arith.constant 0 : i32
    return %c0_i32, %c0_i32_0, %c0_i32_1 : i32, i32, i32
  }
  func.func @transform_6(%arg0: i32) -> (i32, i32) {
    %c0_i32 = arith.constant 0 : i32
    %c0_i32_0 = arith.constant 0 : i32
    %c0_i32_1 = arith.constant 0 : i32
    return %c0_i32, %c0_i32_0 : i32, i32
  }
  func.func @transform_7(%arg0: i32) -> (i32, i32) {
    %c0_i32 = arith.constant 0 : i32
    %c0_i32_0 = arith.constant 0 : i32
    %c0_i32_1 = arith.constant 0 : i32
    return %c0_i32, %c0_i32_0 : i32, i32
  }
  func.func @transform_8(%arg0: i32) -> (i32, i32) {
    %c0_i32 = arith.constant 0 : i32
    %c0_i32_0 = arith.constant 0 : i32
    %c0_i32_1 = arith.constant 0 : i32
    return %c0_i32, %c0_i32_0 : i32, i32
  }
  func.func @transform_9(%arg0: i32) -> (i32, i32) {
    %c0_i32 = arith.constant 0 : i32
    %c0_i32_0 = arith.constant 0 : i32
    %c0_i32_1 = arith.constant 0 : i32
    return %c0_i32, %c0_i32_0 : i32, i32
  }
  func.func @transform_10(%arg0: i32) -> (i32, i32) {
    %c0_i32 = arith.constant 0 : i32
    %c0_i32_0 = arith.constant 0 : i32
    %c0_i32_1 = arith.constant 0 : i32
    return %c0_i32, %c0_i32_0 : i32, i32
  }
  func.func @transform_11(%arg0: i32) -> (i32, i32) {
    %c0_i32 = arith.constant 0 : i32
    %c0_i32_0 = arith.constant 0 : i32
    %c0_i32_1 = arith.constant 0 : i32
    return %c0_i32, %c0_i32_0 : i32, i32
  }
  func.func @transform_12(%arg0: i32) -> (i32, i32) {
    %c0_i32 = arith.constant 0 : i32
    %c0_i32_0 = arith.constant 0 : i32
    %c0_i32_1 = arith.constant 0 : i32
    return %c0_i32, %c0_i32_0 : i32, i32
  }
  func.func @transform_13(%arg0: i32) -> (i32, i32) {
    %c0_i32 = arith.constant 0 : i32
    %c0_i32_0 = arith.constant 0 : i32
    %c0_i32_1 = arith.constant 0 : i32
    return %c0_i32, %c0_i32_0 : i32, i32
  }
  func.func @transform_14(%arg0: i32) -> (i32, i32) {
    %c0_i32 = arith.constant 0 : i32
    %c0_i32_0 = arith.constant 0 : i32
    %c0_i32_1 = arith.constant 0 : i32
    return %c0_i32, %c0_i32_0 : i32, i32
  }
  func.func @transform_15(%arg0: i32) -> (i32, i32, i32) {
    %c0_i32 = arith.constant 0 : i32
    %c0_i32_0 = arith.constant 0 : i32
    %c0_i32_1 = arith.constant 0 : i32
    %c0_i32_2 = arith.constant 0 : i32
    return %c0_i32, %c0_i32_0, %c0_i32_1 : i32, i32, i32
  }
  func.func @transform_16(%arg0: i32) -> (i32, i32, i32) {
    %c0_i32 = arith.constant 0 : i32
    %c0_i32_0 = arith.constant 0 : i32
    %c0_i32_1 = arith.constant 0 : i32
    %c0_i32_2 = arith.constant 0 : i32
    return %c0_i32, %c0_i32_0, %c0_i32_1 : i32, i32, i32
  }
  func.func @transform_17(%arg0: i32) -> (i32, i32, i32) {
    %c0_i32 = arith.constant 0 : i32
    %c0_i32_0 = arith.constant 0 : i32
    %c0_i32_1 = arith.constant 0 : i32
    %c0_i32_2 = arith.constant 0 : i32
    return %c0_i32, %c0_i32_0, %c0_i32_1 : i32, i32, i32
  }
  func.func @transform_18(%arg0: i32) -> (i32, i32, i32) {
    %c0_i32 = arith.constant 0 : i32
    %c0_i32_0 = arith.constant 0 : i32
    %c0_i32_1 = arith.constant 0 : i32
    %c0_i32_2 = arith.constant 0 : i32
    return %c0_i32, %c0_i32_0, %c0_i32_1 : i32, i32, i32
  }
  func.func @transform_19(%arg0: i32) -> (i32, i32, i32) {
    %c0_i32 = arith.constant 0 : i32
    %c0_i32_0 = arith.constant 0 : i32
    %c0_i32_1 = arith.constant 0 : i32
    %c0_i32_2 = arith.constant 0 : i32
    return %c0_i32, %c0_i32_0, %c0_i32_1 : i32, i32, i32
  }
  func.func @transform_20(%arg0: i32) -> (i32, i32, i32) {
    %c0_i32 = arith.constant 0 : i32
    %c0_i32_0 = arith.constant 0 : i32
    %c0_i32_1 = arith.constant 0 : i32
    %c0_i32_2 = arith.constant 0 : i32
    return %c0_i32, %c0_i32_0, %c0_i32_1 : i32, i32, i32
  }
  func.func @transform_21(%arg0: i32) -> (i32, i32) {
    %c0_i32 = arith.constant 0 : i32
    %c0_i32_0 = arith.constant 0 : i32
    return %arg0, %c0_i32 : i32, i32
  }
}

</mosaic_0001>

<llo_original>
// kernel: tpu_custom_call.1
$region0: #{tpu_custom_call.1}
  #allocation0 [shape = 'u32[]', space=smem, size = 0x4, offset = 0x4, fixed_abs, tag = 'smem constant byte address 0x4 - core index']
  #allocation1 [shape = 'u32[144,128]{1,0:T(1,128)}', space=vmem, size = 0x12000, scoped, tag = 'internal scratch']
  %s0 = inlined_call_operand.hbm [shape: f32[16,768], index: 0, kind: input, shape index: {}]
  %s1 = inlined_call_operand.hbm [shape: f32[6,128,128], index: 1, kind: input, shape index: {}]
  %s2 = inlined_call_operand.vmem [shape: f32[6,1,128], index: 2, kind: input, shape index: {}]
  %s3 = inlined_call_operand.hbm [shape: f32[6,128,128], index: 3, kind: input, shape index: {}]
  %s4 = inlined_call_operand.vmem [shape: f32[6,1,128], index: 4, kind: input, shape index: {}]
  %s5 = inlined_call_operand.hbm [shape: f32[6,128,128], index: 5, kind: input, shape index: {}]
  %s6 = inlined_call_operand.hbm [shape: f32[1,128], index: 6, kind: input, shape index: {}]
  %s7 = inlined_call_operand.hbm [shape: f32[128,128], index: 7, kind: input, shape index: {}]
  %s8 = inlined_call_operand.hbm [shape: f32[1,128], index: 8, kind: input, shape index: {}]
  %s9 = inlined_call_operand.hbm [shape: f32[128,128], index: 9, kind: input, shape index: {}]
  %s10 = inlined_call_operand.vmem [shape: f32[1,128], index: 10, kind: input, shape index: {}]
  %s11 = inlined_call_operand.hbm [shape: f32[128,128], index: 11, kind: input, shape index: {}]
  %s12 = inlined_call_operand.vmem [shape: f32[1,128], index: 12, kind: input, shape index: {}]
  %s13 = inlined_call_operand.hbm [shape: f32[128,128], index: 13, kind: input, shape index: {}]
  %s14 = inlined_call_operand.vmem [shape: f32[1,128], index: 14, kind: input, shape index: {}]
  %s15 = inlined_call_operand.hbm [shape: f32[6,128,128], index: 15, kind: input, shape index: {}]
  %s16 = inlined_call_operand.vmem [shape: f32[6,1,128], index: 16, kind: input, shape index: {}]
  %s17 = inlined_call_operand.hbm [shape: f32[6,128,128], index: 17, kind: input, shape index: {}]
  %s18 = inlined_call_operand.vmem [shape: f32[6,1,128], index: 18, kind: input, shape index: {}]
  %s19 = inlined_call_operand.hbm [shape: f32[6,128,128], index: 19, kind: input, shape index: {}]
  %s20 = inlined_call_operand.vmem [shape: f32[6,1,128], index: 20, kind: input, shape index: {}]
  %s21 = inlined_call_operand.hbm [shape: f32[16,768], index: 21, kind: output, shape index: {}]
  %s22 = sld [smem:[#allocation0]]
  $region146: #{tpu_custom_call.1} parent=0
    _
  %s24 = ssub.s32 1, %s22
  %s25 = scalar_select 0, %s24, %s22
  $region1: #{tpu_custom_call.1} parent=0
    #allocation2 [shape = 'u8[49152]{0}', space=vmem, size = 0xc000, scoped, tag = 'input window, operand 0, single buffered']
    #allocation3 [shape = 's32[1]{0}', space=sflag, size = 0x4, scoped, tag = 'scoped memory for tpu_custom_call.1']
    #allocation4 [shape = 's32[1]{0}', space=sflag, size = 0x4, scoped, tag = 'scoped memory for tpu_custom_call.1']
    #allocation5 [shape = 'u8[393216]{0}', space=vmem, size = 0x60000, scoped, tag = 'input window, operand 1, single buffered']
    #allocation6 [shape = 's32[1]{0}', space=sflag, size = 0x4, scoped, tag = 'scoped memory for tpu_custom_call.1']
    #allocation7 [shape = 'u8[393216]{0}', space=vmem, size = 0x60000, scoped, tag = 'input window, operand 3, single buffered']
    #allocation8 [shape = 'u8[393216]{0}', space=vmem, size = 0x60000, scoped, tag = 'input window, operand 5, single buffered']
    #allocation9 [shape = 's32[1]{0}', space=sflag, size = 0x4, scoped, tag = 'scoped memory for tpu_custom_call.1']
    #allocation10 [shape = 'u8[512]{0}', space=vmem, size = 0x400, scoped, tag = 'input window, operand 6, single buffered']
    #allocation11 [shape = 'u8[65536]{0}', space=vmem, size = 0x10000, scoped, tag = 'input window, operand 7, single buffered']
    #allocation12 [shape = 's32[1]{0}', space=sflag, size = 0x4, scoped, tag = 'scoped memory for tpu_custom_call.1']
    #allocation13 [shape = 'u8[512]{0}', space=vmem, size = 0x400, scoped, tag = 'input window, operand 8, single buffered']
    #allocation14 [shape = 'u8[65536]{0}', space=vmem, size = 0x10000, scoped, tag = 'input window, operand 9, single buffered']
    #allocation15 [shape = 's32[1]{0}', space=sflag, size = 0x4, scoped, tag = 'scoped memory for tpu_custom_call.1']
    #allocation16 [shape = 'u8[65536]{0}', space=vmem, size = 0x10000, scoped, tag = 'input window, operand 11, single buffered']
    #allocation17 [shape = 'u8[65536]{0}', space=vmem, size = 0x10000, scoped, tag = 'input window, operand 13, single buffered']
    #allocation18 [shape = 's32[1]{0}', space=sflag, size = 0x4, scoped, tag = 'scoped memory for tpu_custom_call.1']
    #allocation19 [shape = 'u8[393216]{0}', space=vmem, size = 0x60000, scoped, tag = 'input window, operand 15, single buffered']
    #allocation20 [shape = 'u8[393216]{0}', space=vmem, size = 0x60000, scoped, tag = 'input window, operand 17, single buffered']
    #allocation21 [shape = 's32[1]{0}', space=sflag, size = 0x4, scoped, tag = 'scoped memory for tpu_custom_call.1']
    #allocation22 [shape = 'u8[393216]{0}', space=vmem, size = 0x60000, scoped, tag = 'input window, operand 19, single buffered']
    #allocation23 [shape = 'u8[49152]{0}', space=vmem, size = 0xc000, scoped, tag = 'output window, operand 0, single buffered']
    %26 = vsyncpa [#allocation3], 0
    %27 = vsyncpa [#allocation6], 0
    %28 = vsyncpa [#allocation9], 0
    %29 = vsyncpa [#allocation12], 0
    %30 = vsyncpa [#allocation15], 0
    %31 = vsyncpa [#allocation18], 0
    %32 = vsyncpa [#allocation21], 0
    %33 = vsyncpa [#allocation4], 0
    // Predicated region
    $region2: #{tpu_custom_call.1} parent=1 // pred_check
      _
    $region3: #{tpu_custom_call.1} parent=1 // pred_check_branch
      %35 = sbr.rel (0) target = $region5
    $region4: #{tpu_custom_call.1} parent=1 // pred_region
      %s37 = ssub.s32 1536, 1536
      %38 = vsyncadd [#allocation3], %s37
      %s39 = sshll.u32 [#allocation2], 4
      %s40 = int_to_ptr.vmem [resolvable:$true] %s39
      %45 = dma.hbm_to_vmem [thread:$0]  %s0, 1536, %s40, [#allocation3], 768, 768, 48
    $region5: #{tpu_custom_call.1} parent=1 // pred_fallthru
      _
    // Predicated region
    $region6: #{tpu_custom_call.1} parent=1 // pred_check
      _
    $region7: #{tpu_custom_call.1} parent=1 // pred_check_branch
      %47 = sbr.rel (0) target = $region9
    $region8: #{tpu_custom_call.1} parent=1 // pred_region
      %s49 = ssub.s32 12288, 12288
      %50 = vsyncadd [#allocation6], %s49
      %s51 = sshll.u32 [#allocation5], 4
      %s52 = int_to_ptr.vmem [resolvable:$true] %s51
      %57 = dma.hbm_to_vmem [thread:$0]  %s1, 12288, %s52, [#allocation6], 128, 128, 8
    $region9: #{tpu_custom_call.1} parent=1 // pred_fallthru
      _
    // Predicated region
    $region10: #{tpu_custom_call.1} parent=1 // pred_check
      _
    $region11: #{tpu_custom_call.1} parent=1 // pred_check_branch
      %59 = sbr.rel (0) target = $region13
    $region12: #{tpu_custom_call.1} parent=1 // pred_region
      _
    $region13: #{tpu_custom_call.1} parent=1 // pred_fallthru
      _
    // Predicated region
    $region14: #{tpu_custom_call.1} parent=1 // pred_check
      _
    $region15: #{tpu_custom_call.1} parent=1 // pred_check_branch
      %61 = sbr.rel (0) target = $region17
    $region16: #{tpu_custom_call.1} parent=1 // pred_region
      %s63 = ssub.s32 12288, 12288
      %64 = vsyncadd [#allocation6], %s63
      %s65 = sshll.u32 [#allocation7], 4
      %s66 = int_to_ptr.vmem [resolvable:$true] %s65
      %71 = dma.hbm_to_vmem [thread:$0]  %s3, 12288, %s66, [#allocation6], 128, 128, 8
    $region17: #{tpu_custom_call.1} parent=1 // pred_fallthru
      _
    // Predicated region
    $region18: #{tpu_custom_call.1} parent=1 // pred_check
      _
    $region19: #{tpu_custom_call.1} parent=1 // pred_check_branch
      %73 = sbr.rel (0) target = $region21
    $region20: #{tpu_custom_call.1} parent=1 // pred_region
      _
    $region21: #{tpu_custom_call.1} parent=1 // pred_fallthru
      _
    // Predicated region
    $region22: #{tpu_custom_call.1} parent=1 // pred_check
      _
    $region23: #{tpu_custom_call.1} parent=1 // pred_check_branch
      %75 = sbr.rel (0) target = $region25
    $region24: #{tpu_custom_call.1} parent=1 // pred_region
      %s77 = ssub.s32 12288, 12288
      %78 = vsyncadd [#allocation9], %s77
      %s79 = sshll.u32 [#allocation8], 4
      %s80 = int_to_ptr.vmem [resolvable:$true] %s79
      %85 = dma.hbm_to_vmem [thread:$0]  %s5, 12288, %s80, [#allocation9], 128, 128, 8
    $region25: #{tpu_custom_call.1} parent=1 // pred_fallthru
      _
    // Predicated region
    $region26: #{tpu_custom_call.1} parent=1 // pred_check
      _
    $region27: #{tpu_custom_call.1} parent=1 // pred_check_branch
      %87 = sbr.rel (0) target = $region29
    $region28: #{tpu_custom_call.1} parent=1 // pred_region
      %s89 = ssub.s32 16, 16
      %90 = vsyncadd [#allocation9], %s89
      %s92 = sshll.u32 [#allocation10], 4
      %s93 = int_to_ptr.vmem [resolvable:$true] %s92
      %95 = dma.hbm_to_vmem [thread:$0]  %s6, 16, %s93, [#allocation9]
    $region29: #{tpu_custom_call.1} parent=1 // pred_fallthru
      _
    // Predicated region
    $region30: #{tpu_custom_call.1} parent=1 // pred_check
      _
    $region31: #{tpu_custom_call.1} parent=1 // pred_check_branch
      %97 = sbr.rel (0) target = $region33
    $region32: #{tpu_custom_call.1} parent=1 // pred_region
      %s99 = ssub.s32 2048, 2048
      %100 = vsyncadd [#allocation12], %s99
      %s101 = sshll.u32 [#allocation11], 4
      %s102 = int_to_ptr.vmem [resolvable:$true] %s101
      %107 = dma.hbm_to_vmem [thread:$0]  %s7, 2048, %s102, [#allocation12], 128, 128, 8
    $region33: #{tpu_custom_call.1} parent=1 // pred_fallthru
      _
    // Predicated region
    $region34: #{tpu_custom_call.1} parent=1 // pred_check
      _
    $region35: #{tpu_custom_call.1} parent=1 // pred_check_branch
      %109 = sbr.rel (0) target = $region37
    $region36: #{tpu_custom_call.1} parent=1 // pred_region
      %s111 = ssub.s32 16, 16
      %112 = vsyncadd [#allocation12], %s111
      %s114 = sshll.u32 [#allocation13], 4
      %s115 = int_to_ptr.vmem [resolvable:$true] %s114
      %117 = dma.hbm_to_vmem [thread:$0]  %s8, 16, %s115, [#allocation12]
    $region37: #{tpu_custom_call.1} parent=1 // pred_fallthru
      _
    // Predicated region
    $region38: #{tpu_custom_call.1} parent=1 // pred_check
      _
    $region39: #{tpu_custom_call.1} parent=1 // pred_check_branch
      %119 = sbr.rel (0) target = $region41
    $region40: #{tpu_custom_call.1} parent=1 // pred_region
      %s121 = ssub.s32 2048, 2048
      %122 = vsyncadd [#allocation15], %s121
      %s123 = sshll.u32 [#allocation14], 4
      %s124 = int_to_ptr.vmem [resolvable:$true] %s123
      %129 = dma.hbm_to_vmem [thread:$0]  %s9, 2048, %s124, [#allocation15], 128, 128, 8
    $region41: #{tpu_custom_call.1} parent=1 // pred_fallthru
      _
    // Predicated region
    $region42: #{tpu_custom_call.1} parent=1 // pred_check
      _
    $region43: #{tpu_custom_call.1} parent=1 // pred_check_branch
      %131 = sbr.rel (0) target = $region45
    $region44: #{tpu_custom_call.1} parent=1 // pred_region
      _
    $region45: #{tpu_custom_call.1} parent=1 // pred_fallthru
      _
    // Predicated region
    $region46: #{tpu_custom_call.1} parent=1 // pred_check
      _
    $region47: #{tpu_custom_call.1} parent=1 // pred_check_branch
      %133 = sbr.rel (0) target = $region49
    $region48: #{tpu_custom_call.1} parent=1 // pred_region
      %s135 = ssub.s32 2048, 2048
      %136 = vsyncadd [#allocation15], %s135
      %s137 = sshll.u32 [#allocation16], 4
      %s138 = int_to_ptr.vmem [resolvable:$true] %s137
      %143 = dma.hbm_to_vmem [thread:$0]  %s11, 2048, %s138, [#allocation15], 128, 128, 8
    $region49: #{tpu_custom_call.1} parent=1 // pred_fallthru
      _
    // Predicated region
    $region50: #{tpu_custom_call.1} parent=1 // pred_check
      _
    $region51: #{tpu_custom_call.1} parent=1 // pred_check_branch
      %145 = sbr.rel (0) target = $region53
    $region52: #{tpu_custom_call.1} parent=1 // pred_region
      _
    $region53: #{tpu_custom_call.1} parent=1 // pred_fallthru
      _
    // Predicated region
    $region54: #{tpu_custom_call.1} parent=1 // pred_check
      _
    $region55: #{tpu_custom_call.1} parent=1 // pred_check_branch
      %147 = sbr.rel (0) target = $region57
    $region56: #{tpu_custom_call.1} parent=1 // pred_region
      %s149 = ssub.s32 2048, 2048
      %150 = vsyncadd [#allocation18], %s149
      %s151 = sshll.u32 [#allocation17], 4
      %s152 = int_to_ptr.vmem [resolvable:$true] %s151
      %157 = dma.hbm_to_vmem [thread:$0]  %s13, 2048, %s152, [#allocation18], 128, 128, 8
    $region57: #{tpu_custom_call.1} parent=1 // pred_fallthru
      _
    // Predicated region
    $region58: #{tpu_custom_call.1} parent=1 // pred_check
      _
    $region59: #{tpu_custom_call.1} parent=1 // pred_check_branch
      %159 = sbr.rel (0) target = $region61
    $region60: #{tpu_custom_call.1} parent=1 // pred_region
      _
    $region61: #{tpu_custom_call.1} parent=1 // pred_fallthru
      _
    // Predicated region
    $region62: #{tpu_custom_call.1} parent=1 // pred_check
      _
    $region63: #{tpu_custom_call.1} parent=1 // pred_check_branch
      %161 = sbr.rel (0) target = $region65
    $region64: #{tpu_custom_call.1} parent=1 // pred_region
      %s163 = ssub.s32 12288, 12288
      %164 = vsyncadd [#allocation18], %s163
      %s165 = sshll.u32 [#allocation19], 4
      %s166 = int_to_ptr.vmem [resolvable:$true] %s165
      %171 = dma.hbm_to_vmem [thread:$0]  %s15, 12288, %s166, [#allocation18], 128, 128, 8
    $region65: #{tpu_custom_call.1} parent=1 // pred_fallthru
      _
    // Predicated region
    $region66: #{tpu_custom_call.1} parent=1 // pred_check
      _
    $region67: #{tpu_custom_call.1} parent=1 // pred_check_branch
      %173 = sbr.rel (0) target = $region69
    $region68: #{tpu_custom_call.1} parent=1 // pred_region
      _
    $region69: #{tpu_custom_call.1} parent=1 // pred_fallthru
      _
    // Predicated region
    $region70: #{tpu_custom_call.1} parent=1 // pred_check
      _
    $region71: #{tpu_custom_call.1} parent=1 // pred_check_branch
      %175 = sbr.rel (0) target = $region73
    $region72: #{tpu_custom_call.1} parent=1 // pred_region
      %s177 = ssub.s32 12288, 12288
      %178 = vsyncadd [#allocation21], %s177
      %s179 = sshll.u32 [#allocation20], 4
      %s180 = int_to_ptr.vmem [resolvable:$true] %s179
      %185 = dma.hbm_to_vmem [thread:$0]  %s17, 12288, %s180, [#allocation21], 128, 128, 8
    $region73: #{tpu_custom_call.1} parent=1 // pred_fallthru
      _
    // Predicated region
    $region74: #{tpu_custom_call.1} parent=1 // pred_check
      _
    $region75: #{tpu_custom_call.1} parent=1 // pred_check_branch
      %187 = sbr.rel (0) target = $region77
    $region76: #{tpu_custom_call.1} parent=1 // pred_region
      _
    $region77: #{tpu_custom_call.1} parent=1 // pred_fallthru
      _
    // Predicated region
    $region78: #{tpu_custom_call.1} parent=1 // pred_check
      _
    $region79: #{tpu_custom_call.1} parent=1 // pred_check_branch
      %189 = sbr.rel (0) target = $region81
    $region80: #{tpu_custom_call.1} parent=1 // pred_region
      %s191 = ssub.s32 12288, 12288
      %192 = vsyncadd [#allocation21], %s191
      %s193 = sshll.u32 [#allocation22], 4
      %s194 = int_to_ptr.vmem [resolvable:$true] %s193
      %199 = dma.hbm_to_vmem [thread:$0]  %s19, 12288, %s194, [#allocation21], 128, 128, 8
    $region81: #{tpu_custom_call.1} parent=1 // pred_fallthru
      _
    // Predicated region
    $region82: #{tpu_custom_call.1} parent=1 // pred_check
      _
    $region83: #{tpu_custom_call.1} parent=1 // pred_check_branch
      %201 = sbr.rel (0) target = $region85
    $region84: #{tpu_custom_call.1} parent=1 // pred_region
      _
    $region85: #{tpu_custom_call.1} parent=1 // pred_fallthru
      _
    // Predicated region
    $region86: #{tpu_custom_call.1} parent=1 // pred_check
      _
    $region87: #{tpu_custom_call.1} parent=1 // pred_check_branch
      %203 = sbr.rel (0) target = $region89
    $region88: #{tpu_custom_call.1} parent=1 // pred_region
      %204 = dma.done [#allocation3], 1536
    $region89: #{tpu_custom_call.1} parent=1 // pred_fallthru
      _
    // Predicated region
    $region90: #{tpu_custom_call.1} parent=1 // pred_check
      _
    $region91: #{tpu_custom_call.1} parent=1 // pred_check_branch
      %206 = sbr.rel (0) target = $region93
    $region92: #{tpu_custom_call.1} parent=1 // pred_region
      %207 = dma.done [#allocation6], 12288
    $region93: #{tpu_custom_call.1} parent=1 // pred_fallthru
      _
    // Predicated region
    $region94: #{tpu_custom_call.1} parent=1 // pred_check
      _
    $region95: #{tpu_custom_call.1} parent=1 // pred_check_branch
      %209 = sbr.rel (0) target = $region97
    $region96: #{tpu_custom_call.1} parent=1 // pred_region
      %210 = dma.done [#allocation6], 12288
    $region97: #{tpu_custom_call.1} parent=1 // pred_fallthru
      _
    // Predicated region
    $region98: #{tpu_custom_call.1} parent=1 // pred_check
      _
    $region99: #{tpu_custom_call.1} parent=1 // pred_check_branch
      %212 = sbr.rel (0) target = $region101
    $region100: #{tpu_custom_call.1} parent=1 // pred_region
      %213 = dma.done [#allocation9], 12288
    $region101: #{tpu_custom_call.1} parent=1 // pred_fallthru
      _
    // Predicated region
    $region102: #{tpu_custom_call.1} parent=1 // pred_check
      _
    $region103: #{tpu_custom_call.1} parent=1 // pred_check_branch
      %215 = sbr.rel (0) target = $region105
    $region104: #{tpu_custom_call.1} parent=1 // pred_region
      %216 = dma.done [#allocation9], 16
    $region105: #{tpu_custom_call.1} parent=1 // pred_fallthru
      _
    // Predicated region
    $region106: #{tpu_custom_call.1} parent=1 // pred_check
      _
    $region107: #{tpu_custom_call.1} parent=1 // pred_check_branch
      %218 = sbr.rel (0) target = $region109
    $region108: #{tpu_custom_call.1} parent=1 // pred_region
      %219 = dma.done [#allocation12], 2048
    $region109: #{tpu_custom_call.1} parent=1 // pred_fallthru
      _
    // Predicated region
    $region110: #{tpu_custom_call.1} parent=1 // pred_check
      _
    $region111: #{tpu_custom_call.1} parent=1 // pred_check_branch
      %221 = sbr.rel (0) target = $region113
    $region112: #{tpu_custom_call.1} parent=1 // pred_region
      %222 = dma.done [#allocation12], 16
    $region113: #{tpu_custom_call.1} parent=1 // pred_fallthru
      _
    // Predicated region
    $region114: #{tpu_custom_call.1} parent=1 // pred_check
      _
    $region115: #{tpu_custom_call.1} parent=1 // pred_check_branch
      %224 = sbr.rel (0) target = $region117
    $region116: #{tpu_custom_call.1} parent=1 // pred_region
      %225 = dma.done [#allocation15], 2048
    $region117: #{tpu_custom_call.1} parent=1 // pred_fallthru
      _
    // Predicated region
    $region118: #{tpu_custom_call.1} parent=1 // pred_check
      _
    $region119: #{tpu_custom_call.1} parent=1 // pred_check_branch
      %227 = sbr.rel (0) target = $region121
    $region120: #{tpu_custom_call.1} parent=1 // pred_region
      %228 = dma.done [#allocation15], 2048
    $region121: #{tpu_custom_call.1} parent=1 // pred_fallthru
      _
    // Predicated region
    $region122: #{tpu_custom_call.1} parent=1 // pred_check
      _
    $region123: #{tpu_custom_call.1} parent=1 // pred_check_branch
      %230 = sbr.rel (0) target = $region125
    $region124: #{tpu_custom_call.1} parent=1 // pred_region
      %231 = dma.done [#allocation18], 2048
    $region125: #{tpu_custom_call.1} parent=1 // pred_fallthru
      _
    // Predicated region
    $region126: #{tpu_custom_call.1} parent=1 // pred_check
      _
    $region127: #{tpu_custom_call.1} parent=1 // pred_check_branch
      %233 = sbr.rel (0) target = $region129
    $region128: #{tpu_custom_call.1} parent=1 // pred_region
      %234 = dma.done [#allocation18], 12288
    $region129: #{tpu_custom_call.1} parent=1 // pred_fallthru
      _
    // Predicated region
    $region130: #{tpu_custom_call.1} parent=1 // pred_check
      _
    $region131: #{tpu_custom_call.1} parent=1 // pred_check_branch
      %236 = sbr.rel (0) target = $region133
    $region132: #{tpu_custom_call.1} parent=1 // pred_region
      %237 = dma.done [#allocation21], 12288
    $region133: #{tpu_custom_call.1} parent=1 // pred_fallthru
      _
    // Predicated region
    $region134: #{tpu_custom_call.1} parent=1 // pred_check
      _
    $region135: #{tpu_custom_call.1} parent=1 // pred_check_branch
      %239 = sbr.rel (0) target = $region137
    $region136: #{tpu_custom_call.1} parent=1 // pred_region
      %240 = dma.done [#allocation21], 12288
    $region137: #{tpu_custom_call.1} parent=1 // pred_fallthru
      _
    %v241 = vld [vmem:[#allocation2] sm:$0xff]
    %v242 = vld [vmem:[#allocation2 + $0x30] sm:$0xff]
    %v243 = vld [vmem:[#allocation5] sm:$0xff]
    %v244 = vld [vmem:[#allocation5 + $0x8] sm:$0xff]
    %v245 = vld [vmem:[#allocation5 + $0x10] sm:$0xff]
    %v246 = vld [vmem:[#allocation5 + $0x18] sm:$0xff]
    %v247 = vld [vmem:[#allocation5 + $0x20] sm:$0xff]
    %v248 = vld [vmem:[#allocation5 + $0x28] sm:$0xff]
    %v249 = vld [vmem:[#allocation5 + $0x30] sm:$0xff]
    %v250 = vld [vmem:[#allocation5 + $0x38] sm:$0xff]
    %v251 = vld [vmem:[#allocation5 + $0x40] sm:$0xff]
    %v252 = vld [vmem:[#allocation5 + $0x48] sm:$0xff]
    %v253 = vld [vmem:[#allocation5 + $0x50] sm:$0xff]
    %v254 = vld [vmem:[#allocation5 + $0x58] sm:$0xff]
    %v255 = vld [vmem:[#allocation5 + $0x60] sm:$0xff]
    %v256 = vld [vmem:[#allocation5 + $0x68] sm:$0xff]
    %v257 = vld [vmem:[#allocation5 + $0x70] sm:$0xff]
    %v258 = vld [vmem:[#allocation5 + $0x78] sm:$0xff]
    %v259 = vld [vmem:[%s2] sm:$0x1]
    %v261 = vlaneseq
    %v262 = vshrl.u32 %v261, 7
    %v263 = vsub.s32 0, %v262
    %v264 = vrot.slane %v259, %v263
    %266 = vmatprep.subr.mxu0 0.0
    %267 = vmatpush1.msra.mxu0 %v243
    %268 = vmatprep.subr.mxu0 0.0
    %269 = vmatpush1.msra.mxu0 %v244
    %270 = vmatprep.subr.mxu0 0.0
    %271 = vmatpush1.msra.mxu0 %v245
    %272 = vmatprep.subr.mxu0 0.0
    %273 = vmatpush1.msra.mxu0 %v246
    %274 = vmatprep.subr.mxu0 0.0
    %275 = vmatpush1.msra.mxu0 %v247
    %276 = vmatprep.subr.mxu0 0.0
    %277 = vmatpush1.msra.mxu0 %v248
    %278 = vmatprep.subr.mxu0 0.0
    %279 = vmatpush1.msra.mxu0 %v249
    %280 = vmatprep.subr.mxu0 0.0
    %281 = vmatpush1.msra.mxu0 %v250
    %282 = vmatprep.subr.mxu0 0.0
    %283 = vmatpush1.msra.mxu0 %v251
    %284 = vmatprep.subr.mxu0 0.0
    %285 = vmatpush1.msra.mxu0 %v252
    %286 = vmatprep.subr.mxu0 0.0
    %287 = vmatpush1.msra.mxu0 %v253
    %288 = vmatprep.subr.mxu0 0.0
    %289 = vmatpush1.msra.mxu0 %v254
    %290 = vmatprep.subr.mxu0 0.0
    %291 = vmatpush1.msra.mxu0 %v255
    %292 = vmatprep.subr.mxu0 0.0
    %293 = vmatpush1.msra.mxu0 %v256
    %294 = vmatprep.subr.mxu0 0.0
    %295 = vmatpush1.msra.mxu0 %v257
    %296 = vmatprep.subr.mxu0 0.0
    %297 = vmatpush1.msra.mxu0 %v258
    %298 = vmatprep.subr.mxu0 0.0
    %299 = vmatpush1.msra.mxu0 0.0
    %300 = vmatprep.subr.mxu0 0.0
    %301 = vmatpush1.msra.mxu0 0.0
    %302 = vmatprep.subr.mxu0 0.0
    %303 = vmatpush1.msra.mxu0 0.0
    %304 = vmatprep.subr.mxu0 0.0
    %305 = vmatpush1.msra.mxu0 0.0
    %306 = vmatprep.subr.mxu0 0.0
    %307 = vmatpush1.msra.mxu0 0.0
    %308 = vmatprep.subr.mxu0 0.0
    %309 = vmatpush1.msra.mxu0 0.0
    %310 = vmatprep.subr.mxu0 0.0
    %311 = vmatpush1.msra.mxu0 0.0
    %312 = vmatprep.subr.mxu0 0.0
    %313 = vmatpush1.msra.mxu0 0.0
    %314 = vmatprep.subr.mxu0 0.0
    %315 = vmatpush1.msra.mxu0 0.0
    %316 = vmatprep.subr.mxu0 0.0
    %317 = vmatpush1.msra.mxu0 0.0
    %318 = vmatprep.subr.mxu0 0.0
    %319 = vmatpush1.msra.mxu0 0.0
    %320 = vmatprep.subr.mxu0 0.0
    %321 = vmatpush1.msra.mxu0 0.0
    %322 = vmatprep.subr.mxu0 0.0
    %323 = vmatpush1.msra.mxu0 0.0
    %324 = vmatprep.subr.mxu0 0.0
    %325 = vmatpush1.msra.mxu0 0.0
    %326 = vmatprep.subr.mxu0 0.0
    %327 = vmatpush1.msra.mxu0 0.0
    %328 = vmatprep.subr.mxu0 0.0
    %329 = vmatpush1.msra.mxu0 0.0
    %330 = vmatprep.mubr.f32.mxu0 0.0
    %331 = vmatmul.mubr.f32.gmra.mrb[0].mxu0 %v241
    %v332 = vpop.f32.mrb[0].mxu0
    %v333 = vadd.f32 %v264, %v332
    %v334 = vpop.f32.mrb[0].mxu0
    %335 = vmatprep.mubr.f32.mxu0 0.0
    %336 = vmatmul.mubr.f32.gmra.mrb[0].mxu0 %v242
    %v337 = vpop.f32.mrb[0].mxu0
    %v338 = vadd.f32 %v264, %v337
    %v339 = vpop.f32.mrb[0].mxu0
    %340 = vdwg.mxu0
    %v341 = vmax.f32 %v333, 0.0
    %v342 = vmax.f32 %v338, 0.0
    %v343 = vld [vmem:[#allocation7] sm:$0xff]
    %v344 = vld [vmem:[#allocation7 + $0x8] sm:$0xff]
    %v345 = vld [vmem:[#allocation7 + $0x10] sm:$0xff]
    %v346 = vld [vmem:[#allocation7 + $0x18] sm:$0xff]
    %v347 = vld [vmem:[#allocation7 + $0x20] sm:$0xff]
    %v348 = vld [vmem:[#allocation7 + $0x28] sm:$0xff]
    %v349 = vld [vmem:[#allocation7 + $0x30] sm:$0xff]
    %v350 = vld [vmem:[#allocation7 + $0x38] sm:$0xff]
    %v351 = vld [vmem:[#allocation7 + $0x40] sm:$0xff]
    %v352 = vld [vmem:[#allocation7 + $0x48] sm:$0xff]
    %v353 = vld [vmem:[#allocation7 + $0x50] sm:$0xff]
    %v354 = vld [vmem:[#allocation7 + $0x58] sm:$0xff]
    %v355 = vld [vmem:[#allocation7 + $0x60] sm:$0xff]
    %v356 = vld [vmem:[#allocation7 + $0x68] sm:$0xff]
    %v357 = vld [vmem:[#allocation7 + $0x70] sm:$0xff]
    %v358 = vld [vmem:[#allocation7 + $0x78] sm:$0xff]
    %v359 = vld [vmem:[%s4] sm:$0x1]
    %v361 = vlaneseq
    %v362 = vshrl.u32 %v361, 7
    %v363 = vsub.s32 0, %v362
    %v364 = vrot.slane %v359, %v363
    %366 = vmatprep.subr.mxu0 0.0
    %367 = vmatpush1.msra.mxu0 %v343
    %368 = vmatprep.subr.mxu0 0.0
    %369 = vmatpush1.msra.mxu0 %v344
    %370 = vmatprep.subr.mxu0 0.0
    %371 = vmatpush1.msra.mxu0 %v345
    %372 = vmatprep.subr.mxu0 0.0
    %373 = vmatpush1.msra.mxu0 %v346
    %374 = vmatprep.subr.mxu0 0.0
    %375 = vmatpush1.msra.mxu0 %v347
    %376 = vmatprep.subr.mxu0 0.0
    %377 = vmatpush1.msra.mxu0 %v348
    %378 = vmatprep.subr.mxu0 0.0
    %379 = vmatpush1.msra.mxu0 %v349
    %380 = vmatprep.subr.mxu0 0.0
    %381 = vmatpush1.msra.mxu0 %v350
    %382 = vmatprep.subr.mxu0 0.0
    %383 = vmatpush1.msra.mxu0 %v351
    %384 = vmatprep.subr.mxu0 0.0
    %385 = vmatpush1.msra.mxu0 %v352
    %386 = vmatprep.subr.mxu0 0.0
    %387 = vmatpush1.msra.mxu0 %v353
    %388 = vmatprep.subr.mxu0 0.0
    %389 = vmatpush1.msra.mxu0 %v354
    %390 = vmatprep.subr.mxu0 0.0
    %391 = vmatpush1.msra.mxu0 %v355
    %392 = vmatprep.subr.mxu0 0.0
    %393 = vmatpush1.msra.mxu0 %v356
    %394 = vmatprep.subr.mxu0 0.0
    %395 = vmatpush1.msra.mxu0 %v357
    %396 = vmatprep.subr.mxu0 0.0
    %397 = vmatpush1.msra.mxu0 %v358
    %398 = vmatprep.subr.mxu0 0.0
    %399 = vmatpush1.msra.mxu0 0.0
    %400 = vmatprep.subr.mxu0 0.0
    %401 = vmatpush1.msra.mxu0 0.0
    %402 = vmatprep.subr.mxu0 0.0
    %403 = vmatpush1.msra.mxu0 0.0
    %404 = vmatprep.subr.mxu0 0.0
    %405 = vmatpush1.msra.mxu0 0.0
    %406 = vmatprep.subr.mxu0 0.0
    %407 = vmatpush1.msra.mxu0 0.0
    %408 = vmatprep.subr.mxu0 0.0
    %409 = vmatpush1.msra.mxu0 0.0
    %410 = vmatprep.subr.mxu0 0.0
    %411 = vmatpush1.msra.mxu0 0.0
    %412 = vmatprep.subr.mxu0 0.0
    %413 = vmatpush1.msra.mxu0 0.0
    %414 = vmatprep.subr.mxu0 0.0
    %415 = vmatpush1.msra.mxu0 0.0
    %416 = vmatprep.subr.mxu0 0.0
    %417 = vmatpush1.msra.mxu0 0.0
    %418 = vmatprep.subr.mxu0 0.0
    %419 = vmatpush1.msra.mxu0 0.0
    %420 = vmatprep.subr.mxu0 0.0
    %421 = vmatpush1.msra.mxu0 0.0
    %422 = vmatprep.subr.mxu0 0.0
    %423 = vmatpush1.msra.mxu0 0.0
    %424 = vmatprep.subr.mxu0 0.0
    %425 = vmatpush1.msra.mxu0 0.0
    %426 = vmatprep.subr.mxu0 0.0
    %427 = vmatpush1.msra.mxu0 0.0
    %428 = vmatprep.subr.mxu0 0.0
    %429 = vmatpush1.msra.mxu0 0.0
    %430 = vmatprep.mubr.f32.mxu0 0.0
    %431 = vmatmul.mubr.f32.gmra.mrb[0].mxu0 %v341
    %v432 = vpop.f32.mrb[0].mxu0
    %v433 = vadd.f32 %v364, %v432
    %v434 = vpop.f32.mrb[0].mxu0
    %435 = vmatprep.mubr.f32.mxu0 0.0
    %436 = vmatmul.mubr.f32.gmra.mrb[0].mxu0 %v342
    %v437 = vpop.f32.mrb[0].mxu0
    %v438 = vadd.f32 %v364, %v437
    %v439 = vpop.f32.mrb[0].mxu0
    %440 = vdwg.mxu0
    %v441 = vmax.f32 %v433, 0.0
    %v442 = vmax.f32 %v438, 0.0
    %v443 = vld [vmem:[#allocation8] sm:$0xff]
    %v444 = vld [vmem:[#allocation8 + $0x8] sm:$0xff]
    %v445 = vld [vmem:[#allocation8 + $0x10] sm:$0xff]
    %v446 = vld [vmem:[#allocation8 + $0x18] sm:$0xff]
    %v447 = vld [vmem:[#allocation8 + $0x20] sm:$0xff]
    %v448 = vld [vmem:[#allocation8 + $0x28] sm:$0xff]
    %v449 = vld [vmem:[#allocation8 + $0x30] sm:$0xff]
    %v450 = vld [vmem:[#allocation8 + $0x38] sm:$0xff]
    %v451 = vld [vmem:[#allocation8 + $0x40] sm:$0xff]
    %v452 = vld [vmem:[#allocation8 + $0x48] sm:$0xff]
    %v453 = vld [vmem:[#allocation8 + $0x50] sm:$0xff]
    %v454 = vld [vmem:[#allocation8 + $0x58] sm:$0xff]
    %v455 = vld [vmem:[#allocation8 + $0x60] sm:$0xff]
    %v456 = vld [vmem:[#allocation8 + $0x68] sm:$0xff]
    %v457 = vld [vmem:[#allocation8 + $0x70] sm:$0xff]
    %v458 = vld [vmem:[#allocation8 + $0x78] sm:$0xff]
    %v459 = vld [vmem:[#allocation2 + $0x8] sm:$0xff]
    %v460 = vld [vmem:[#allocation2 + $0x38] sm:$0xff]
    %s461 = scalar_lea.vmem [#allocation5], 128
    %v462 = vld [vmem:[%s461] sm:$0xff]
    %v463 = vld [vmem:[%s461 + $0x8] sm:$0xff]
    %v464 = vld [vmem:[%s461 + $0x10] sm:$0xff]
    %v465 = vld [vmem:[%s461 + $0x18] sm:$0xff]
    %v466 = vld [vmem:[%s461 + $0x20] sm:$0xff]
    %v467 = vld [vmem:[%s461 + $0x28] sm:$0xff]
    %v468 = vld [vmem:[%s461 + $0x30] sm:$0xff]
    %v469 = vld [vmem:[%s461 + $0x38] sm:$0xff]
    %v470 = vld [vmem:[%s461 + $0x40] sm:$0xff]
    %v471 = vld [vmem:[%s461 + $0x48] sm:$0xff]
    %v472 = vld [vmem:[%s461 + $0x50] sm:$0xff]
    %v473 = vld [vmem:[%s461 + $0x58] sm:$0xff]
    %v474 = vld [vmem:[%s461 + $0x60] sm:$0xff]
    %v475 = vld [vmem:[%s461 + $0x68] sm:$0xff]
    %v476 = vld [vmem:[%s461 + $0x70] sm:$0xff]
    %v477 = vld [vmem:[%s461 + $0x78] sm:$0xff]
    %s478 = scalar_lea.vmem %s2, 1
    %v479 = vld [vmem:[%s478] sm:$0x1]
    %v481 = vlaneseq
    %v482 = vshrl.u32 %v481, 7
    %v483 = vsub.s32 0, %v482
    %v484 = vrot.slane %v479, %v483
    %486 = vmatprep.subr.mxu0 0.0
    %487 = vmatpush1.msra.mxu0 %v462
    %488 = vmatprep.subr.mxu0 0.0
    %489 = vmatpush1.msra.mxu0 %v463
    %490 = vmatprep.subr.mxu0 0.0
    %491 = vmatpush1.msra.mxu0 %v464
    %492 = vmatprep.subr.mxu0 0.0
    %493 = vmatpush1.msra.mxu0 %v465
    %494 = vmatprep.subr.mxu0 0.0
    %495 = vmatpush1.msra.mxu0 %v466
    %496 = vmatprep.subr.mxu0 0.0
    %497 = vmatpush1.msra.mxu0 %v467
    %498 = vmatprep.subr.mxu0 0.0
    %499 = vmatpush1.msra.mxu0 %v468
    %500 = vmatprep.subr.mxu0 0.0
    %501 = vmatpush1.msra.mxu0 %v469
    %502 = vmatprep.subr.mxu0 0.0
    %503 = vmatpush1.msra.mxu0 %v470
    %504 = vmatprep.subr.mxu0 0.0
    %505 = vmatpush1.msra.mxu0 %v471
    %506 = vmatprep.subr.mxu0 0.0
    %507 = vmatpush1.msra.mxu0 %v472
    %508 = vmatprep.subr.mxu0 0.0
    %509 = vmatpush1.msra.mxu0 %v473
    %510 = vmatprep.subr.mxu0 0.0
    %511 = vmatpush1.msra.mxu0 %v474
    %512 = vmatprep.subr.mxu0 0.0
    %513 = vmatpush1.msra.mxu0 %v475
    %514 = vmatprep.subr.mxu0 0.0
    %515 = vmatpush1.msra.mxu0 %v476
    %516 = vmatprep.subr.mxu0 0.0
    %517 = vmatpush1.msra.mxu0 %v477
    %518 = vmatprep.subr.mxu0 0.0
    %519 = vmatpush1.msra.mxu0 0.0
    %520 = vmatprep.subr.mxu0 0.0
    %521 = vmatpush1.msra.mxu0 0.0
    %522 = vmatprep.subr.mxu0 0.0
    %523 = vmatpush1.msra.mxu0 0.0
    %524 = vmatprep.subr.mxu0 0.0
    %525 = vmatpush1.msra.mxu0 0.0
    %526 = vmatprep.subr.mxu0 0.0
    %527 = vmatpush1.msra.mxu0 0.0
    %528 = vmatprep.subr.mxu0 0.0
    %529 = vmatpush1.msra.mxu0 0.0
    %530 = vmatprep.subr.mxu0 0.0
    %531 = vmatpush1.msra.mxu0 0.0
    %532 = vmatprep.subr.mxu0 0.0
    %533 = vmatpush1.msra.mxu0 0.0
    %534 = vmatprep.subr.mxu0 0.0
    %535 = vmatpush1.msra.mxu0 0.0
    %536 = vmatprep.subr.mxu0 0.0
    %537 = vmatpush1.msra.mxu0 0.0
    %538 = vmatprep.subr.mxu0 0.0
    %539 = vmatpush1.msra.mxu0 0.0
    %540 = vmatprep.subr.mxu0 0.0
    %541 = vmatpush1.msra.mxu0 0.0
    %542 = vmatprep.subr.mxu0 0.0
    %543 = vmatpush1.msra.mxu0 0.0
    %544 = vmatprep.subr.mxu0 0.0
    %545 = vmatpush1.msra.mxu0 0.0
    %546 = vmatprep.subr.mxu0 0.0
    %547 = vmatpush1.msra.mxu0 0.0
    %548 = vmatprep.subr.mxu0 0.0
    %549 = vmatpush1.msra.mxu0 0.0
    %550 = vmatprep.mubr.f32.mxu0 0.0
    %551 = vmatmul.mubr.f32.gmra.mrb[0].mxu0 %v459
    %v552 = vpop.f32.mrb[0].mxu0
    %v553 = vadd.f32 %v484, %v552
    %v554 = vpop.f32.mrb[0].mxu0
    %555 = vmatprep.mubr.f32.mxu0 0.0
    %556 = vmatmul.mubr.f32.gmra.mrb[0].mxu0 %v460
    %v557 = vpop.f32.mrb[0].mxu0
    %v558 = vadd.f32 %v484, %v557
    %v559 = vpop.f32.mrb[0].mxu0
    %560 = vdwg.mxu0
    %v561 = vmax.f32 %v553, 0.0
    %v562 = vmax.f32 %v558, 0.0
    %s563 = scalar_lea.vmem [#allocation7], 128
    %v564 = vld [vmem:[%s563] sm:$0xff]
    %v565 = vld [vmem:[%s563 + $0x8] sm:$0xff]
    %v566 = vld [vmem:[%s563 + $0x10] sm:$0xff]
    %v567 = vld [vmem:[%s563 + $0x18] sm:$0xff]
    %v568 = vld [vmem:[%s563 + $0x20] sm:$0xff]
    %v569 = vld [vmem:[%s563 + $0x28] sm:$0xff]
    %v570 = vld [vmem:[%s563 + $0x30] sm:$0xff]
    %v571 = vld [vmem:[%s563 + $0x38] sm:$0xff]
    %v572 = vld [vmem:[%s563 + $0x40] sm:$0xff]
    %v573 = vld [vmem:[%s563 + $0x48] sm:$0xff]
    %v574 = vld [vmem:[%s563 + $0x50] sm:$0xff]
    %v575 = vld [vmem:[%s563 + $0x58] sm:$0xff]
    %v576 = vld [vmem:[%s563 + $0x60] sm:$0xff]
    %v577 = vld [vmem:[%s563 + $0x68] sm:$0xff]
    %v578 = vld [vmem:[%s563 + $0x70] sm:$0xff]
    %v579 = vld [vmem:[%s563 + $0x78] sm:$0xff]
    %s580 = scalar_lea.vmem %s4, 1
    %v581 = vld [vmem:[%s580] sm:$0x1]
    %v583 = vlaneseq
    %v584 = vshrl.u32 %v583, 7
    %v585 = vsub.s32 0, %v584
    %v586 = vrot.slane %v581, %v585
    %588 = vmatprep.subr.mxu0 0.0
    %589 = vmatpush1.msra.mxu0 %v564
    %590 = vmatprep.subr.mxu0 0.0
    %591 = vmatpush1.msra.mxu0 %v565
    %592 = vmatprep.subr.mxu0 0.0
    %593 = vmatpush1.msra.mxu0 %v566
    %594 = vmatprep.subr.mxu0 0.0
    %595 = vmatpush1.msra.mxu0 %v567
    %596 = vmatprep.subr.mxu0 0.0
    %597 = vmatpush1.msra.mxu0 %v568
    %598 = vmatprep.subr.mxu0 0.0
    %599 = vmatpush1.msra.mxu0 %v569
    %600 = vmatprep.subr.mxu0 0.0
    %601 = vmatpush1.msra.mxu0 %v570
    %602 = vmatprep.subr.mxu0 0.0
    %603 = vmatpush1.msra.mxu0 %v571
    %604 = vmatprep.subr.mxu0 0.0
    %605 = vmatpush1.msra.mxu0 %v572
    %606 = vmatprep.subr.mxu0 0.0
    %607 = vmatpush1.msra.mxu0 %v573
    %608 = vmatprep.subr.mxu0 0.0
    %609 = vmatpush1.msra.mxu0 %v574
    %610 = vmatprep.subr.mxu0 0.0
    %611 = vmatpush1.msra.mxu0 %v575
    %612 = vmatprep.subr.mxu0 0.0
    %613 = vmatpush1.msra.mxu0 %v576
    %614 = vmatprep.subr.mxu0 0.0
    %615 = vmatpush1.msra.mxu0 %v577
    %616 = vmatprep.subr.mxu0 0.0
    %617 = vmatpush1.msra.mxu0 %v578
    %618 = vmatprep.subr.mxu0 0.0
    %619 = vmatpush1.msra.mxu0 %v579
    %620 = vmatprep.subr.mxu0 0.0
    %621 = vmatpush1.msra.mxu0 0.0
    %622 = vmatprep.subr.mxu0 0.0
    %623 = vmatpush1.msra.mxu0 0.0
    %624 = vmatprep.subr.mxu0 0.0
    %625 = vmatpush1.msra.mxu0 0.0
    %626 = vmatprep.subr.mxu0 0.0
    %627 = vmatpush1.msra.mxu0 0.0
    %628 = vmatprep.subr.mxu0 0.0
    %629 = vmatpush1.msra.mxu0 0.0
    %630 = vmatprep.subr.mxu0 0.0
    %631 = vmatpush1.msra.mxu0 0.0
    %632 = vmatprep.subr.mxu0 0.0
    %633 = vmatpush1.msra.mxu0 0.0
    %634 = vmatprep.subr.mxu0 0.0
    %635 = vmatpush1.msra.mxu0 0.0
    %636 = vmatprep.subr.mxu0 0.0
    %637 = vmatpush1.msra.mxu0 0.0
    %638 = vmatprep.subr.mxu0 0.0
    %639 = vmatpush1.msra.mxu0 0.0
    %640 = vmatprep.subr.mxu0 0.0
    %641 = vmatpush1.msra.mxu0 0.0
    %642 = vmatprep.subr.mxu0 0.0
    %643 = vmatpush1.msra.mxu0 0.0
    %644 = vmatprep.subr.mxu0 0.0
    %645 = vmatpush1.msra.mxu0 0.0
    %646 = vmatprep.subr.mxu0 0.0
    %647 = vmatpush1.msra.mxu0 0.0
    %648 = vmatprep.subr.mxu0 0.0
    %649 = vmatpush1.msra.mxu0 0.0
    %650 = vmatprep.subr.mxu0 0.0
    %651 = vmatpush1.msra.mxu0 0.0
    %652 = vmatprep.mubr.f32.mxu0 0.0
    %653 = vmatmul.mubr.f32.gmra.mrb[0].mxu0 %v561
    %v654 = vpop.f32.mrb[0].mxu0
    %v655 = vadd.f32 %v586, %v654
    %v656 = vpop.f32.mrb[0].mxu0
    %657 = vmatprep.mubr.f32.mxu0 0.0
    %658 = vmatmul.mubr.f32.gmra.mrb[0].mxu0 %v562
    %v659 = vpop.f32.mrb[0].mxu0
    %v660 = vadd.f32 %v586, %v659
    %v661 = vpop.f32.mrb[0].mxu0
    %662 = vdwg.mxu0
    %v663 = vmax.f32 %v655, 0.0
    %v664 = vmax.f32 %v660, 0.0
    %s665 = scalar_lea.vmem [#allocation8], 128
    %v666 = vld [vmem:[%s665] sm:$0xff]
    %v667 = vld [vmem:[%s665 + $0x8] sm:$0xff]
    %v668 = vld [vmem:[%s665 + $0x10] sm:$0xff]
    %v669 = vld [vmem:[%s665 + $0x18] sm:$0xff]
    %v670 = vld [vmem:[%s665 + $0x20] sm:$0xff]
    %v671 = vld [vmem:[%s665 + $0x28] sm:$0xff]
    %v672 = vld [vmem:[%s665 + $0x30] sm:$0xff]
    %v673 = vld [vmem:[%s665 + $0x38] sm:$0xff]
    %v674 = vld [vmem:[%s665 + $0x40] sm:$0xff]
    %v675 = vld [vmem:[%s665 + $0x48] sm:$0xff]
    %v676 = vld [vmem:[%s665 + $0x50] sm:$0xff]
    %v677 = vld [vmem:[%s665 + $0x58] sm:$0xff]
    %v678 = vld [vmem:[%s665 + $0x60] sm:$0xff]
    %v679 = vld [vmem:[%s665 + $0x68] sm:$0xff]
    %v680 = vld [vmem:[%s665 + $0x70] sm:$0xff]
    %v681 = vld [vmem:[%s665 + $0x78] sm:$0xff]
    %682 = vmatprep.subr.mxu0 0.0
    %683 = vmatpush1.msra.mxu0 %v666
    %684 = vmatprep.subr.mxu0 0.0
    %685 = vmatpush1.msra.mxu0 %v667
    %686 = vmatprep.subr.mxu0 0.0
    %687 = vmatpush1.msra.mxu0 %v668
    %688 = vmatprep.subr.mxu0 0.0
    %689 = vmatpush1.msra.mxu0 %v669
    %690 = vmatprep.subr.mxu0 0.0
    %691 = vmatpush1.msra.mxu0 %v670
    %692 = vmatprep.subr.mxu0 0.0
    %693 = vmatpush1.msra.mxu0 %v671
    %694 = vmatprep.subr.mxu0 0.0
    %695 = vmatpush1.msra.mxu0 %v672
    %696 = vmatprep.subr.mxu0 0.0
    %697 = vmatpush1.msra.mxu0 %v673
    %698 = vmatprep.subr.mxu0 0.0
    %699 = vmatpush1.msra.mxu0 %v674
    %700 = vmatprep.subr.mxu0 0.0
    %701 = vmatpush1.msra.mxu0 %v675
    %702 = vmatprep.subr.mxu0 0.0
    %703 = vmatpush1.msra.mxu0 %v676
    %704 = vmatprep.subr.mxu0 0.0
    %705 = vmatpush1.msra.mxu0 %v677
    %706 = vmatprep.subr.mxu0 0.0
    %707 = vmatpush1.msra.mxu0 %v678
    %708 = vmatprep.subr.mxu0 0.0
    %709 = vmatpush1.msra.mxu0 %v679
    %710 = vmatprep.subr.mxu0 0.0
    %711 = vmatpush1.msra.mxu0 %v680
    %712 = vmatprep.subr.mxu0 0.0
    %713 = vmatpush1.msra.mxu0 %v681
    %714 = vmatprep.subr.mxu0 0.0
    %715 = vmatpush1.msra.mxu0 0.0
    %716 = vmatprep.subr.mxu0 0.0
    %717 = vmatpush1.msra.mxu0 0.0
    %718 = vmatprep.subr.mxu0 0.0
    %719 = vmatpush1.msra.mxu0 0.0
    %720 = vmatprep.subr.mxu0 0.0
    %721 = vmatpush1.msra.mxu0 0.0
    %722 = vmatprep.subr.mxu0 0.0
    %723 = vmatpush1.msra.mxu0 0.0
    %724 = vmatprep.subr.mxu0 0.0
    %725 = vmatpush1.msra.mxu0 0.0
    %726 = vmatprep.subr.mxu0 0.0
    %727 = vmatpush1.msra.mxu0 0.0
    %728 = vmatprep.subr.mxu0 0.0
    %729 = vmatpush1.msra.mxu0 0.0
    %730 = vmatprep.subr.mxu0 0.0
    %731 = vmatpush1.msra.mxu0 0.0
    %732 = vmatprep.subr.mxu0 0.0
    %733 = vmatpush1.msra.mxu0 0.0
    %734 = vmatprep.subr.mxu0 0.0
    %735 = vmatpush1.msra.mxu0 0.0
    %736 = vmatprep.subr.mxu0 0.0
    %737 = vmatpush1.msra.mxu0 0.0
    %738 = vmatprep.subr.mxu0 0.0
    %739 = vmatpush1.msra.mxu0 0.0
    %740 = vmatprep.subr.mxu0 0.0
    %741 = vmatpush1.msra.mxu0 0.0
    %742 = vmatprep.subr.mxu0 0.0
    %743 = vmatpush1.msra.mxu0 0.0
    %744 = vmatprep.subr.mxu0 0.0
    %745 = vmatpush1.msra.mxu0 0.0
    %746 = vmatprep.mubr.f32.mxu0 0.0
    %747 = vmatmul.mubr.f32.gmra.mrb[0].mxu0 %v663
    %v748 = vpop.f32.mrb[0].mxu0
    %v749 = vadd.f32 0.0, %v748
    %v750 = vpop.f32.mrb[0].mxu0
    %751 = vmatprep.mubr.f32.mxu0 0.0
    %752 = vmatmul.mubr.f32.gmra.mrb[0].mxu0 %v664
    %v753 = vpop.f32.mrb[0].mxu0
    %v754 = vadd.f32 0.0, %v753
    %v755 = vpop.f32.mrb[0].mxu0
    %756 = vdwg.mxu0
    %757 = vmatprep.subr.mxu0 0.0
    %758 = vmatpush1.msra.mxu0 %v443
    %759 = vmatprep.subr.mxu0 0.0
    %760 = vmatpush1.msra.mxu0 %v444
    %761 = vmatprep.subr.mxu0 0.0
    %762 = vmatpush1.msra.mxu0 %v445
    %763 = vmatprep.subr.mxu0 0.0
    %764 = vmatpush1.msra.mxu0 %v446
    %765 = vmatprep.subr.mxu0 0.0
    %766 = vmatpush1.msra.mxu0 %v447
    %767 = vmatprep.subr.mxu0 0.0
    %768 = vmatpush1.msra.mxu0 %v448
    %769 = vmatprep.subr.mxu0 0.0
    %770 = vmatpush1.msra.mxu0 %v449
    %771 = vmatprep.subr.mxu0 0.0
    %772 = vmatpush1.msra.mxu0 %v450
    %773 = vmatprep.subr.mxu0 0.0
    %774 = vmatpush1.msra.mxu0 %v451
    %775 = vmatprep.subr.mxu0 0.0
    %776 = vmatpush1.msra.mxu0 %v452
    %777 = vmatprep.subr.mxu0 0.0
    %778 = vmatpush1.msra.mxu0 %v453
    %779 = vmatprep.subr.mxu0 0.0
    %780 = vmatpush1.msra.mxu0 %v454
    %781 = vmatprep.subr.mxu0 0.0
    %782 = vmatpush1.msra.mxu0 %v455
    %783 = vmatprep.subr.mxu0 0.0
    %784 = vmatpush1.msra.mxu0 %v456
    %785 = vmatprep.subr.mxu0 0.0
    %786 = vmatpush1.msra.mxu0 %v457
    %787 = vmatprep.subr.mxu0 0.0
    %788 = vmatpush1.msra.mxu0 %v458
    %789 = vmatprep.subr.mxu0 0.0
    %790 = vmatpush1.msra.mxu0 0.0
    %791 = vmatprep.subr.mxu0 0.0
    %792 = vmatpush1.msra.mxu0 0.0
    %793 = vmatprep.subr.mxu0 0.0
    %794 = vmatpush1.msra.mxu0 0.0
    %795 = vmatprep.subr.mxu0 0.0
    %796 = vmatpush1.msra.mxu0 0.0
    %797 = vmatprep.subr.mxu0 0.0
    %798 = vmatpush1.msra.mxu0 0.0
    %799 = vmatprep.subr.mxu0 0.0
    %800 = vmatpush1.msra.mxu0 0.0
    %801 = vmatprep.subr.mxu0 0.0
    %802 = vmatpush1.msra.mxu0 0.0
    %803 = vmatprep.subr.mxu0 0.0
    %804 = vmatpush1.msra.mxu0 0.0
    %805 = vmatprep.subr.mxu0 0.0
    %806 = vmatpush1.msra.mxu0 0.0
    %807 = vmatprep.subr.mxu0 0.0
    %808 = vmatpush1.msra.mxu0 0.0
    %809 = vmatprep.subr.mxu0 0.0
    %810 = vmatpush1.msra.mxu0 0.0
    %811 = vmatprep.subr.mxu0 0.0
    %812 = vmatpush1.msra.mxu0 0.0
    %813 = vmatprep.subr.mxu0 0.0
    %814 = vmatpush1.msra.mxu0 0.0
    %815 = vmatprep.subr.mxu0 0.0
    %816 = vmatpush1.msra.mxu0 0.0
    %817 = vmatprep.subr.mxu0 0.0
    %818 = vmatpush1.msra.mxu0 0.0
    %819 = vmatprep.subr.mxu0 0.0
    %820 = vmatpush1.msra.mxu0 0.0
    %821 = vmatprep.mubr.f32.mxu0 0.0
    %822 = vmatmul.mubr.f32.gmra.mrb[0].mxu0 %v441
    %v823 = vpop.f32.mrb[0].mxu0
    %v824 = vadd.f32 %v749, %v823
    %v825 = vpop.f32.mrb[0].mxu0
    %826 = vmatprep.mubr.f32.mxu0 0.0
    %827 = vmatmul.mubr.f32.gmra.mrb[0].mxu0 %v442
    %v828 = vpop.f32.mrb[0].mxu0
    %v829 = vadd.f32 %v754, %v828
    %v830 = vpop.f32.mrb[0].mxu0
    %831 = vdwg.mxu0
    %v832 = vld [vmem:[#allocation2 + $0x10] sm:$0xff]
    %v833 = vld [vmem:[#allocation2 + $0x40] sm:$0xff]
    %s834 = scalar_lea.vmem [#allocation5], 256
    %v835 = vld [vmem:[%s834] sm:$0xff]
    %v836 = vld [vmem:[%s834 + $0x8] sm:$0xff]
    %v837 = vld [vmem:[%s834 + $0x10] sm:$0xff]
    %v838 = vld [vmem:[%s834 + $0x18] sm:$0xff]
    %v839 = vld [vmem:[%s834 + $0x20] sm:$0xff]
    %v840 = vld [vmem:[%s834 + $0x28] sm:$0xff]
    %v841 = vld [vmem:[%s834 + $0x30] sm:$0xff]
    %v842 = vld [vmem:[%s834 + $0x38] sm:$0xff]
    %v843 = vld [vmem:[%s834 + $0x40] sm:$0xff]
    %v844 = vld [vmem:[%s834 + $0x48] sm:$0xff]
    %v845 = vld [vmem:[%s834 + $0x50] sm:$0xff]
    %v846 = vld [vmem:[%s834 + $0x58] sm:$0xff]
    %v847 = vld [vmem:[%s834 + $0x60] sm:$0xff]
    %v848 = vld [vmem:[%s834 + $0x68] sm:$0xff]
    %v849 = vld [vmem:[%s834 + $0x70] sm:$0xff]
    %v850 = vld [vmem:[%s834 + $0x78] sm:$0xff]
    %s851 = scalar_lea.vmem %s2, 2
    %v852 = vld [vmem:[%s851] sm:$0x1]
    %v854 = vlaneseq
    %v855 = vshrl.u32 %v854, 7
    %v856 = vsub.s32 0, %v855
    %v857 = vrot.slane %v852, %v856
    %859 = vmatprep.subr.mxu0 0.0
    %860 = vmatpush1.msra.mxu0 %v835
    %861 = vmatprep.subr.mxu0 0.0
    %862 = vmatpush1.msra.mxu0 %v836
    %863 = vmatprep.subr.mxu0 0.0
    %864 = vmatpush1.msra.mxu0 %v837
    %865 = vmatprep.subr.mxu0 0.0
    %866 = vmatpush1.msra.mxu0 %v838
    %867 = vmatprep.subr.mxu0 0.0
    %868 = vmatpush1.msra.mxu0 %v839
    %869 = vmatprep.subr.mxu0 0.0
    %870 = vmatpush1.msra.mxu0 %v840
    %871 = vmatprep.subr.mxu0 0.0
    %872 = vmatpush1.msra.mxu0 %v841
    %873 = vmatprep.subr.mxu0 0.0
    %874 = vmatpush1.msra.mxu0 %v842
    %875 = vmatprep.subr.mxu0 0.0
    %876 = vmatpush1.msra.mxu0 %v843
    %877 = vmatprep.subr.mxu0 0.0
    %878 = vmatpush1.msra.mxu0 %v844
    %879 = vmatprep.subr.mxu0 0.0
    %880 = vmatpush1.msra.mxu0 %v845
    %881 = vmatprep.subr.mxu0 0.0
    %882 = vmatpush1.msra.mxu0 %v846
    %883 = vmatprep.subr.mxu0 0.0
    %884 = vmatpush1.msra.mxu0 %v847
    %885 = vmatprep.subr.mxu0 0.0
    %886 = vmatpush1.msra.mxu0 %v848
    %887 = vmatprep.subr.mxu0 0.0
    %888 = vmatpush1.msra.mxu0 %v849
    %889 = vmatprep.subr.mxu0 0.0
    %890 = vmatpush1.msra.mxu0 %v850
    %891 = vmatprep.subr.mxu0 0.0
    %892 = vmatpush1.msra.mxu0 0.0
    %893 = vmatprep.subr.mxu0 0.0
    %894 = vmatpush1.msra.mxu0 0.0
    %895 = vmatprep.subr.mxu0 0.0
    %896 = vmatpush1.msra.mxu0 0.0
    %897 = vmatprep.subr.mxu0 0.0
    %898 = vmatpush1.msra.mxu0 0.0
    %899 = vmatprep.subr.mxu0 0.0
    %900 = vmatpush1.msra.mxu0 0.0
    %901 = vmatprep.subr.mxu0 0.0
    %902 = vmatpush1.msra.mxu0 0.0
    %903 = vmatprep.subr.mxu0 0.0
    %904 = vmatpush1.msra.mxu0 0.0
    %905 = vmatprep.subr.mxu0 0.0
    %906 = vmatpush1.msra.mxu0 0.0
    %907 = vmatprep.subr.mxu0 0.0
    %908 = vmatpush1.msra.mxu0 0.0
    %909 = vmatprep.subr.mxu0 0.0
    %910 = vmatpush1.msra.mxu0 0.0
    %911 = vmatprep.subr.mxu0 0.0
    %912 = vmatpush1.msra.mxu0 0.0
    %913 = vmatprep.subr.mxu0 0.0
    %914 = vmatpush1.msra.mxu0 0.0
    %915 = vmatprep.subr.mxu0 0.0
    %916 = vmatpush1.msra.mxu0 0.0
    %917 = vmatprep.subr.mxu0 0.0
    %918 = vmatpush1.msra.mxu0 0.0
    %919 = vmatprep.subr.mxu0 0.0
    %920 = vmatpush1.msra.mxu0 0.0
    %921 = vmatprep.subr.mxu0 0.0
    %922 = vmatpush1.msra.mxu0 0.0
    %923 = vmatprep.mubr.f32.mxu0 0.0
    %924 = vmatmul.mubr.f32.gmra.mrb[0].mxu0 %v832
    %v925 = vpop.f32.mrb[0].mxu0
    %v926 = vadd.f32 %v857, %v925
    %v927 = vpop.f32.mrb[0].mxu0
    %928 = vmatprep.mubr.f32.mxu0 0.0
    %929 = vmatmul.mubr.f32.gmra.mrb[0].mxu0 %v833
    %v930 = vpop.f32.mrb[0].mxu0
    %v931 = vadd.f32 %v857, %v930
    %v932 = vpop.f32.mrb[0].mxu0
    %933 = vdwg.mxu0
    %v934 = vmax.f32 %v926, 0.0
    %v935 = vmax.f32 %v931, 0.0
    %s936 = scalar_lea.vmem [#allocation7], 256
    %v937 = vld [vmem:[%s936] sm:$0xff]
    %v938 = vld [vmem:[%s936 + $0x8] sm:$0xff]
    %v939 = vld [vmem:[%s936 + $0x10] sm:$0xff]
    %v940 = vld [vmem:[%s936 + $0x18] sm:$0xff]
    %v941 = vld [vmem:[%s936 + $0x20] sm:$0xff]
    %v942 = vld [vmem:[%s936 + $0x28] sm:$0xff]
    %v943 = vld [vmem:[%s936 + $0x30] sm:$0xff]
    %v944 = vld [vmem:[%s936 + $0x38] sm:$0xff]
    %v945 = vld [vmem:[%s936 + $0x40] sm:$0xff]
    %v946 = vld [vmem:[%s936 + $0x48] sm:$0xff]
    %v947 = vld [vmem:[%s936 + $0x50] sm:$0xff]
    %v948 = vld [vmem:[%s936 + $0x58] sm:$0xff]
    %v949 = vld [vmem:[%s936 + $0x60] sm:$0xff]
    %v950 = vld [vmem:[%s936 + $0x68] sm:$0xff]
    %v951 = vld [vmem:[%s936 + $0x70] sm:$0xff]
    %v952 = vld [vmem:[%s936 + $0x78] sm:$0xff]
    %s953 = scalar_lea.vmem %s4, 2
    %v954 = vld [vmem:[%s953] sm:$0x1]
    %v956 = vlaneseq
    %v957 = vshrl.u32 %v956, 7
    %v958 = vsub.s32 0, %v957
    %v959 = vrot.slane %v954, %v958
    %961 = vmatprep.subr.mxu0 0.0
    %962 = vmatpush1.msra.mxu0 %v937
    %963 = vmatprep.subr.mxu0 0.0
    %964 = vmatpush1.msra.mxu0 %v938
    %965 = vmatprep.subr.mxu0 0.0
    %966 = vmatpush1.msra.mxu0 %v939
    %967 = vmatprep.subr.mxu0 0.0
    %968 = vmatpush1.msra.mxu0 %v940
    %969 = vmatprep.subr.mxu0 0.0
    %970 = vmatpush1.msra.mxu0 %v941
    %971 = vmatprep.subr.mxu0 0.0
    %972 = vmatpush1.msra.mxu0 %v942
    %973 = vmatprep.subr.mxu0 0.0
    %974 = vmatpush1.msra.mxu0 %v943
    %975 = vmatprep.subr.mxu0 0.0
    %976 = vmatpush1.msra.mxu0 %v944
    %977 = vmatprep.subr.mxu0 0.0
    %978 = vmatpush1.msra.mxu0 %v945
    %979 = vmatprep.subr.mxu0 0.0
    %980 = vmatpush1.msra.mxu0 %v946
    %981 = vmatprep.subr.mxu0 0.0
    %982 = vmatpush1.msra.mxu0 %v947
    %983 = vmatprep.subr.mxu0 0.0
    %984 = vmatpush1.msra.mxu0 %v948
    %985 = vmatprep.subr.mxu0 0.0
    %986 = vmatpush1.msra.mxu0 %v949
    %987 = vmatprep.subr.mxu0 0.0
    %988 = vmatpush1.msra.mxu0 %v950
    %989 = vmatprep.subr.mxu0 0.0
    %990 = vmatpush1.msra.mxu0 %v951
    %991 = vmatprep.subr.mxu0 0.0
    %992 = vmatpush1.msra.mxu0 %v952
    %993 = vmatprep.subr.mxu0 0.0
    %994 = vmatpush1.msra.mxu0 0.0
    %995 = vmatprep.subr.mxu0 0.0
    %996 = vmatpush1.msra.mxu0 0.0
    %997 = vmatprep.subr.mxu0 0.0
    %998 = vmatpush1.msra.mxu0 0.0
    %999 = vmatprep.subr.mxu0 0.0
    %1000 = vmatpush1.msra.mxu0 0.0
    %1001 = vmatprep.subr.mxu0 0.0
    %1002 = vmatpush1.msra.mxu0 0.0
    %1003 = vmatprep.subr.mxu0 0.0
    %1004 = vmatpush1.msra.mxu0 0.0
    %1005 = vmatprep.subr.mxu0 0.0
    %1006 = vmatpush1.msra.mxu0 0.0
    %1007 = vmatprep.subr.mxu0 0.0
    %1008 = vmatpush1.msra.mxu0 0.0
    %1009 = vmatprep.subr.mxu0 0.0
    %1010 = vmatpush1.msra.mxu0 0.0
    %1011 = vmatprep.subr.mxu0 0.0
    %1012 = vmatpush1.msra.mxu0 0.0
    %1013 = vmatprep.subr.mxu0 0.0
    %1014 = vmatpush1.msra.mxu0 0.0
    %1015 = vmatprep.subr.mxu0 0.0
    %1016 = vmatpush1.msra.mxu0 0.0
    %1017 = vmatprep.subr.mxu0 0.0
    %1018 = vmatpush1.msra.mxu0 0.0
    %1019 = vmatprep.subr.mxu0 0.0
    %1020 = vmatpush1.msra.mxu0 0.0
    %1021 = vmatprep.subr.mxu0 0.0
    %1022 = vmatpush1.msra.mxu0 0.0
    %1023 = vmatprep.subr.mxu0 0.0
    %1024 = vmatpush1.msra.mxu0 0.0
    %1025 = vmatprep.mubr.f32.mxu0 0.0
    %1026 = vmatmul.mubr.f32.gmra.mrb[0].mxu0 %v934
    %v1027 = vpop.f32.mrb[0].mxu0
    %v1028 = vadd.f32 %v959, %v1027
    %v1029 = vpop.f32.mrb[0].mxu0
    %1030 = vmatprep.mubr.f32.mxu0 0.0
    %1031 = vmatmul.mubr.f32.gmra.mrb[0].mxu0 %v935
    %v1032 = vpop.f32.mrb[0].mxu0
    %v1033 = vadd.f32 %v959, %v1032
    %v1034 = vpop.f32.mrb[0].mxu0
    %1035 = vdwg.mxu0
    %v1036 = vmax.f32 %v1028, 0.0
    %v1037 = vmax.f32 %v1033, 0.0
    %s1038 = scalar_lea.vmem [#allocation8], 256
    %v1039 = vld [vmem:[%s1038] sm:$0xff]
    %v1040 = vld [vmem:[%s1038 + $0x8] sm:$0xff]
    %v1041 = vld [vmem:[%s1038 + $0x10] sm:$0xff]
    %v1042 = vld [vmem:[%s1038 + $0x18] sm:$0xff]
    %v1043 = vld [vmem:[%s1038 + $0x20] sm:$0xff]
    %v1044 = vld [vmem:[%s1038 + $0x28] sm:$0xff]
    %v1045 = vld [vmem:[%s1038 + $0x30] sm:$0xff]
    %v1046 = vld [vmem:[%s1038 + $0x38] sm:$0xff]
    %v1047 = vld [vmem:[%s1038 + $0x40] sm:$0xff]
    %v1048 = vld [vmem:[%s1038 + $0x48] sm:$0xff]
    %v1049 = vld [vmem:[%s1038 + $0x50] sm:$0xff]
    %v1050 = vld [vmem:[%s1038 + $0x58] sm:$0xff]
    %v1051 = vld [vmem:[%s1038 + $0x60] sm:$0xff]
    %v1052 = vld [vmem:[%s1038 + $0x68] sm:$0xff]
    %v1053 = vld [vmem:[%s1038 + $0x70] sm:$0xff]
    %v1054 = vld [vmem:[%s1038 + $0x78] sm:$0xff]
    %1055 = vmatprep.subr.mxu0 0.0
    %1056 = vmatpush1.msra.mxu0 %v1039
    %1057 = vmatprep.subr.mxu0 0.0
    %1058 = vmatpush1.msra.mxu0 %v1040
    %1059 = vmatprep.subr.mxu0 0.0
    %1060 = vmatpush1.msra.mxu0 %v1041
    %1061 = vmatprep.subr.mxu0 0.0
    %1062 = vmatpush1.msra.mxu0 %v1042
    %1063 = vmatprep.subr.mxu0 0.0
    %1064 = vmatpush1.msra.mxu0 %v1043
    %1065 = vmatprep.subr.mxu0 0.0
    %1066 = vmatpush1.msra.mxu0 %v1044
    %1067 = vmatprep.subr.mxu0 0.0
    %1068 = vmatpush1.msra.mxu0 %v1045
    %1069 = vmatprep.subr.mxu0 0.0
    %1070 = vmatpush1.msra.mxu0 %v1046
    %1071 = vmatprep.subr.mxu0 0.0
    %1072 = vmatpush1.msra.mxu0 %v1047
    %1073 = vmatprep.subr.mxu0 0.0
    %1074 = vmatpush1.msra.mxu0 %v1048
    %1075 = vmatprep.subr.mxu0 0.0
    %1076 = vmatpush1.msra.mxu0 %v1049
    %1077 = vmatprep.subr.mxu0 0.0
    %1078 = vmatpush1.msra.mxu0 %v1050
    %1079 = vmatprep.subr.mxu0 0.0
    %1080 = vmatpush1.msra.mxu0 %v1051
    %1081 = vmatprep.subr.mxu0 0.0
    %1082 = vmatpush1.msra.mxu0 %v1052
    %1083 = vmatprep.subr.mxu0 0.0
    %1084 = vmatpush1.msra.mxu0 %v1053
    %1085 = vmatprep.subr.mxu0 0.0
    %1086 = vmatpush1.msra.mxu0 %v1054
    %1087 = vmatprep.subr.mxu0 0.0
    %1088 = vmatpush1.msra.mxu0 0.0
    %1089 = vmatprep.subr.mxu0 0.0
    %1090 = vmatpush1.msra.mxu0 0.0
    %1091 = vmatprep.subr.mxu0 0.0
    %1092 = vmatpush1.msra.mxu0 0.0
    %1093 = vmatprep.subr.mxu0 0.0
    %1094 = vmatpush1.msra.mxu0 0.0
    %1095 = vmatprep.subr.mxu0 0.0
    %1096 = vmatpush1.msra.mxu0 0.0
    %1097 = vmatprep.subr.mxu0 0.0
    %1098 = vmatpush1.msra.mxu0 0.0
    %1099 = vmatprep.subr.mxu0 0.0
    %1100 = vmatpush1.msra.mxu0 0.0
    %1101 = vmatprep.subr.mxu0 0.0
    %1102 = vmatpush1.msra.mxu0 0.0
    %1103 = vmatprep.subr.mxu0 0.0
    %1104 = vmatpush1.msra.mxu0 0.0
    %1105 = vmatprep.subr.mxu0 0.0
    %1106 = vmatpush1.msra.mxu0 0.0
    %1107 = vmatprep.subr.mxu0 0.0
    %1108 = vmatpush1.msra.mxu0 0.0
    %1109 = vmatprep.subr.mxu0 0.0
    %1110 = vmatpush1.msra.mxu0 0.0
    %1111 = vmatprep.subr.mxu0 0.0
    %1112 = vmatpush1.msra.mxu0 0.0
    %1113 = vmatprep.subr.mxu0 0.0
    %1114 = vmatpush1.msra.mxu0 0.0
    %1115 = vmatprep.subr.mxu0 0.0
    %1116 = vmatpush1.msra.mxu0 0.0
    %1117 = vmatprep.subr.mxu0 0.0
    %1118 = vmatpush1.msra.mxu0 0.0
    %1119 = vmatprep.mubr.f32.mxu0 0.0
    %1120 = vmatmul.mubr.f32.gmra.mrb[0].mxu0 %v1036
    %v1121 = vpop.f32.mrb[0].mxu0
    %v1122 = vadd.f32 0.0, %v1121
    %v1123 = vpop.f32.mrb[0].mxu0
    %1124 = vmatprep.mubr.f32.mxu0 0.0
    %1125 = vmatmul.mubr.f32.gmra.mrb[0].mxu0 %v1037
    %v1126 = vpop.f32.mrb[0].mxu0
    %v1127 = vadd.f32 0.0, %v1126
    %v1128 = vpop.f32.mrb[0].mxu0
    %1129 = vdwg.mxu0
    %v1130 = vadd.f32 %v824, %v1122
    %v1131 = vadd.f32 %v829, %v1127
    %v1132 = vld [vmem:[#allocation2 + $0x18] sm:$0xff]
    %v1133 = vld [vmem:[#allocation2 + $0x48] sm:$0xff]
    %s1134 = scalar_lea.vmem [#allocation5], 384
    %v1135 = vld [vmem:[%s1134] sm:$0xff]
    %v1136 = vld [vmem:[%s1134 + $0x8] sm:$0xff]
    %v1137 = vld [vmem:[%s1134 + $0x10] sm:$0xff]
    %v1138 = vld [vmem:[%s1134 + $0x18] sm:$0xff]
    %v1139 = vld [vmem:[%s1134 + $0x20] sm:$0xff]
    %v1140 = vld [vmem:[%s1134 + $0x28] sm:$0xff]
    %v1141 = vld [vmem:[%s1134 + $0x30] sm:$0xff]
    %v1142 = vld [vmem:[%s1134 + $0x38] sm:$0xff]
    %v1143 = vld [vmem:[%s1134 + $0x40] sm:$0xff]
    %v1144 = vld [vmem:[%s1134 + $0x48] sm:$0xff]
    %v1145 = vld [vmem:[%s1134 + $0x50] sm:$0xff]
    %v1146 = vld [vmem:[%s1134 + $0x58] sm:$0xff]
    %v1147 = vld [vmem:[%s1134 + $0x60] sm:$0xff]
    %v1148 = vld [vmem:[%s1134 + $0x68] sm:$0xff]
    %v1149 = vld [vmem:[%s1134 + $0x70] sm:$0xff]
    %v1150 = vld [vmem:[%s1134 + $0x78] sm:$0xff]
    %s1151 = scalar_lea.vmem %s2, 3
    %v1152 = vld [vmem:[%s1151] sm:$0x1]
    %v1154 = vlaneseq
    %v1155 = vshrl.u32 %v1154, 7
    %v1156 = vsub.s32 0, %v1155
    %v1157 = vrot.slane %v1152, %v1156
    %1159 = vmatprep.subr.mxu0 0.0
    %1160 = vmatpush1.msra.mxu0 %v1135
    %1161 = vmatprep.subr.mxu0 0.0
    %1162 = vmatpush1.msra.mxu0 %v1136
    %1163 = vmatprep.subr.mxu0 0.0
    %1164 = vmatpush1.msra.mxu0 %v1137
    %1165 = vmatprep.subr.mxu0 0.0
    %1166 = vmatpush1.msra.mxu0 %v1138
    %1167 = vmatprep.subr.mxu0 0.0
    %1168 = vmatpush1.msra.mxu0 %v1139
    %1169 = vmatprep.subr.mxu0 0.0
    %1170 = vmatpush1.msra.mxu0 %v1140
    %1171 = vmatprep.subr.mxu0 0.0
    %1172 = vmatpush1.msra.mxu0 %v1141
    %1173 = vmatprep.subr.mxu0 0.0
    %1174 = vmatpush1.msra.mxu0 %v1142
    %1175 = vmatprep.subr.mxu0 0.0
    %1176 = vmatpush1.msra.mxu0 %v1143
    %1177 = vmatprep.subr.mxu0 0.0
    %1178 = vmatpush1.msra.mxu0 %v1144
    %1179 = vmatprep.subr.mxu0 0.0
    %1180 = vmatpush1.msra.mxu0 %v1145
    %1181 = vmatprep.subr.mxu0 0.0
    %1182 = vmatpush1.msra.mxu0 %v1146
    %1183 = vmatprep.subr.mxu0 0.0
    %1184 = vmatpush1.msra.mxu0 %v1147
    %1185 = vmatprep.subr.mxu0 0.0
    %1186 = vmatpush1.msra.mxu0 %v1148
    %1187 = vmatprep.subr.mxu0 0.0
    %1188 = vmatpush1.msra.mxu0 %v1149
    %1189 = vmatprep.subr.mxu0 0.0
    %1190 = vmatpush1.msra.mxu0 %v1150
    %1191 = vmatprep.subr.mxu0 0.0
    %1192 = vmatpush1.msra.mxu0 0.0
    %1193 = vmatprep.subr.mxu0 0.0
    %1194 = vmatpush1.msra.mxu0 0.0
    %1195 = vmatprep.subr.mxu0 0.0
    %1196 = vmatpush1.msra.mxu0 0.0
    %1197 = vmatprep.subr.mxu0 0.0
    %1198 = vmatpush1.msra.mxu0 0.0
    %1199 = vmatprep.subr.mxu0 0.0
    %1200 = vmatpush1.msra.mxu0 0.0
    %1201 = vmatprep.subr.mxu0 0.0
    %1202 = vmatpush1.msra.mxu0 0.0
    %1203 = vmatprep.subr.mxu0 0.0
    %1204 = vmatpush1.msra.mxu0 0.0
    %1205 = vmatprep.subr.mxu0 0.0
    %1206 = vmatpush1.msra.mxu0 0.0
    %1207 = vmatprep.subr.mxu0 0.0
    %1208 = vmatpush1.msra.mxu0 0.0
    %1209 = vmatprep.subr.mxu0 0.0
    %1210 = vmatpush1.msra.mxu0 0.0
    %1211 = vmatprep.subr.mxu0 0.0
    %1212 = vmatpush1.msra.mxu0 0.0
    %1213 = vmatprep.subr.mxu0 0.0
    %1214 = vmatpush1.msra.mxu0 0.0
    %1215 = vmatprep.subr.mxu0 0.0
    %1216 = vmatpush1.msra.mxu0 0.0
    %1217 = vmatprep.subr.mxu0 0.0
    %1218 = vmatpush1.msra.mxu0 0.0
    %1219 = vmatprep.subr.mxu0 0.0
    %1220 = vmatpush1.msra.mxu0 0.0
    %1221 = vmatprep.subr.mxu0 0.0
    %1222 = vmatpush1.msra.mxu0 0.0
    %1223 = vmatprep.mubr.f32.mxu0 0.0
    %1224 = vmatmul.mubr.f32.gmra.mrb[0].mxu0 %v1132
    %v1225 = vpop.f32.mrb[0].mxu0
    %v1226 = vadd.f32 %v1157, %v1225
    %v1227 = vpop.f32.mrb[0].mxu0
    %1228 = vmatprep.mubr.f32.mxu0 0.0
    %1229 = vmatmul.mubr.f32.gmra.mrb[0].mxu0 %v1133
    %v1230 = vpop.f32.mrb[0].mxu0
    %v1231 = vadd.f32 %v1157, %v1230
    %v1232 = vpop.f32.mrb[0].mxu0
    %1233 = vdwg.mxu0
    %v1234 = vmax.f32 %v1226, 0.0
    %v1235 = vmax.f32 %v1231, 0.0
    %s1236 = scalar_lea.vmem [#allocation7], 384
    %v1237 = vld [vmem:[%s1236] sm:$0xff]
    %v1238 = vld [vmem:[%s1236 + $0x8] sm:$0xff]
    %v1239 = vld [vmem:[%s1236 + $0x10] sm:$0xff]
    %v1240 = vld [vmem:[%s1236 + $0x18] sm:$0xff]
    %v1241 = vld [vmem:[%s1236 + $0x20] sm:$0xff]
    %v1242 = vld [vmem:[%s1236 + $0x28] sm:$0xff]
    %v1243 = vld [vmem:[%s1236 + $0x30] sm:$0xff]
    %v1244 = vld [vmem:[%s1236 + $0x38] sm:$0xff]
    %v1245 = vld [vmem:[%s1236 + $0x40] sm:$0xff]
    %v1246 = vld [vmem:[%s1236 + $0x48] sm:$0xff]
    %v1247 = vld [vmem:[%s1236 + $0x50] sm:$0xff]
    %v1248 = vld [vmem:[%s1236 + $0x58] sm:$0xff]
    %v1249 = vld [vmem:[%s1236 + $0x60] sm:$0xff]
    %v1250 = vld [vmem:[%s1236 + $0x68] sm:$0xff]
    %v1251 = vld [vmem:[%s1236 + $0x70] sm:$0xff]
    %v1252 = vld [vmem:[%s1236 + $0x78] sm:$0xff]
    %s1253 = scalar_lea.vmem %s4, 3
    %v1254 = vld [vmem:[%s1253] sm:$0x1]
    %v1256 = vlaneseq
    %v1257 = vshrl.u32 %v1256, 7
    %v1258 = vsub.s32 0, %v1257
    %v1259 = vrot.slane %v1254, %v1258
    %1261 = vmatprep.subr.mxu0 0.0
    %1262 = vmatpush1.msra.mxu0 %v1237
    %1263 = vmatprep.subr.mxu0 0.0
    %1264 = vmatpush1.msra.mxu0 %v1238
    %1265 = vmatprep.subr.mxu0 0.0
    %1266 = vmatpush1.msra.mxu0 %v1239
    %1267 = vmatprep.subr.mxu0 0.0
    %1268 = vmatpush1.msra.mxu0 %v1240
    %1269 = vmatprep.subr.mxu0 0.0
    %1270 = vmatpush1.msra.mxu0 %v1241
    %1271 = vmatprep.subr.mxu0 0.0
    %1272 = vmatpush1.msra.mxu0 %v1242
    %1273 = vmatprep.subr.mxu0 0.0
    %1274 = vmatpush1.msra.mxu0 %v1243
    %1275 = vmatprep.subr.mxu0 0.0
    %1276 = vmatpush1.msra.mxu0 %v1244
    %1277 = vmatprep.subr.mxu0 0.0
    %1278 = vmatpush1.msra.mxu0 %v1245
    %1279 = vmatprep.subr.mxu0 0.0
    %1280 = vmatpush1.msra.mxu0 %v1246
    %1281 = vmatprep.subr.mxu0 0.0
    %1282 = vmatpush1.msra.mxu0 %v1247
    %1283 = vmatprep.subr.mxu0 0.0
    %1284 = vmatpush1.msra.mxu0 %v1248
    %1285 = vmatprep.subr.mxu0 0.0
    %1286 = vmatpush1.msra.mxu0 %v1249
    %1287 = vmatprep.subr.mxu0 0.0
    %1288 = vmatpush1.msra.mxu0 %v1250
    %1289 = vmatprep.subr.mxu0 0.0
    %1290 = vmatpush1.msra.mxu0 %v1251
    %1291 = vmatprep.subr.mxu0 0.0
    %1292 = vmatpush1.msra.mxu0 %v1252
    %1293 = vmatprep.subr.mxu0 0.0
    %1294 = vmatpush1.msra.mxu0 0.0
    %1295 = vmatprep.subr.mxu0 0.0
    %1296 = vmatpush1.msra.mxu0 0.0
    %1297 = vmatprep.subr.mxu0 0.0
    %1298 = vmatpush1.msra.mxu0 0.0
    %1299 = vmatprep.subr.mxu0 0.0
    %1300 = vmatpush1.msra.mxu0 0.0
    %1301 = vmatprep.subr.mxu0 0.0
    %1302 = vmatpush1.msra.mxu0 0.0
    %1303 = vmatprep.subr.mxu0 0.0
    %1304 = vmatpush1.msra.mxu0 0.0
    %1305 = vmatprep.subr.mxu0 0.0
    %1306 = vmatpush1.msra.mxu0 0.0
    %1307 = vmatprep.subr.mxu0 0.0
    %1308 = vmatpush1.msra.mxu0 0.0
    %1309 = vmatprep.subr.mxu0 0.0
    %1310 = vmatpush1.msra.mxu0 0.0
    %1311 = vmatprep.subr.mxu0 0.0
    %1312 = vmatpush1.msra.mxu0 0.0
    %1313 = vmatprep.subr.mxu0 0.0
    %1314 = vmatpush1.msra.mxu0 0.0
    %1315 = vmatprep.subr.mxu0 0.0
    %1316 = vmatpush1.msra.mxu0 0.0
    %1317 = vmatprep.subr.mxu0 0.0
    %1318 = vmatpush1.msra.mxu0 0.0
    %1319 = vmatprep.subr.mxu0 0.0
    %1320 = vmatpush1.msra.mxu0 0.0
    %1321 = vmatprep.subr.mxu0 0.0
    %1322 = vmatpush1.msra.mxu0 0.0
    %1323 = vmatprep.subr.mxu0 0.0
    %1324 = vmatpush1.msra.mxu0 0.0
    %1325 = vmatprep.mubr.f32.mxu0 0.0
    %1326 = vmatmul.mubr.f32.gmra.mrb[0].mxu0 %v1234
    %v1327 = vpop.f32.mrb[0].mxu0
    %v1328 = vadd.f32 %v1259, %v1327
    %v1329 = vpop.f32.mrb[0].mxu0
    %1330 = vmatprep.mubr.f32.mxu0 0.0
    %1331 = vmatmul.mubr.f32.gmra.mrb[0].mxu0 %v1235
    %v1332 = vpop.f32.mrb[0].mxu0
    %v1333 = vadd.f32 %v1259, %v1332
    %v1334 = vpop.f32.mrb[0].mxu0
    %1335 = vdwg.mxu0
    %v1336 = vmax.f32 %v1328, 0.0
    %v1337 = vmax.f32 %v1333, 0.0
    %s1338 = scalar_lea.vmem [#allocation8], 384
    %v1339 = vld [vmem:[%s1338] sm:$0xff]
    %v1340 = vld [vmem:[%s1338 + $0x8] sm:$0xff]
    %v1341 = vld [vmem:[%s1338 + $0x10] sm:$0xff]
    %v1342 = vld [vmem:[%s1338 + $0x18] sm:$0xff]
    %v1343 = vld [vmem:[%s1338 + $0x20] sm:$0xff]
    %v1344 = vld [vmem:[%s1338 + $0x28] sm:$0xff]
    %v1345 = vld [vmem:[%s1338 + $0x30] sm:$0xff]
    %v1346 = vld [vmem:[%s1338 + $0x38] sm:$0xff]
    %v1347 = vld [vmem:[%s1338 + $0x40] sm:$0xff]
    %v1348 = vld [vmem:[%s1338 + $0x48] sm:$0xff]
    %v1349 = vld [vmem:[%s1338 + $0x50] sm:$0xff]
    %v1350 = vld [vmem:[%s1338 + $0x58] sm:$0xff]
    %v1351 = vld [vmem:[%s1338 + $0x60] sm:$0xff]
    %v1352 = vld [vmem:[%s1338 + $0x68] sm:$0xff]
    %v1353 = vld [vmem:[%s1338 + $0x70] sm:$0xff]
    %v1354 = vld [vmem:[%s1338 + $0x78] sm:$0xff]
    %1355 = vmatprep.subr.mxu0 0.0
    %1356 = vmatpush1.msra.mxu0 %v1339
    %1357 = vmatprep.subr.mxu0 0.0
    %1358 = vmatpush1.msra.mxu0 %v1340
    %1359 = vmatprep.subr.mxu0 0.0
    %1360 = vmatpush1.msra.mxu0 %v1341
    %1361 = vmatprep.subr.mxu0 0.0
    %1362 = vmatpush1.msra.mxu0 %v1342
    %1363 = vmatprep.subr.mxu0 0.0
    %1364 = vmatpush1.msra.mxu0 %v1343
    %1365 = vmatprep.subr.mxu0 0.0
    %1366 = vmatpush1.msra.mxu0 %v1344
    %1367 = vmatprep.subr.mxu0 0.0
    %1368 = vmatpush1.msra.mxu0 %v1345
    %1369 = vmatprep.subr.mxu0 0.0
    %1370 = vmatpush1.msra.mxu0 %v1346
    %1371 = vmatprep.subr.mxu0 0.0
    %1372 = vmatpush1.msra.mxu0 %v1347
    %1373 = vmatprep.subr.mxu0 0.0
    %1374 = vmatpush1.msra.mxu0 %v1348
    %1375 = vmatprep.subr.mxu0 0.0
    %1376 = vmatpush1.msra.mxu0 %v1349
    %1377 = vmatprep.subr.mxu0 0.0
    %1378 = vmatpush1.msra.mxu0 %v1350
    %1379 = vmatprep.subr.mxu0 0.0
    %1380 = vmatpush1.msra.mxu0 %v1351
    %1381 = vmatprep.subr.mxu0 0.0
    %1382 = vmatpush1.msra.mxu0 %v1352
    %1383 = vmatprep.subr.mxu0 0.0
    %1384 = vmatpush1.msra.mxu0 %v1353
    %1385 = vmatprep.subr.mxu0 0.0
    %1386 = vmatpush1.msra.mxu0 %v1354
    %1387 = vmatprep.subr.mxu0 0.0
    %1388 = vmatpush1.msra.mxu0 0.0
    %1389 = vmatprep.subr.mxu0 0.0
    %1390 = vmatpush1.msra.mxu0 0.0
    %1391 = vmatprep.subr.mxu0 0.0
    %1392 = vmatpush1.msra.mxu0 0.0
    %1393 = vmatprep.subr.mxu0 0.0
    %1394 = vmatpush1.msra.mxu0 0.0
    %1395 = vmatprep.subr.mxu0 0.0
    %1396 = vmatpush1.msra.mxu0 0.0
    %1397 = vmatprep.subr.mxu0 0.0
    %1398 = vmatpush1.msra.mxu0 0.0
    %1399 = vmatprep.subr.mxu0 0.0
    %1400 = vmatpush1.msra.mxu0 0.0
    %1401 = vmatprep.subr.mxu0 0.0
    %1402 = vmatpush1.msra.mxu0 0.0
    %1403 = vmatprep.subr.mxu0 0.0
    %1404 = vmatpush1.msra.mxu0 0.0
    %1405 = vmatprep.subr.mxu0 0.0
    %1406 = vmatpush1.msra.mxu0 0.0
    %1407 = vmatprep.subr.mxu0 0.0
    %1408 = vmatpush1.msra.mxu0 0.0
    %1409 = vmatprep.subr.mxu0 0.0
    %1410 = vmatpush1.msra.mxu0 0.0
    %1411 = vmatprep.subr.mxu0 0.0
    %1412 = vmatpush1.msra.mxu0 0.0
    %1413 = vmatprep.subr.mxu0 0.0
    %1414 = vmatpush1.msra.mxu0 0.0
    %1415 = vmatprep.subr.mxu0 0.0
    %1416 = vmatpush1.msra.mxu0 0.0
    %1417 = vmatprep.subr.mxu0 0.0
    %1418 = vmatpush1.msra.mxu0 0.0
    %1419 = vmatprep.mubr.f32.mxu0 0.0
    %1420 = vmatmul.mubr.f32.gmra.mrb[0].mxu0 %v1336
    %v1421 = vpop.f32.mrb[0].mxu0
    %v1422 = vadd.f32 0.0, %v1421
    %v1423 = vpop.f32.mrb[0].mxu0
    %1424 = vmatprep.mubr.f32.mxu0 0.0
    %1425 = vmatmul.mubr.f32.gmra.mrb[0].mxu0 %v1337
    %v1426 = vpop.f32.mrb[0].mxu0
    %v1427 = vadd.f32 0.0, %v1426
    %v1428 = vpop.f32.mrb[0].mxu0
    %1429 = vdwg.mxu0
    %v1430 = vadd.f32 %v1130, %v1422
    %v1431 = vadd.f32 %v1131, %v1427
    %v1432 = vld [vmem:[#allocation2 + $0x20] sm:$0xff]
    %v1433 = vld [vmem:[#allocation2 + $0x50] sm:$0xff]
    %s1434 = scalar_lea.vmem [#allocation5], 512
    %v1435 = vld [vmem:[%s1434] sm:$0xff]
    %v1436 = vld [vmem:[%s1434 + $0x8] sm:$0xff]
    %v1437 = vld [vmem:[%s1434 + $0x10] sm:$0xff]
    %v1438 = vld [vmem:[%s1434 + $0x18] sm:$0xff]
    %v1439 = vld [vmem:[%s1434 + $0x20] sm:$0xff]
    %v1440 = vld [vmem:[%s1434 + $0x28] sm:$0xff]
    %v1441 = vld [vmem:[%s1434 + $0x30] sm:$0xff]
    %v1442 = vld [vmem:[%s1434 + $0x38] sm:$0xff]
    %v1443 = vld [vmem:[%s1434 + $0x40] sm:$0xff]
    %v1444 = vld [vmem:[%s1434 + $0x48] sm:$0xff]
    %v1445 = vld [vmem:[%s1434 + $0x50] sm:$0xff]
    %v1446 = vld [vmem:[%s1434 + $0x58] sm:$0xff]
    %v1447 = vld [vmem:[%s1434 + $0x60] sm:$0xff]
    %v1448 = vld [vmem:[%s1434 + $0x68] sm:$0xff]
    %v1449 = vld [vmem:[%s1434 + $0x70] sm:$0xff]
    %v1450 = vld [vmem:[%s1434 + $0x78] sm:$0xff]
    %s1451 = scalar_lea.vmem %s2, 4
    %v1452 = vld [vmem:[%s1451] sm:$0x1]
    %v1454 = vlaneseq
    %v1455 = vshrl.u32 %v1454, 7
    %v1456 = vsub.s32 0, %v1455
    %v1457 = vrot.slane %v1452, %v1456
    %1459 = vmatprep.subr.mxu0 0.0
    %1460 = vmatpush1.msra.mxu0 %v1435
    %1461 = vmatprep.subr.mxu0 0.0
    %1462 = vmatpush1.msra.mxu0 %v1436
    %1463 = vmatprep.subr.mxu0 0.0
    %1464 = vmatpush1.msra.mxu0 %v1437
    %1465 = vmatprep.subr.mxu0 0.0
    %1466 = vmatpush1.msra.mxu0 %v1438
    %1467 = vmatprep.subr.mxu0 0.0
    %1468 = vmatpush1.msra.mxu0 %v1439
    %1469 = vmatprep.subr.mxu0 0.0
    %1470 = vmatpush1.msra.mxu0 %v1440
    %1471 = vmatprep.subr.mxu0 0.0
    %1472 = vmatpush1.msra.mxu0 %v1441
    %1473 = vmatprep.subr.mxu0 0.0
    %1474 = vmatpush1.msra.mxu0 %v1442
    %1475 = vmatprep.subr.mxu0 0.0
    %1476 = vmatpush1.msra.mxu0 %v1443
    %1477 = vmatprep.subr.mxu0 0.0
    %1478 = vmatpush1.msra.mxu0 %v1444
    %1479 = vmatprep.subr.mxu0 0.0
    %1480 = vmatpush1.msra.mxu0 %v1445
    %1481 = vmatprep.subr.mxu0 0.0
    %1482 = vmatpush1.msra.mxu0 %v1446
    %1483 = vmatprep.subr.mxu0 0.0
    %1484 = vmatpush1.msra.mxu0 %v1447
    %1485 = vmatprep.subr.mxu0 0.0
    %1486 = vmatpush1.msra.mxu0 %v1448
    %1487 = vmatprep.subr.mxu0 0.0
    %1488 = vmatpush1.msra.mxu0 %v1449
    %1489 = vmatprep.subr.mxu0 0.0
    %1490 = vmatpush1.msra.mxu0 %v1450
    %1491 = vmatprep.subr.mxu0 0.0
    %1492 = vmatpush1.msra.mxu0 0.0
    %1493 = vmatprep.subr.mxu0 0.0
    %1494 = vmatpush1.msra.mxu0 0.0
    %1495 = vmatprep.subr.mxu0 0.0
    %1496 = vmatpush1.msra.mxu0 0.0
    %1497 = vmatprep.subr.mxu0 0.0
    %1498 = vmatpush1.msra.mxu0 0.0
    %1499 = vmatprep.subr.mxu0 0.0
    %1500 = vmatpush1.msra.mxu0 0.0
    %1501 = vmatprep.subr.mxu0 0.0
    %1502 = vmatpush1.msra.mxu0 0.0
    %1503 = vmatprep.subr.mxu0 0.0
    %1504 = vmatpush1.msra.mxu0 0.0
    %1505 = vmatprep.subr.mxu0 0.0
    %1506 = vmatpush1.msra.mxu0 0.0
    %1507 = vmatprep.subr.mxu0 0.0
    %1508 = vmatpush1.msra.mxu0 0.0
    %1509 = vmatprep.subr.mxu0 0.0
    %1510 = vmatpush1.msra.mxu0 0.0
    %1511 = vmatprep.subr.mxu0 0.0
    %1512 = vmatpush1.msra.mxu0 0.0
    %1513 = vmatprep.subr.mxu0 0.0
    %1514 = vmatpush1.msra.mxu0 0.0
    %1515 = vmatprep.subr.mxu0 0.0
    %1516 = vmatpush1.msra.mxu0 0.0
    %1517 = vmatprep.subr.mxu0 0.0
    %1518 = vmatpush1.msra.mxu0 0.0
    %1519 = vmatprep.subr.mxu0 0.0
    %1520 = vmatpush1.msra.mxu0 0.0
    %1521 = vmatprep.subr.mxu0 0.0
    %1522 = vmatpush1.msra.mxu0 0.0
    %1523 = vmatprep.mubr.f32.mxu0 0.0
    %1524 = vmatmul.mubr.f32.gmra.mrb[0].mxu0 %v1432
    %v1525 = vpop.f32.mrb[0].mxu0
    %v1526 = vadd.f32 %v1457, %v1525
    %v1527 = vpop.f32.mrb[0].mxu0
    %1528 = vmatprep.mubr.f32.mxu0 0.0
    %1529 = vmatmul.mubr.f32.gmra.mrb[0].mxu0 %v1433
    %v1530 = vpop.f32.mrb[0].mxu0
    %v1531 = vadd.f32 %v1457, %v1530
    %v1532 = vpop.f32.mrb[0].mxu0
    %1533 = vdwg.mxu0
    %v1534 = vmax.f32 %v1526, 0.0
    %v1535 = vmax.f32 %v1531, 0.0
    %s1536 = scalar_lea.vmem [#allocation7], 512
    %v1537 = vld [vmem:[%s1536] sm:$0xff]
    %v1538 = vld [vmem:[%s1536 + $0x8] sm:$0xff]
    %v1539 = vld [vmem:[%s1536 + $0x10] sm:$0xff]
    %v1540 = vld [vmem:[%s1536 + $0x18] sm:$0xff]
    %v1541 = vld [vmem:[%s1536 + $0x20] sm:$0xff]
    %v1542 = vld [vmem:[%s1536 + $0x28] sm:$0xff]
    %v1543 = vld [vmem:[%s1536 + $0x30] sm:$0xff]
    %v1544 = vld [vmem:[%s1536 + $0x38] sm:$0xff]
    %v1545 = vld [vmem:[%s1536 + $0x40] sm:$0xff]
    %v1546 = vld [vmem:[%s1536 + $0x48] sm:$0xff]
    %v1547 = vld [vmem:[%s1536 + $0x50] sm:$0xff]
    %v1548 = vld [vmem:[%s1536 + $0x58] sm:$0xff]
    %v1549 = vld [vmem:[%s1536 + $0x60] sm:$0xff]
    %v1550 = vld [vmem:[%s1536 + $0x68] sm:$0xff]
    %v1551 = vld [vmem:[%s1536 + $0x70] sm:$0xff]
    %v1552 = vld [vmem:[%s1536 + $0x78] sm:$0xff]
    %s1553 = scalar_lea.vmem %s4, 4
    %v1554 = vld [vmem:[%s1553] sm:$0x1]
    %v1556 = vlaneseq
    %v1557 = vshrl.u32 %v1556, 7
    %v1558 = vsub.s32 0, %v1557
    %v1559 = vrot.slane %v1554, %v1558
    %1561 = vmatprep.subr.mxu0 0.0
    %1562 = vmatpush1.msra.mxu0 %v1537
    %1563 = vmatprep.subr.mxu0 0.0
    %1564 = vmatpush1.msra.mxu0 %v1538
    %1565 = vmatprep.subr.mxu0 0.0
    %1566 = vmatpush1.msra.mxu0 %v1539
    %1567 = vmatprep.subr.mxu0 0.0
    %1568 = vmatpush1.msra.mxu0 %v1540
    %1569 = vmatprep.subr.mxu0 0.0
    %1570 = vmatpush1.msra.mxu0 %v1541
    %1571 = vmatprep.subr.mxu0 0.0
    %1572 = vmatpush1.msra.mxu0 %v1542
    %1573 = vmatprep.subr.mxu0 0.0
    %1574 = vmatpush1.msra.mxu0 %v1543
    %1575 = vmatprep.subr.mxu0 0.0
    %1576 = vmatpush1.msra.mxu0 %v1544
    %1577 = vmatprep.subr.mxu0 0.0
    %1578 = vmatpush1.msra.mxu0 %v1545
    %1579 = vmatprep.subr.mxu0 0.0
    %1580 = vmatpush1.msra.mxu0 %v1546
    %1581 = vmatprep.subr.mxu0 0.0
    %1582 = vmatpush1.msra.mxu0 %v1547
    %1583 = vmatprep.subr.mxu0 0.0
    %1584 = vmatpush1.msra.mxu0 %v1548
    %1585 = vmatprep.subr.mxu0 0.0
    %1586 = vmatpush1.msra.mxu0 %v1549
    %1587 = vmatprep.subr.mxu0 0.0
    %1588 = vmatpush1.msra.mxu0 %v1550
    %1589 = vmatprep.subr.mxu0 0.0
    %1590 = vmatpush1.msra.mxu0 %v1551
    %1591 = vmatprep.subr.mxu0 0.0
    %1592 = vmatpush1.msra.mxu0 %v1552
    %1593 = vmatprep.subr.mxu0 0.0
    %1594 = vmatpush1.msra.mxu0 0.0
    %1595 = vmatprep.subr.mxu0 0.0
    %1596 = vmatpush1.msra.mxu0 0.0
    %1597 = vmatprep.subr.mxu0 0.0
    %1598 = vmatpush1.msra.mxu0 0.0
    %1599 = vmatprep.subr.mxu0 0.0
    %1600 = vmatpush1.msra.mxu0 0.0
    %1601 = vmatprep.subr.mxu0 0.0
    %1602 = vmatpush1.msra.mxu0 0.0
    %1603 = vmatprep.subr.mxu0 0.0
    %1604 = vmatpush1.msra.mxu0 0.0
    %1605 = vmatprep.subr.mxu0 0.0
    %1606 = vmatpush1.msra.mxu0 0.0
    %1607 = vmatprep.subr.mxu0 0.0
    %1608 = vmatpush1.msra.mxu0 0.0
    %1609 = vmatprep.subr.mxu0 0.0
    %1610 = vmatpush1.msra.mxu0 0.0
    %1611 = vmatprep.subr.mxu0 0.0
    %1612 = vmatpush1.msra.mxu0 0.0
    %1613 = vmatprep.subr.mxu0 0.0
    %1614 = vmatpush1.msra.mxu0 0.0
    %1615 = vmatprep.subr.mxu0 0.0
    %1616 = vmatpush1.msra.mxu0 0.0
    %1617 = vmatprep.subr.mxu0 0.0
    %1618 = vmatpush1.msra.mxu0 0.0
    %1619 = vmatprep.subr.mxu0 0.0
    %1620 = vmatpush1.msra.mxu0 0.0
    %1621 = vmatprep.subr.mxu0 0.0
    %1622 = vmatpush1.msra.mxu0 0.0
    %1623 = vmatprep.subr.mxu0 0.0
    %1624 = vmatpush1.msra.mxu0 0.0
    %1625 = vmatprep.mubr.f32.mxu0 0.0
    %1626 = vmatmul.mubr.f32.gmra.mrb[0].mxu0 %v1534
    %v1627 = vpop.f32.mrb[0].mxu0
    %v1628 = vadd.f32 %v1559, %v1627
    %v1629 = vpop.f32.mrb[0].mxu0
    %1630 = vmatprep.mubr.f32.mxu0 0.0
    %1631 = vmatmul.mubr.f32.gmra.mrb[0].mxu0 %v1535
    %v1632 = vpop.f32.mrb[0].mxu0
    %v1633 = vadd.f32 %v1559, %v1632
    %v1634 = vpop.f32.mrb[0].mxu0
    %1635 = vdwg.mxu0
    %v1636 = vmax.f32 %v1628, 0.0
    %v1637 = vmax.f32 %v1633, 0.0
    %s1638 = scalar_lea.vmem [#allocation8], 512
    %v1639 = vld [vmem:[%s1638] sm:$0xff]
    %v1640 = vld [vmem:[%s1638 + $0x8] sm:$0xff]
    %v1641 = vld [vmem:[%s1638 + $0x10] sm:$0xff]
    %v1642 = vld [vmem:[%s1638 + $0x18] sm:$0xff]
    %v1643 = vld [vmem:[%s1638 + $0x20] sm:$0xff]
    %v1644 = vld [vmem:[%s1638 + $0x28] sm:$0xff]
    %v1645 = vld [vmem:[%s1638 + $0x30] sm:$0xff]
    %v1646 = vld [vmem:[%s1638 + $0x38] sm:$0xff]
    %v1647 = vld [vmem:[%s1638 + $0x40] sm:$0xff]
    %v1648 = vld [vmem:[%s1638 + $0x48] sm:$0xff]
    %v1649 = vld [vmem:[%s1638 + $0x50] sm:$0xff]
    %v1650 = vld [vmem:[%s1638 + $0x58] sm:$0xff]
    %v1651 = vld [vmem:[%s1638 + $0x60] sm:$0xff]
    %v1652 = vld [vmem:[%s1638 + $0x68] sm:$0xff]
    %v1653 = vld [vmem:[%s1638 + $0x70] sm:$0xff]
    %v1654 = vld [vmem:[%s1638 + $0x78] sm:$0xff]
    %1655 = vmatprep.subr.mxu0 0.0
    %1656 = vmatpush1.msra.mxu0 %v1639
    %1657 = vmatprep.subr.mxu0 0.0
    %1658 = vmatpush1.msra.mxu0 %v1640
    %1659 = vmatprep.subr.mxu0 0.0
    %1660 = vmatpush1.msra.mxu0 %v1641
    %1661 = vmatprep.subr.mxu0 0.0
    %1662 = vmatpush1.msra.mxu0 %v1642
    %1663 = vmatprep.subr.mxu0 0.0
    %1664 = vmatpush1.msra.mxu0 %v1643
    %1665 = vmatprep.subr.mxu0 0.0
    %1666 = vmatpush1.msra.mxu0 %v1644
    %1667 = vmatprep.subr.mxu0 0.0
    %1668 = vmatpush1.msra.mxu0 %v1645
    %1669 = vmatprep.subr.mxu0 0.0
    %1670 = vmatpush1.msra.mxu0 %v1646
    %1671 = vmatprep.subr.mxu0 0.0
    %1672 = vmatpush1.msra.mxu0 %v1647
    %1673 = vmatprep.subr.mxu0 0.0
    %1674 = vmatpush1.msra.mxu0 %v1648
    %1675 = vmatprep.subr.mxu0 0.0
    %1676 = vmatpush1.msra.mxu0 %v1649
    %1677 = vmatprep.subr.mxu0 0.0
    %1678 = vmatpush1.msra.mxu0 %v1650
    %1679 = vmatprep.subr.mxu0 0.0
    %1680 = vmatpush1.msra.mxu0 %v1651
    %1681 = vmatprep.subr.mxu0 0.0
    %1682 = vmatpush1.msra.mxu0 %v1652
    %1683 = vmatprep.subr.mxu0 0.0
    %1684 = vmatpush1.msra.mxu0 %v1653
    %1685 = vmatprep.subr.mxu0 0.0
    %1686 = vmatpush1.msra.mxu0 %v1654
    %1687 = vmatprep.subr.mxu0 0.0
    %1688 = vmatpush1.msra.mxu0 0.0
    %1689 = vmatprep.subr.mxu0 0.0
    %1690 = vmatpush1.msra.mxu0 0.0
    %1691 = vmatprep.subr.mxu0 0.0
    %1692 = vmatpush1.msra.mxu0 0.0
    %1693 = vmatprep.subr.mxu0 0.0
    %1694 = vmatpush1.msra.mxu0 0.0
    %1695 = vmatprep.subr.mxu0 0.0
    %1696 = vmatpush1.msra.mxu0 0.0
    %1697 = vmatprep.subr.mxu0 0.0
    %1698 = vmatpush1.msra.mxu0 0.0
    %1699 = vmatprep.subr.mxu0 0.0
    %1700 = vmatpush1.msra.mxu0 0.0
    %1701 = vmatprep.subr.mxu0 0.0
    %1702 = vmatpush1.msra.mxu0 0.0
    %1703 = vmatprep.subr.mxu0 0.0
    %1704 = vmatpush1.msra.mxu0 0.0
    %1705 = vmatprep.subr.mxu0 0.0
    %1706 = vmatpush1.msra.mxu0 0.0
    %1707 = vmatprep.subr.mxu0 0.0
    %1708 = vmatpush1.msra.mxu0 0.0
    %1709 = vmatprep.subr.mxu0 0.0
    %1710 = vmatpush1.msra.mxu0 0.0
    %1711 = vmatprep.subr.mxu0 0.0
    %1712 = vmatpush1.msra.mxu0 0.0
    %1713 = vmatprep.subr.mxu0 0.0
    %1714 = vmatpush1.msra.mxu0 0.0
    %1715 = vmatprep.subr.mxu0 0.0
    %1716 = vmatpush1.msra.mxu0 0.0
    %1717 = vmatprep.subr.mxu0 0.0
    %1718 = vmatpush1.msra.mxu0 0.0
    %1719 = vmatprep.mubr.f32.mxu0 0.0
    %1720 = vmatmul.mubr.f32.gmra.mrb[0].mxu0 %v1636
    %v1721 = vpop.f32.mrb[0].mxu0
    %v1722 = vadd.f32 0.0, %v1721
    %v1723 = vpop.f32.mrb[0].mxu0
    %1724 = vmatprep.mubr.f32.mxu0 0.0
    %1725 = vmatmul.mubr.f32.gmra.mrb[0].mxu0 %v1637
    %v1726 = vpop.f32.mrb[0].mxu0
    %v1727 = vadd.f32 0.0, %v1726
    %v1728 = vpop.f32.mrb[0].mxu0
    %1729 = vdwg.mxu0
    %v1730 = vadd.f32 %v1430, %v1722
    %v1731 = vadd.f32 %v1431, %v1727
    %v1732 = vld [vmem:[#allocation2 + $0x28] sm:$0xff]
    %v1733 = vld [vmem:[#allocation2 + $0x58] sm:$0xff]
    %s1734 = scalar_lea.vmem [#allocation5], 640
    %v1735 = vld [vmem:[%s1734] sm:$0xff]
    %v1736 = vld [vmem:[%s1734 + $0x8] sm:$0xff]
    %v1737 = vld [vmem:[%s1734 + $0x10] sm:$0xff]
    %v1738 = vld [vmem:[%s1734 + $0x18] sm:$0xff]
    %v1739 = vld [vmem:[%s1734 + $0x20] sm:$0xff]
    %v1740 = vld [vmem:[%s1734 + $0x28] sm:$0xff]
    %v1741 = vld [vmem:[%s1734 + $0x30] sm:$0xff]
    %v1742 = vld [vmem:[%s1734 + $0x38] sm:$0xff]
    %v1743 = vld [vmem:[%s1734 + $0x40] sm:$0xff]
    %v1744 = vld [vmem:[%s1734 + $0x48] sm:$0xff]
    %v1745 = vld [vmem:[%s1734 + $0x50] sm:$0xff]
    %v1746 = vld [vmem:[%s1734 + $0x58] sm:$0xff]
    %v1747 = vld [vmem:[%s1734 + $0x60] sm:$0xff]
    %v1748 = vld [vmem:[%s1734 + $0x68] sm:$0xff]
    %v1749 = vld [vmem:[%s1734 + $0x70] sm:$0xff]
    %v1750 = vld [vmem:[%s1734 + $0x78] sm:$0xff]
    %s1751 = scalar_lea.vmem %s2, 5
    %v1752 = vld [vmem:[%s1751] sm:$0x1]
    %v1754 = vlaneseq
    %v1755 = vshrl.u32 %v1754, 7
    %v1756 = vsub.s32 0, %v1755
    %v1757 = vrot.slane %v1752, %v1756
    %1759 = vmatprep.subr.mxu0 0.0
    %1760 = vmatpush1.msra.mxu0 %v1735
    %1761 = vmatprep.subr.mxu0 0.0
    %1762 = vmatpush1.msra.mxu0 %v1736
    %1763 = vmatprep.subr.mxu0 0.0
    %1764 = vmatpush1.msra.mxu0 %v1737
    %1765 = vmatprep.subr.mxu0 0.0
    %1766 = vmatpush1.msra.mxu0 %v1738
    %1767 = vmatprep.subr.mxu0 0.0
    %1768 = vmatpush1.msra.mxu0 %v1739
    %1769 = vmatprep.subr.mxu0 0.0
    %1770 = vmatpush1.msra.mxu0 %v1740
    %1771 = vmatprep.subr.mxu0 0.0
    %1772 = vmatpush1.msra.mxu0 %v1741
    %1773 = vmatprep.subr.mxu0 0.0
    %1774 = vmatpush1.msra.mxu0 %v1742
    %1775 = vmatprep.subr.mxu0 0.0
    %1776 = vmatpush1.msra.mxu0 %v1743
    %1777 = vmatprep.subr.mxu0 0.0
    %1778 = vmatpush1.msra.mxu0 %v1744
    %1779 = vmatprep.subr.mxu0 0.0
    %1780 = vmatpush1.msra.mxu0 %v1745
    %1781 = vmatprep.subr.mxu0 0.0
    %1782 = vmatpush1.msra.mxu0 %v1746
    %1783 = vmatprep.subr.mxu0 0.0
    %1784 = vmatpush1.msra.mxu0 %v1747
    %1785 = vmatprep.subr.mxu0 0.0
    %1786 = vmatpush1.msra.mxu0 %v1748
    %1787 = vmatprep.subr.mxu0 0.0
    %1788 = vmatpush1.msra.mxu0 %v1749
    %1789 = vmatprep.subr.mxu0 0.0
    %1790 = vmatpush1.msra.mxu0 %v1750
    %1791 = vmatprep.subr.mxu0 0.0
    %1792 = vmatpush1.msra.mxu0 0.0
    %1793 = vmatprep.subr.mxu0 0.0
    %1794 = vmatpush1.msra.mxu0 0.0
    %1795 = vmatprep.subr.mxu0 0.0
    %1796 = vmatpush1.msra.mxu0 0.0
    %1797 = vmatprep.subr.mxu0 0.0
    %1798 = vmatpush1.msra.mxu0 0.0
    %1799 = vmatprep.subr.mxu0 0.0
    %1800 = vmatpush1.msra.mxu0 0.0
    %1801 = vmatprep.subr.mxu0 0.0
    %1802 = vmatpush1.msra.mxu0 0.0
    %1803 = vmatprep.subr.mxu0 0.0
    %1804 = vmatpush1.msra.mxu0 0.0
    %1805 = vmatprep.subr.mxu0 0.0
    %1806 = vmatpush1.msra.mxu0 0.0
    %1807 = vmatprep.subr.mxu0 0.0
    %1808 = vmatpush1.msra.mxu0 0.0
    %1809 = vmatprep.subr.mxu0 0.0
    %1810 = vmatpush1.msra.mxu0 0.0
    %1811 = vmatprep.subr.mxu0 0.0
    %1812 = vmatpush1.msra.mxu0 0.0
    %1813 = vmatprep.subr.mxu0 0.0
    %1814 = vmatpush1.msra.mxu0 0.0
    %1815 = vmatprep.subr.mxu0 0.0
    %1816 = vmatpush1.msra.mxu0 0.0
    %1817 = vmatprep.subr.mxu0 0.0
    %1818 = vmatpush1.msra.mxu0 0.0
    %1819 = vmatprep.subr.mxu0 0.0
    %1820 = vmatpush1.msra.mxu0 0.0
    %1821 = vmatprep.subr.mxu0 0.0
    %1822 = vmatpush1.msra.mxu0 0.0
    %1823 = vmatprep.mubr.f32.mxu0 0.0
    %1824 = vmatmul.mubr.f32.gmra.mrb[0].mxu0 %v1732
    %v1825 = vpop.f32.mrb[0].mxu0
    %v1826 = vadd.f32 %v1757, %v1825
    %v1827 = vpop.f32.mrb[0].mxu0
    %1828 = vmatprep.mubr.f32.mxu0 0.0
    %1829 = vmatmul.mubr.f32.gmra.mrb[0].mxu0 %v1733
    %v1830 = vpop.f32.mrb[0].mxu0
    %v1831 = vadd.f32 %v1757, %v1830
    %v1832 = vpop.f32.mrb[0].mxu0
    %1833 = vdwg.mxu0
    %v1834 = vmax.f32 %v1826, 0.0
    %v1835 = vmax.f32 %v1831, 0.0
    %s1836 = scalar_lea.vmem [#allocation7], 640
    %v1837 = vld [vmem:[%s1836] sm:$0xff]
    %v1838 = vld [vmem:[%s1836 + $0x8] sm:$0xff]
    %v1839 = vld [vmem:[%s1836 + $0x10] sm:$0xff]
    %v1840 = vld [vmem:[%s1836 + $0x18] sm:$0xff]
    %v1841 = vld [vmem:[%s1836 + $0x20] sm:$0xff]
    %v1842 = vld [vmem:[%s1836 + $0x28] sm:$0xff]
    %v1843 = vld [vmem:[%s1836 + $0x30] sm:$0xff]
    %v1844 = vld [vmem:[%s1836 + $0x38] sm:$0xff]
    %v1845 = vld [vmem:[%s1836 + $0x40] sm:$0xff]
    %v1846 = vld [vmem:[%s1836 + $0x48] sm:$0xff]
    %v1847 = vld [vmem:[%s1836 + $0x50] sm:$0xff]
    %v1848 = vld [vmem:[%s1836 + $0x58] sm:$0xff]
    %v1849 = vld [vmem:[%s1836 + $0x60] sm:$0xff]
    %v1850 = vld [vmem:[%s1836 + $0x68] sm:$0xff]
    %v1851 = vld [vmem:[%s1836 + $0x70] sm:$0xff]
    %v1852 = vld [vmem:[%s1836 + $0x78] sm:$0xff]
    %s1853 = scalar_lea.vmem %s4, 5
    %v1854 = vld [vmem:[%s1853] sm:$0x1]
    %v1856 = vlaneseq
    %v1857 = vshrl.u32 %v1856, 7
    %v1858 = vsub.s32 0, %v1857
    %v1859 = vrot.slane %v1854, %v1858
    %1861 = vmatprep.subr.mxu0 0.0
    %1862 = vmatpush1.msra.mxu0 %v1837
    %1863 = vmatprep.subr.mxu0 0.0
    %1864 = vmatpush1.msra.mxu0 %v1838
    %1865 = vmatprep.subr.mxu0 0.0
    %1866 = vmatpush1.msra.mxu0 %v1839
    %1867 = vmatprep.subr.mxu0 0.0
    %1868 = vmatpush1.msra.mxu0 %v1840
    %1869 = vmatprep.subr.mxu0 0.0
    %1870 = vmatpush1.msra.mxu0 %v1841
    %1871 = vmatprep.subr.mxu0 0.0
    %1872 = vmatpush1.msra.mxu0 %v1842
    %1873 = vmatprep.subr.mxu0 0.0
    %1874 = vmatpush1.msra.mxu0 %v1843
    %1875 = vmatprep.subr.mxu0 0.0
    %1876 = vmatpush1.msra.mxu0 %v1844
    %1877 = vmatprep.subr.mxu0 0.0
    %1878 = vmatpush1.msra.mxu0 %v1845
    %1879 = vmatprep.subr.mxu0 0.0
    %1880 = vmatpush1.msra.mxu0 %v1846
    %1881 = vmatprep.subr.mxu0 0.0
    %1882 = vmatpush1.msra.mxu0 %v1847
    %1883 = vmatprep.subr.mxu0 0.0
    %1884 = vmatpush1.msra.mxu0 %v1848
    %1885 = vmatprep.subr.mxu0 0.0
    %1886 = vmatpush1.msra.mxu0 %v1849
    %1887 = vmatprep.subr.mxu0 0.0
    %1888 = vmatpush1.msra.mxu0 %v1850
    %1889 = vmatprep.subr.mxu0 0.0
    %1890 = vmatpush1.msra.mxu0 %v1851
    %1891 = vmatprep.subr.mxu0 0.0
    %1892 = vmatpush1.msra.mxu0 %v1852
    %1893 = vmatprep.subr.mxu0 0.0
    %1894 = vmatpush1.msra.mxu0 0.0
    %1895 = vmatprep.subr.mxu0 0.0
    %1896 = vmatpush1.msra.mxu0 0.0
    %1897 = vmatprep.subr.mxu0 0.0
    %1898 = vmatpush1.msra.mxu0 0.0
    %1899 = vmatprep.subr.mxu0 0.0
    %1900 = vmatpush1.msra.mxu0 0.0
    %1901 = vmatprep.subr.mxu0 0.0
    %1902 = vmatpush1.msra.mxu0 0.0
    %1903 = vmatprep.subr.mxu0 0.0
    %1904 = vmatpush1.msra.mxu0 0.0
    %1905 = vmatprep.subr.mxu0 0.0
    %1906 = vmatpush1.msra.mxu0 0.0
    %1907 = vmatprep.subr.mxu0 0.0
    %1908 = vmatpush1.msra.mxu0 0.0
    %1909 = vmatprep.subr.mxu0 0.0
    %1910 = vmatpush1.msra.mxu0 0.0
    %1911 = vmatprep.subr.mxu0 0.0
    %1912 = vmatpush1.msra.mxu0 0.0
    %1913 = vmatprep.subr.mxu0 0.0
    %1914 = vmatpush1.msra.mxu0 0.0
    %1915 = vmatprep.subr.mxu0 0.0
    %1916 = vmatpush1.msra.mxu0 0.0
    %1917 = vmatprep.subr.mxu0 0.0
    %1918 = vmatpush1.msra.mxu0 0.0
    %1919 = vmatprep.subr.mxu0 0.0
    %1920 = vmatpush1.msra.mxu0 0.0
    %1921 = vmatprep.subr.mxu0 0.0
    %1922 = vmatpush1.msra.mxu0 0.0
    %1923 = vmatprep.subr.mxu0 0.0
    %1924 = vmatpush1.msra.mxu0 0.0
    %1925 = vmatprep.mubr.f32.mxu0 0.0
    %1926 = vmatmul.mubr.f32.gmra.mrb[0].mxu0 %v1834
    %v1927 = vpop.f32.mrb[0].mxu0
    %v1928 = vadd.f32 %v1859, %v1927
    %v1929 = vpop.f32.mrb[0].mxu0
    %1930 = vmatprep.mubr.f32.mxu0 0.0
    %1931 = vmatmul.mubr.f32.gmra.mrb[0].mxu0 %v1835
    %v1932 = vpop.f32.mrb[0].mxu0
    %v1933 = vadd.f32 %v1859, %v1932
    %v1934 = vpop.f32.mrb[0].mxu0
    %1935 = vdwg.mxu0
    %v1936 = vmax.f32 %v1928, 0.0
    %v1937 = vmax.f32 %v1933, 0.0
    %s1938 = scalar_lea.vmem [#allocation8], 640
    %v1939 = vld [vmem:[%s1938] sm:$0xff]
    %v1940 = vld [vmem:[%s1938 + $0x8] sm:$0xff]
    %v1941 = vld [vmem:[%s1938 + $0x10] sm:$0xff]
    %v1942 = vld [vmem:[%s1938 + $0x18] sm:$0xff]
    %v1943 = vld [vmem:[%s1938 + $0x20] sm:$0xff]
    %v1944 = vld [vmem:[%s1938 + $0x28] sm:$0xff]
    %v1945 = vld [vmem:[%s1938 + $0x30] sm:$0xff]
    %v1946 = vld [vmem:[%s1938 + $0x38] sm:$0xff]
    %v1947 = vld [vmem:[%s1938 + $0x40] sm:$0xff]
    %v1948 = vld [vmem:[%s1938 + $0x48] sm:$0xff]
    %v1949 = vld [vmem:[%s1938 + $0x50] sm:$0xff]
    %v1950 = vld [vmem:[%s1938 + $0x58] sm:$0xff]
    %v1951 = vld [vmem:[%s1938 + $0x60] sm:$0xff]
    %v1952 = vld [vmem:[%s1938 + $0x68] sm:$0xff]
    %v1953 = vld [vmem:[%s1938 + $0x70] sm:$0xff]
    %v1954 = vld [vmem:[%s1938 + $0x78] sm:$0xff]
    %1955 = vmatprep.subr.mxu0 0.0
    %1956 = vmatpush1.msra.mxu0 %v1939
    %1957 = vmatprep.subr.mxu0 0.0
    %1958 = vmatpush1.msra.mxu0 %v1940
    %1959 = vmatprep.subr.mxu0 0.0
    %1960 = vmatpush1.msra.mxu0 %v1941
    %1961 = vmatprep.subr.mxu0 0.0
    %1962 = vmatpush1.msra.mxu0 %v1942
    %1963 = vmatprep.subr.mxu0 0.0
    %1964 = vmatpush1.msra.mxu0 %v1943
    %1965 = vmatprep.subr.mxu0 0.0
    %1966 = vmatpush1.msra.mxu0 %v1944
    %1967 = vmatprep.subr.mxu0 0.0
    %1968 = vmatpush1.msra.mxu0 %v1945
    %1969 = vmatprep.subr.mxu0 0.0
    %1970 = vmatpush1.msra.mxu0 %v1946
    %1971 = vmatprep.subr.mxu0 0.0
    %1972 = vmatpush1.msra.mxu0 %v1947
    %1973 = vmatprep.subr.mxu0 0.0
    %1974 = vmatpush1.msra.mxu0 %v1948
    %1975 = vmatprep.subr.mxu0 0.0
    %1976 = vmatpush1.msra.mxu0 %v1949
    %1977 = vmatprep.subr.mxu0 0.0
    %1978 = vmatpush1.msra.mxu0 %v1950
    %1979 = vmatprep.subr.mxu0 0.0
    %1980 = vmatpush1.msra.mxu0 %v1951
    %1981 = vmatprep.subr.mxu0 0.0
    %1982 = vmatpush1.msra.mxu0 %v1952
    %1983 = vmatprep.subr.mxu0 0.0
    %1984 = vmatpush1.msra.mxu0 %v1953
    %1985 = vmatprep.subr.mxu0 0.0
    %1986 = vmatpush1.msra.mxu0 %v1954
    %1987 = vmatprep.subr.mxu0 0.0
    %1988 = vmatpush1.msra.mxu0 0.0
    %1989 = vmatprep.subr.mxu0 0.0
    %1990 = vmatpush1.msra.mxu0 0.0
    %1991 = vmatprep.subr.mxu0 0.0
    %1992 = vmatpush1.msra.mxu0 0.0
    %1993 = vmatprep.subr.mxu0 0.0
    %1994 = vmatpush1.msra.mxu0 0.0
    %1995 = vmatprep.subr.mxu0 0.0
    %1996 = vmatpush1.msra.mxu0 0.0
    %1997 = vmatprep.subr.mxu0 0.0
    %1998 = vmatpush1.msra.mxu0 0.0
    %1999 = vmatprep.subr.mxu0 0.0
    %2000 = vmatpush1.msra.mxu0 0.0
    %2001 = vmatprep.subr.mxu0 0.0
    %2002 = vmatpush1.msra.mxu0 0.0
    %2003 = vmatprep.subr.mxu0 0.0
    %2004 = vmatpush1.msra.mxu0 0.0
    %2005 = vmatprep.subr.mxu0 0.0
    %2006 = vmatpush1.msra.mxu0 0.0
    %2007 = vmatprep.subr.mxu0 0.0
    %2008 = vmatpush1.msra.mxu0 0.0
    %2009 = vmatprep.subr.mxu0 0.0
    %2010 = vmatpush1.msra.mxu0 0.0
    %2011 = vmatprep.subr.mxu0 0.0
    %2012 = vmatpush1.msra.mxu0 0.0
    %2013 = vmatprep.subr.mxu0 0.0
    %2014 = vmatpush1.msra.mxu0 0.0
    %2015 = vmatprep.subr.mxu0 0.0
    %2016 = vmatpush1.msra.mxu0 0.0
    %2017 = vmatprep.subr.mxu0 0.0
    %2018 = vmatpush1.msra.mxu0 0.0
    %2019 = vmatprep.mubr.f32.mxu0 0.0
    %2020 = vmatmul.mubr.f32.gmra.mrb[0].mxu0 %v1936
    %v2021 = vpop.f32.mrb[0].mxu0
    %v2022 = vadd.f32 0.0, %v2021
    %v2023 = vpop.f32.mrb[0].mxu0
    %2024 = vmatprep.mubr.f32.mxu0 0.0
    %2025 = vmatmul.mubr.f32.gmra.mrb[0].mxu0 %v1937
    %v2026 = vpop.f32.mrb[0].mxu0
    %v2027 = vadd.f32 0.0, %v2026
    %v2028 = vpop.f32.mrb[0].mxu0
    %2029 = vdwg.mxu0
    %v2030 = vadd.f32 %v1730, %v2022
    %v2031 = vadd.f32 %v1731, %v2027
    %v2032 = vld [vmem:[#allocation10] sm:$0x1]
    %v2034 = vlaneseq
    %v2035 = vshrl.u32 %v2034, 7
    %v2036 = vsub.s32 0, %v2035
    %v2037 = vrot.slane %v2032, %v2036
    %v2039 = vadd.f32 %v2030, %v2037
    %v2040 = vadd.f32 %v2031, %v2037
    %v2041 = vmax.f32 %v2039, 0.0
    %v2042 = vmax.f32 %v2040, 0.0
    %v2043 = vld [vmem:[#allocation11] sm:$0xff]
    %v2044 = vld [vmem:[#allocation11 + $0x8] sm:$0xff]
    %v2045 = vld [vmem:[#allocation11 + $0x10] sm:$0xff]
    %v2046 = vld [vmem:[#allocation11 + $0x18] sm:$0xff]
    %v2047 = vld [vmem:[#allocation11 + $0x20] sm:$0xff]
    %v2048 = vld [vmem:[#allocation11 + $0x28] sm:$0xff]
    %v2049 = vld [vmem:[#allocation11 + $0x30] sm:$0xff]
    %v2050 = vld [vmem:[#allocation11 + $0x38] sm:$0xff]
    %v2051 = vld [vmem:[#allocation11 + $0x40] sm:$0xff]
    %v2052 = vld [vmem:[#allocation11 + $0x48] sm:$0xff]
    %v2053 = vld [vmem:[#allocation11 + $0x50] sm:$0xff]
    %v2054 = vld [vmem:[#allocation11 + $0x58] sm:$0xff]
    %v2055 = vld [vmem:[#allocation11 + $0x60] sm:$0xff]
    %v2056 = vld [vmem:[#allocation11 + $0x68] sm:$0xff]
    %v2057 = vld [vmem:[#allocation11 + $0x70] sm:$0xff]
    %v2058 = vld [vmem:[#allocation11 + $0x78] sm:$0xff]
    %v2059 = vld [vmem:[#allocation13] sm:$0x1]
    %v2061 = vlaneseq
    %v2062 = vshrl.u32 %v2061, 7
    %v2063 = vsub.s32 0, %v2062
    %v2064 = vrot.slane %v2059, %v2063
    %2066 = vmatprep.subr.mxu0 0.0
    %2067 = vmatpush1.msra.mxu0 %v2043
    %2068 = vmatprep.subr.mxu0 0.0
    %2069 = vmatpush1.msra.mxu0 %v2044
    %2070 = vmatprep.subr.mxu0 0.0
    %2071 = vmatpush1.msra.mxu0 %v2045
    %2072 = vmatprep.subr.mxu0 0.0
    %2073 = vmatpush1.msra.mxu0 %v2046
    %2074 = vmatprep.subr.mxu0 0.0
    %2075 = vmatpush1.msra.mxu0 %v2047
    %2076 = vmatprep.subr.mxu0 0.0
    %2077 = vmatpush1.msra.mxu0 %v2048
    %2078 = vmatprep.subr.mxu0 0.0
    %2079 = vmatpush1.msra.mxu0 %v2049
    %2080 = vmatprep.subr.mxu0 0.0
    %2081 = vmatpush1.msra.mxu0 %v2050
    %2082 = vmatprep.subr.mxu0 0.0
    %2083 = vmatpush1.msra.mxu0 %v2051
    %2084 = vmatprep.subr.mxu0 0.0
    %2085 = vmatpush1.msra.mxu0 %v2052
    %2086 = vmatprep.subr.mxu0 0.0
    %2087 = vmatpush1.msra.mxu0 %v2053
    %2088 = vmatprep.subr.mxu0 0.0
    %2089 = vmatpush1.msra.mxu0 %v2054
    %2090 = vmatprep.subr.mxu0 0.0
    %2091 = vmatpush1.msra.mxu0 %v2055
    %2092 = vmatprep.subr.mxu0 0.0
    %2093 = vmatpush1.msra.mxu0 %v2056
    %2094 = vmatprep.subr.mxu0 0.0
    %2095 = vmatpush1.msra.mxu0 %v2057
    %2096 = vmatprep.subr.mxu0 0.0
    %2097 = vmatpush1.msra.mxu0 %v2058
    %2098 = vmatprep.subr.mxu0 0.0
    %2099 = vmatpush1.msra.mxu0 0.0
    %2100 = vmatprep.subr.mxu0 0.0
    %2101 = vmatpush1.msra.mxu0 0.0
    %2102 = vmatprep.subr.mxu0 0.0
    %2103 = vmatpush1.msra.mxu0 0.0
    %2104 = vmatprep.subr.mxu0 0.0
    %2105 = vmatpush1.msra.mxu0 0.0
    %2106 = vmatprep.subr.mxu0 0.0
    %2107 = vmatpush1.msra.mxu0 0.0
    %2108 = vmatprep.subr.mxu0 0.0
    %2109 = vmatpush1.msra.mxu0 0.0
    %2110 = vmatprep.subr.mxu0 0.0
    %2111 = vmatpush1.msra.mxu0 0.0
    %2112 = vmatprep.subr.mxu0 0.0
    %2113 = vmatpush1.msra.mxu0 0.0
    %2114 = vmatprep.subr.mxu0 0.0
    %2115 = vmatpush1.msra.mxu0 0.0
    %2116 = vmatprep.subr.mxu0 0.0
    %2117 = vmatpush1.msra.mxu0 0.0
    %2118 = vmatprep.subr.mxu0 0.0
    %2119 = vmatpush1.msra.mxu0 0.0
    %2120 = vmatprep.subr.mxu0 0.0
    %2121 = vmatpush1.msra.mxu0 0.0
    %2122 = vmatprep.subr.mxu0 0.0
    %2123 = vmatpush1.msra.mxu0 0.0
    %2124 = vmatprep.subr.mxu0 0.0
    %2125 = vmatpush1.msra.mxu0 0.0
    %2126 = vmatprep.subr.mxu0 0.0
    %2127 = vmatpush1.msra.mxu0 0.0
    %2128 = vmatprep.subr.mxu0 0.0
    %2129 = vmatpush1.msra.mxu0 0.0
    %2130 = vmatprep.mubr.f32.mxu0 0.0
    %2131 = vmatmul.mubr.f32.gmra.mrb[0].mxu0 %v2041
    %v2132 = vpop.f32.mrb[0].mxu0
    %v2133 = vadd.f32 %v2064, %v2132
    %v2134 = vpop.f32.mrb[0].mxu0
    %2135 = vmatprep.mubr.f32.mxu0 0.0
    %2136 = vmatmul.mubr.f32.gmra.mrb[0].mxu0 %v2042
    %v2137 = vpop.f32.mrb[0].mxu0
    %v2138 = vadd.f32 %v2064, %v2137
    %v2139 = vpop.f32.mrb[0].mxu0
    %2140 = vdwg.mxu0
    %v2141 = vmax.f32 %v2133, 0.0
    %v2142 = vmax.f32 %v2138, 0.0
    %v2143 = vld [vmem:[#allocation14] sm:$0xff]
    %v2144 = vld [vmem:[#allocation14 + $0x8] sm:$0xff]
    %v2145 = vld [vmem:[#allocation14 + $0x10] sm:$0xff]
    %v2146 = vld [vmem:[#allocation14 + $0x18] sm:$0xff]
    %v2147 = vld [vmem:[#allocation14 + $0x20] sm:$0xff]
    %v2148 = vld [vmem:[#allocation14 + $0x28] sm:$0xff]
    %v2149 = vld [vmem:[#allocation14 + $0x30] sm:$0xff]
    %v2150 = vld [vmem:[#allocation14 + $0x38] sm:$0xff]
    %v2151 = vld [vmem:[#allocation14 + $0x40] sm:$0xff]
    %v2152 = vld [vmem:[#allocation14 + $0x48] sm:$0xff]
    %v2153 = vld [vmem:[#allocation14 + $0x50] sm:$0xff]
    %v2154 = vld [vmem:[#allocation14 + $0x58] sm:$0xff]
    %v2155 = vld [vmem:[#allocation14 + $0x60] sm:$0xff]
    %v2156 = vld [vmem:[#allocation14 + $0x68] sm:$0xff]
    %v2157 = vld [vmem:[#allocation14 + $0x70] sm:$0xff]
    %v2158 = vld [vmem:[#allocation14 + $0x78] sm:$0xff]
    %v2159 = vld [vmem:[%s10] sm:$0x1]
    %v2161 = vlaneseq
    %v2162 = vshrl.u32 %v2161, 7
    %v2163 = vsub.s32 0, %v2162
    %v2164 = vrot.slane %v2159, %v2163
    %2166 = vmatprep.subr.mxu0 0.0
    %2167 = vmatpush1.msra.mxu0 %v2143
    %2168 = vmatprep.subr.mxu0 0.0
    %2169 = vmatpush1.msra.mxu0 %v2144
    %2170 = vmatprep.subr.mxu0 0.0
    %2171 = vmatpush1.msra.mxu0 %v2145
    %2172 = vmatprep.subr.mxu0 0.0
    %2173 = vmatpush1.msra.mxu0 %v2146
    %2174 = vmatprep.subr.mxu0 0.0
    %2175 = vmatpush1.msra.mxu0 %v2147
    %2176 = vmatprep.subr.mxu0 0.0
    %2177 = vmatpush1.msra.mxu0 %v2148
    %2178 = vmatprep.subr.mxu0 0.0
    %2179 = vmatpush1.msra.mxu0 %v2149
    %2180 = vmatprep.subr.mxu0 0.0
    %2181 = vmatpush1.msra.mxu0 %v2150
    %2182 = vmatprep.subr.mxu0 0.0
    %2183 = vmatpush1.msra.mxu0 %v2151
    %2184 = vmatprep.subr.mxu0 0.0
    %2185 = vmatpush1.msra.mxu0 %v2152
    %2186 = vmatprep.subr.mxu0 0.0
    %2187 = vmatpush1.msra.mxu0 %v2153
    %2188 = vmatprep.subr.mxu0 0.0
    %2189 = vmatpush1.msra.mxu0 %v2154
    %2190 = vmatprep.subr.mxu0 0.0
    %2191 = vmatpush1.msra.mxu0 %v2155
    %2192 = vmatprep.subr.mxu0 0.0
    %2193 = vmatpush1.msra.mxu0 %v2156
    %2194 = vmatprep.subr.mxu0 0.0
    %2195 = vmatpush1.msra.mxu0 %v2157
    %2196 = vmatprep.subr.mxu0 0.0
    %2197 = vmatpush1.msra.mxu0 %v2158
    %2198 = vmatprep.subr.mxu0 0.0
    %2199 = vmatpush1.msra.mxu0 0.0
    %2200 = vmatprep.subr.mxu0 0.0
    %2201 = vmatpush1.msra.mxu0 0.0
    %2202 = vmatprep.subr.mxu0 0.0
    %2203 = vmatpush1.msra.mxu0 0.0
    %2204 = vmatprep.subr.mxu0 0.0
    %2205 = vmatpush1.msra.mxu0 0.0
    %2206 = vmatprep.subr.mxu0 0.0
    %2207 = vmatpush1.msra.mxu0 0.0
    %2208 = vmatprep.subr.mxu0 0.0
    %2209 = vmatpush1.msra.mxu0 0.0
    %2210 = vmatprep.subr.mxu0 0.0
    %2211 = vmatpush1.msra.mxu0 0.0
    %2212 = vmatprep.subr.mxu0 0.0
    %2213 = vmatpush1.msra.mxu0 0.0
    %2214 = vmatprep.subr.mxu0 0.0
    %2215 = vmatpush1.msra.mxu0 0.0
    %2216 = vmatprep.subr.mxu0 0.0
    %2217 = vmatpush1.msra.mxu0 0.0
    %2218 = vmatprep.subr.mxu0 0.0
    %2219 = vmatpush1.msra.mxu0 0.0
    %2220 = vmatprep.subr.mxu0 0.0
    %2221 = vmatpush1.msra.mxu0 0.0
    %2222 = vmatprep.subr.mxu0 0.0
    %2223 = vmatpush1.msra.mxu0 0.0
    %2224 = vmatprep.subr.mxu0 0.0
    %2225 = vmatpush1.msra.mxu0 0.0
    %2226 = vmatprep.subr.mxu0 0.0
    %2227 = vmatpush1.msra.mxu0 0.0
    %2228 = vmatprep.subr.mxu0 0.0
    %2229 = vmatpush1.msra.mxu0 0.0
    %2230 = vmatprep.mubr.f32.mxu0 0.0
    %2231 = vmatmul.mubr.f32.gmra.mrb[0].mxu0 %v2141
    %v2232 = vpop.f32.mrb[0].mxu0
    %v2233 = vadd.f32 %v2164, %v2232
    %v2234 = vpop.f32.mrb[0].mxu0
    %2235 = vmatprep.mubr.f32.mxu0 0.0
    %2236 = vmatmul.mubr.f32.gmra.mrb[0].mxu0 %v2142
    %v2237 = vpop.f32.mrb[0].mxu0
    %v2238 = vadd.f32 %v2164, %v2237
    %v2239 = vpop.f32.mrb[0].mxu0
    %2240 = vdwg.mxu0
    %v2241 = vld [vmem:[#allocation16] sm:$0xff]
    %v2242 = vld [vmem:[#allocation16 + $0x8] sm:$0xff]
    %v2243 = vld [vmem:[#allocation16 + $0x10] sm:$0xff]
    %v2244 = vld [vmem:[#allocation16 + $0x18] sm:$0xff]
    %v2245 = vld [vmem:[#allocation16 + $0x20] sm:$0xff]
    %v2246 = vld [vmem:[#allocation16 + $0x28] sm:$0xff]
    %v2247 = vld [vmem:[#allocation16 + $0x30] sm:$0xff]
    %v2248 = vld [vmem:[#allocation16 + $0x38] sm:$0xff]
    %v2249 = vld [vmem:[#allocation16 + $0x40] sm:$0xff]
    %v2250 = vld [vmem:[#allocation16 + $0x48] sm:$0xff]
    %v2251 = vld [vmem:[#allocation16 + $0x50] sm:$0xff]
    %v2252 = vld [vmem:[#allocation16 + $0x58] sm:$0xff]
    %v2253 = vld [vmem:[#allocation16 + $0x60] sm:$0xff]
    %v2254 = vld [vmem:[#allocation16 + $0x68] sm:$0xff]
    %v2255 = vld [vmem:[#allocation16 + $0x70] sm:$0xff]
    %v2256 = vld [vmem:[#allocation16 + $0x78] sm:$0xff]
    %v2257 = vld [vmem:[%s12] sm:$0x1]
    %v2259 = vlaneseq
    %v2260 = vshrl.u32 %v2259, 7
    %v2261 = vsub.s32 0, %v2260
    %v2262 = vrot.slane %v2257, %v2261
    %2264 = vmatprep.subr.mxu0 0.0
    %2265 = vmatpush1.msra.mxu0 %v2241
    %2266 = vmatprep.subr.mxu0 0.0
    %2267 = vmatpush1.msra.mxu0 %v2242
    %2268 = vmatprep.subr.mxu0 0.0
    %2269 = vmatpush1.msra.mxu0 %v2243
    %2270 = vmatprep.subr.mxu0 0.0
    %2271 = vmatpush1.msra.mxu0 %v2244
    %2272 = vmatprep.subr.mxu0 0.0
    %2273 = vmatpush1.msra.mxu0 %v2245
    %2274 = vmatprep.subr.mxu0 0.0
    %2275 = vmatpush1.msra.mxu0 %v2246
    %2276 = vmatprep.subr.mxu0 0.0
    %2277 = vmatpush1.msra.mxu0 %v2247
    %2278 = vmatprep.subr.mxu0 0.0
    %2279 = vmatpush1.msra.mxu0 %v2248
    %2280 = vmatprep.subr.mxu0 0.0
    %2281 = vmatpush1.msra.mxu0 %v2249
    %2282 = vmatprep.subr.mxu0 0.0
    %2283 = vmatpush1.msra.mxu0 %v2250
    %2284 = vmatprep.subr.mxu0 0.0
    %2285 = vmatpush1.msra.mxu0 %v2251
    %2286 = vmatprep.subr.mxu0 0.0
    %2287 = vmatpush1.msra.mxu0 %v2252
    %2288 = vmatprep.subr.mxu0 0.0
    %2289 = vmatpush1.msra.mxu0 %v2253
    %2290 = vmatprep.subr.mxu0 0.0
    %2291 = vmatpush1.msra.mxu0 %v2254
    %2292 = vmatprep.subr.mxu0 0.0
    %2293 = vmatpush1.msra.mxu0 %v2255
    %2294 = vmatprep.subr.mxu0 0.0
    %2295 = vmatpush1.msra.mxu0 %v2256
    %2296 = vmatprep.subr.mxu0 0.0
    %2297 = vmatpush1.msra.mxu0 0.0
    %2298 = vmatprep.subr.mxu0 0.0
    %2299 = vmatpush1.msra.mxu0 0.0
    %2300 = vmatprep.subr.mxu0 0.0
    %2301 = vmatpush1.msra.mxu0 0.0
    %2302 = vmatprep.subr.mxu0 0.0
    %2303 = vmatpush1.msra.mxu0 0.0
    %2304 = vmatprep.subr.mxu0 0.0
    %2305 = vmatpush1.msra.mxu0 0.0
    %2306 = vmatprep.subr.mxu0 0.0
    %2307 = vmatpush1.msra.mxu0 0.0
    %2308 = vmatprep.subr.mxu0 0.0
    %2309 = vmatpush1.msra.mxu0 0.0
    %2310 = vmatprep.subr.mxu0 0.0
    %2311 = vmatpush1.msra.mxu0 0.0
    %2312 = vmatprep.subr.mxu0 0.0
    %2313 = vmatpush1.msra.mxu0 0.0
    %2314 = vmatprep.subr.mxu0 0.0
    %2315 = vmatpush1.msra.mxu0 0.0
    %2316 = vmatprep.subr.mxu0 0.0
    %2317 = vmatpush1.msra.mxu0 0.0
    %2318 = vmatprep.subr.mxu0 0.0
    %2319 = vmatpush1.msra.mxu0 0.0
    %2320 = vmatprep.subr.mxu0 0.0
    %2321 = vmatpush1.msra.mxu0 0.0
    %2322 = vmatprep.subr.mxu0 0.0
    %2323 = vmatpush1.msra.mxu0 0.0
    %2324 = vmatprep.subr.mxu0 0.0
    %2325 = vmatpush1.msra.mxu0 0.0
    %2326 = vmatprep.subr.mxu0 0.0
    %2327 = vmatpush1.msra.mxu0 0.0
    %2328 = vmatprep.mubr.f32.mxu0 0.0
    %2329 = vmatmul.mubr.f32.gmra.mrb[0].mxu0 %v2233
    %v2330 = vpop.f32.mrb[0].mxu0
    %v2331 = vadd.f32 %v2262, %v2330
    %v2332 = vpop.f32.mrb[0].mxu0
    %2333 = vmatprep.mubr.f32.mxu0 0.0
    %2334 = vmatmul.mubr.f32.gmra.mrb[0].mxu0 %v2238
    %v2335 = vpop.f32.mrb[0].mxu0
    %v2336 = vadd.f32 %v2262, %v2335
    %v2337 = vpop.f32.mrb[0].mxu0
    %2338 = vdwg.mxu0
    %v2339 = vmax.f32 %v2331, 0.0
    %v2340 = vmax.f32 %v2336, 0.0
    %v2341 = vld [vmem:[#allocation17] sm:$0xff]
    %v2342 = vld [vmem:[#allocation17 + $0x8] sm:$0xff]
    %v2343 = vld [vmem:[#allocation17 + $0x10] sm:$0xff]
    %v2344 = vld [vmem:[#allocation17 + $0x18] sm:$0xff]
    %v2345 = vld [vmem:[#allocation17 + $0x20] sm:$0xff]
    %v2346 = vld [vmem:[#allocation17 + $0x28] sm:$0xff]
    %v2347 = vld [vmem:[#allocation17 + $0x30] sm:$0xff]
    %v2348 = vld [vmem:[#allocation17 + $0x38] sm:$0xff]
    %v2349 = vld [vmem:[#allocation17 + $0x40] sm:$0xff]
    %v2350 = vld [vmem:[#allocation17 + $0x48] sm:$0xff]
    %v2351 = vld [vmem:[#allocation17 + $0x50] sm:$0xff]
    %v2352 = vld [vmem:[#allocation17 + $0x58] sm:$0xff]
    %v2353 = vld [vmem:[#allocation17 + $0x60] sm:$0xff]
    %v2354 = vld [vmem:[#allocation17 + $0x68] sm:$0xff]
    %v2355 = vld [vmem:[#allocation17 + $0x70] sm:$0xff]
    %v2356 = vld [vmem:[#allocation17 + $0x78] sm:$0xff]
    %v2357 = vld [vmem:[%s14] sm:$0x1]
    %v2359 = vlaneseq
    %v2360 = vshrl.u32 %v2359, 7
    %v2361 = vsub.s32 0, %v2360
    %v2362 = vrot.slane %v2357, %v2361
    %2364 = vmatprep.subr.mxu0 0.0
    %2365 = vmatpush1.msra.mxu0 %v2341
    %2366 = vmatprep.subr.mxu0 0.0
    %2367 = vmatpush1.msra.mxu0 %v2342
    %2368 = vmatprep.subr.mxu0 0.0
    %2369 = vmatpush1.msra.mxu0 %v2343
    %2370 = vmatprep.subr.mxu0 0.0
    %2371 = vmatpush1.msra.mxu0 %v2344
    %2372 = vmatprep.subr.mxu0 0.0
    %2373 = vmatpush1.msra.mxu0 %v2345
    %2374 = vmatprep.subr.mxu0 0.0
    %2375 = vmatpush1.msra.mxu0 %v2346
    %2376 = vmatprep.subr.mxu0 0.0
    %2377 = vmatpush1.msra.mxu0 %v2347
    %2378 = vmatprep.subr.mxu0 0.0
    %2379 = vmatpush1.msra.mxu0 %v2348
    %2380 = vmatprep.subr.mxu0 0.0
    %2381 = vmatpush1.msra.mxu0 %v2349
    %2382 = vmatprep.subr.mxu0 0.0
    %2383 = vmatpush1.msra.mxu0 %v2350
    %2384 = vmatprep.subr.mxu0 0.0
    %2385 = vmatpush1.msra.mxu0 %v2351
    %2386 = vmatprep.subr.mxu0 0.0
    %2387 = vmatpush1.msra.mxu0 %v2352
    %2388 = vmatprep.subr.mxu0 0.0
    %2389 = vmatpush1.msra.mxu0 %v2353
    %2390 = vmatprep.subr.mxu0 0.0
    %2391 = vmatpush1.msra.mxu0 %v2354
    %2392 = vmatprep.subr.mxu0 0.0
    %2393 = vmatpush1.msra.mxu0 %v2355
    %2394 = vmatprep.subr.mxu0 0.0
    %2395 = vmatpush1.msra.mxu0 %v2356
    %2396 = vmatprep.subr.mxu0 0.0
    %2397 = vmatpush1.msra.mxu0 0.0
    %2398 = vmatprep.subr.mxu0 0.0
    %2399 = vmatpush1.msra.mxu0 0.0
    %2400 = vmatprep.subr.mxu0 0.0
    %2401 = vmatpush1.msra.mxu0 0.0
    %2402 = vmatprep.subr.mxu0 0.0
    %2403 = vmatpush1.msra.mxu0 0.0
    %2404 = vmatprep.subr.mxu0 0.0
    %2405 = vmatpush1.msra.mxu0 0.0
    %2406 = vmatprep.subr.mxu0 0.0
    %2407 = vmatpush1.msra.mxu0 0.0
    %2408 = vmatprep.subr.mxu0 0.0
    %2409 = vmatpush1.msra.mxu0 0.0
    %2410 = vmatprep.subr.mxu0 0.0
    %2411 = vmatpush1.msra.mxu0 0.0
    %2412 = vmatprep.subr.mxu0 0.0
    %2413 = vmatpush1.msra.mxu0 0.0
    %2414 = vmatprep.subr.mxu0 0.0
    %2415 = vmatpush1.msra.mxu0 0.0
    %2416 = vmatprep.subr.mxu0 0.0
    %2417 = vmatpush1.msra.mxu0 0.0
    %2418 = vmatprep.subr.mxu0 0.0
    %2419 = vmatpush1.msra.mxu0 0.0
    %2420 = vmatprep.subr.mxu0 0.0
    %2421 = vmatpush1.msra.mxu0 0.0
    %2422 = vmatprep.subr.mxu0 0.0
    %2423 = vmatpush1.msra.mxu0 0.0
    %2424 = vmatprep.subr.mxu0 0.0
    %2425 = vmatpush1.msra.mxu0 0.0
    %2426 = vmatprep.subr.mxu0 0.0
    %2427 = vmatpush1.msra.mxu0 0.0
    %2428 = vmatprep.mubr.f32.mxu0 0.0
    %2429 = vmatmul.mubr.f32.gmra.mrb[0].mxu0 %v2339
    %v2430 = vpop.f32.mrb[0].mxu0
    %v2431 = vadd.f32 %v2362, %v2430
    %v2432 = vpop.f32.mrb[0].mxu0
    %2433 = vmatprep.mubr.f32.mxu0 0.0
    %2434 = vmatmul.mubr.f32.gmra.mrb[0].mxu0 %v2340
    %v2435 = vpop.f32.mrb[0].mxu0
    %v2436 = vadd.f32 %v2362, %v2435
    %v2437 = vpop.f32.mrb[0].mxu0
    %2438 = vdwg.mxu0
    %v2439 = vmax.f32 %v2431, 0.0
    %v2440 = vmax.f32 %v2436, 0.0
    %v2441 = vld [vmem:[#allocation19] sm:$0xff]
    %v2442 = vld [vmem:[#allocation19 + $0x8] sm:$0xff]
    %v2443 = vld [vmem:[#allocation19 + $0x10] sm:$0xff]
    %v2444 = vld [vmem:[#allocation19 + $0x18] sm:$0xff]
    %v2445 = vld [vmem:[#allocation19 + $0x20] sm:$0xff]
    %v2446 = vld [vmem:[#allocation19 + $0x28] sm:$0xff]
    %v2447 = vld [vmem:[#allocation19 + $0x30] sm:$0xff]
    %v2448 = vld [vmem:[#allocation19 + $0x38] sm:$0xff]
    %v2449 = vld [vmem:[#allocation19 + $0x40] sm:$0xff]
    %v2450 = vld [vmem:[#allocation19 + $0x48] sm:$0xff]
    %v2451 = vld [vmem:[#allocation19 + $0x50] sm:$0xff]
    %v2452 = vld [vmem:[#allocation19 + $0x58] sm:$0xff]
    %v2453 = vld [vmem:[#allocation19 + $0x60] sm:$0xff]
    %v2454 = vld [vmem:[#allocation19 + $0x68] sm:$0xff]
    %v2455 = vld [vmem:[#allocation19 + $0x70] sm:$0xff]
    %v2456 = vld [vmem:[#allocation19 + $0x78] sm:$0xff]
    %v2457 = vld [vmem:[%s16] sm:$0x1]
    %v2459 = vlaneseq
    %v2460 = vshrl.u32 %v2459, 7
    %v2461 = vsub.s32 0, %v2460
    %v2462 = vrot.slane %v2457, %v2461
    %2464 = vmatprep.subr.mxu0 0.0
    %2465 = vmatpush1.msra.mxu0 %v2441
    %2466 = vmatprep.subr.mxu0 0.0
    %2467 = vmatpush1.msra.mxu0 %v2442
    %2468 = vmatprep.subr.mxu0 0.0
    %2469 = vmatpush1.msra.mxu0 %v2443
    %2470 = vmatprep.subr.mxu0 0.0
    %2471 = vmatpush1.msra.mxu0 %v2444
    %2472 = vmatprep.subr.mxu0 0.0
    %2473 = vmatpush1.msra.mxu0 %v2445
    %2474 = vmatprep.subr.mxu0 0.0
    %2475 = vmatpush1.msra.mxu0 %v2446
    %2476 = vmatprep.subr.mxu0 0.0
    %2477 = vmatpush1.msra.mxu0 %v2447
    %2478 = vmatprep.subr.mxu0 0.0
    %2479 = vmatpush1.msra.mxu0 %v2448
    %2480 = vmatprep.subr.mxu0 0.0
    %2481 = vmatpush1.msra.mxu0 %v2449
    %2482 = vmatprep.subr.mxu0 0.0
    %2483 = vmatpush1.msra.mxu0 %v2450
    %2484 = vmatprep.subr.mxu0 0.0
    %2485 = vmatpush1.msra.mxu0 %v2451
    %2486 = vmatprep.subr.mxu0 0.0
    %2487 = vmatpush1.msra.mxu0 %v2452
    %2488 = vmatprep.subr.mxu0 0.0
    %2489 = vmatpush1.msra.mxu0 %v2453
    %2490 = vmatprep.subr.mxu0 0.0
    %2491 = vmatpush1.msra.mxu0 %v2454
    %2492 = vmatprep.subr.mxu0 0.0
    %2493 = vmatpush1.msra.mxu0 %v2455
    %2494 = vmatprep.subr.mxu0 0.0
    %2495 = vmatpush1.msra.mxu0 %v2456
    %2496 = vmatprep.subr.mxu0 0.0
    %2497 = vmatpush1.msra.mxu0 0.0
    %2498 = vmatprep.subr.mxu0 0.0
    %2499 = vmatpush1.msra.mxu0 0.0
    %2500 = vmatprep.subr.mxu0 0.0
    %2501 = vmatpush1.msra.mxu0 0.0
    %2502 = vmatprep.subr.mxu0 0.0
    %2503 = vmatpush1.msra.mxu0 0.0
    %2504 = vmatprep.subr.mxu0 0.0
    %2505 = vmatpush1.msra.mxu0 0.0
    %2506 = vmatprep.subr.mxu0 0.0
    %2507 = vmatpush1.msra.mxu0 0.0
    %2508 = vmatprep.subr.mxu0 0.0
    %2509 = vmatpush1.msra.mxu0 0.0
    %2510 = vmatprep.subr.mxu0 0.0
    %2511 = vmatpush1.msra.mxu0 0.0
    %2512 = vmatprep.subr.mxu0 0.0
    %2513 = vmatpush1.msra.mxu0 0.0
    %2514 = vmatprep.subr.mxu0 0.0
    %2515 = vmatpush1.msra.mxu0 0.0
    %2516 = vmatprep.subr.mxu0 0.0
    %2517 = vmatpush1.msra.mxu0 0.0
    %2518 = vmatprep.subr.mxu0 0.0
    %2519 = vmatpush1.msra.mxu0 0.0
    %2520 = vmatprep.subr.mxu0 0.0
    %2521 = vmatpush1.msra.mxu0 0.0
    %2522 = vmatprep.subr.mxu0 0.0
    %2523 = vmatpush1.msra.mxu0 0.0
    %2524 = vmatprep.subr.mxu0 0.0
    %2525 = vmatpush1.msra.mxu0 0.0
    %2526 = vmatprep.subr.mxu0 0.0
    %2527 = vmatpush1.msra.mxu0 0.0
    %2528 = vmatprep.mubr.f32.mxu0 0.0
    %2529 = vmatmul.mubr.f32.gmra.mrb[0].mxu0 %v2439
    %v2530 = vpop.f32.mrb[0].mxu0
    %v2531 = vadd.f32 %v2462, %v2530
    %v2532 = vpop.f32.mrb[0].mxu0
    %2533 = vmatprep.mubr.f32.mxu0 0.0
    %2534 = vmatmul.mubr.f32.gmra.mrb[0].mxu0 %v2440
    %v2535 = vpop.f32.mrb[0].mxu0
    %v2536 = vadd.f32 %v2462, %v2535
    %v2537 = vpop.f32.mrb[0].mxu0
    %2538 = vdwg.mxu0
    %v2539 = vld [vmem:[#allocation20] sm:$0xff]
    %v2540 = vld [vmem:[#allocation20 + $0x8] sm:$0xff]
    %v2541 = vld [vmem:[#allocation20 + $0x10] sm:$0xff]
    %v2542 = vld [vmem:[#allocation20 + $0x18] sm:$0xff]
    %v2543 = vld [vmem:[#allocation20 + $0x20] sm:$0xff]
    %v2544 = vld [vmem:[#allocation20 + $0x28] sm:$0xff]
    %v2545 = vld [vmem:[#allocation20 + $0x30] sm:$0xff]
    %v2546 = vld [vmem:[#allocation20 + $0x38] sm:$0xff]
    %v2547 = vld [vmem:[#allocation20 + $0x40] sm:$0xff]
    %v2548 = vld [vmem:[#allocation20 + $0x48] sm:$0xff]
    %v2549 = vld [vmem:[#allocation20 + $0x50] sm:$0xff]
    %v2550 = vld [vmem:[#allocation20 + $0x58] sm:$0xff]
    %v2551 = vld [vmem:[#allocation20 + $0x60] sm:$0xff]
    %v2552 = vld [vmem:[#allocation20 + $0x68] sm:$0xff]
    %v2553 = vld [vmem:[#allocation20 + $0x70] sm:$0xff]
    %v2554 = vld [vmem:[#allocation20 + $0x78] sm:$0xff]
    %v2555 = vld [vmem:[%s18] sm:$0x1]
    %v2557 = vlaneseq
    %v2558 = vshrl.u32 %v2557, 7
    %v2559 = vsub.s32 0, %v2558
    %v2560 = vrot.slane %v2555, %v2559
    %2562 = vmatprep.subr.mxu0 0.0
    %2563 = vmatpush1.msra.mxu0 %v2539
    %2564 = vmatprep.subr.mxu0 0.0
    %2565 = vmatpush1.msra.mxu0 %v2540
    %2566 = vmatprep.subr.mxu0 0.0
    %2567 = vmatpush1.msra.mxu0 %v2541
    %2568 = vmatprep.subr.mxu0 0.0
    %2569 = vmatpush1.msra.mxu0 %v2542
    %2570 = vmatprep.subr.mxu0 0.0
    %2571 = vmatpush1.msra.mxu0 %v2543
    %2572 = vmatprep.subr.mxu0 0.0
    %2573 = vmatpush1.msra.mxu0 %v2544
    %2574 = vmatprep.subr.mxu0 0.0
    %2575 = vmatpush1.msra.mxu0 %v2545
    %2576 = vmatprep.subr.mxu0 0.0
    %2577 = vmatpush1.msra.mxu0 %v2546
    %2578 = vmatprep.subr.mxu0 0.0
    %2579 = vmatpush1.msra.mxu0 %v2547
    %2580 = vmatprep.subr.mxu0 0.0
    %2581 = vmatpush1.msra.mxu0 %v2548
    %2582 = vmatprep.subr.mxu0 0.0
    %2583 = vmatpush1.msra.mxu0 %v2549
    %2584 = vmatprep.subr.mxu0 0.0
    %2585 = vmatpush1.msra.mxu0 %v2550
    %2586 = vmatprep.subr.mxu0 0.0
    %2587 = vmatpush1.msra.mxu0 %v2551
    %2588 = vmatprep.subr.mxu0 0.0
    %2589 = vmatpush1.msra.mxu0 %v2552
    %2590 = vmatprep.subr.mxu0 0.0
    %2591 = vmatpush1.msra.mxu0 %v2553
    %2592 = vmatprep.subr.mxu0 0.0
    %2593 = vmatpush1.msra.mxu0 %v2554
    %2594 = vmatprep.subr.mxu0 0.0
    %2595 = vmatpush1.msra.mxu0 0.0
    %2596 = vmatprep.subr.mxu0 0.0
    %2597 = vmatpush1.msra.mxu0 0.0
    %2598 = vmatprep.subr.mxu0 0.0
    %2599 = vmatpush1.msra.mxu0 0.0
    %2600 = vmatprep.subr.mxu0 0.0
    %2601 = vmatpush1.msra.mxu0 0.0
    %2602 = vmatprep.subr.mxu0 0.0
    %2603 = vmatpush1.msra.mxu0 0.0
    %2604 = vmatprep.subr.mxu0 0.0
    %2605 = vmatpush1.msra.mxu0 0.0
    %2606 = vmatprep.subr.mxu0 0.0
    %2607 = vmatpush1.msra.mxu0 0.0
    %2608 = vmatprep.subr.mxu0 0.0
    %2609 = vmatpush1.msra.mxu0 0.0
    %2610 = vmatprep.subr.mxu0 0.0
    %2611 = vmatpush1.msra.mxu0 0.0
    %2612 = vmatprep.subr.mxu0 0.0
    %2613 = vmatpush1.msra.mxu0 0.0
    %2614 = vmatprep.subr.mxu0 0.0
    %2615 = vmatpush1.msra.mxu0 0.0
    %2616 = vmatprep.subr.mxu0 0.0
    %2617 = vmatpush1.msra.mxu0 0.0
    %2618 = vmatprep.subr.mxu0 0.0
    %2619 = vmatpush1.msra.mxu0 0.0
    %2620 = vmatprep.subr.mxu0 0.0
    %2621 = vmatpush1.msra.mxu0 0.0
    %2622 = vmatprep.subr.mxu0 0.0
    %2623 = vmatpush1.msra.mxu0 0.0
    %2624 = vmatprep.subr.mxu0 0.0
    %2625 = vmatpush1.msra.mxu0 0.0
    %2626 = vmatprep.mubr.f32.mxu0 0.0
    %2627 = vmatmul.mubr.f32.gmra.mrb[0].mxu0 %v2531
    %v2628 = vpop.f32.mrb[0].mxu0
    %v2629 = vadd.f32 %v2560, %v2628
    %v2630 = vpop.f32.mrb[0].mxu0
    %2631 = vmatprep.mubr.f32.mxu0 0.0
    %2632 = vmatmul.mubr.f32.gmra.mrb[0].mxu0 %v2536
    %v2633 = vpop.f32.mrb[0].mxu0
    %v2634 = vadd.f32 %v2560, %v2633
    %v2635 = vpop.f32.mrb[0].mxu0
    %2636 = vdwg.mxu0
    %v2637 = vmax.f32 %v2629, 0.0
    %v2638 = vmax.f32 %v2634, 0.0
    %v2639 = vld [vmem:[#allocation22] sm:$0xff]
    %v2640 = vld [vmem:[#allocation22 + $0x8] sm:$0xff]
    %v2641 = vld [vmem:[#allocation22 + $0x10] sm:$0xff]
    %v2642 = vld [vmem:[#allocation22 + $0x18] sm:$0xff]
    %v2643 = vld [vmem:[#allocation22 + $0x20] sm:$0xff]
    %v2644 = vld [vmem:[#allocation22 + $0x28] sm:$0xff]
    %v2645 = vld [vmem:[#allocation22 + $0x30] sm:$0xff]
    %v2646 = vld [vmem:[#allocation22 + $0x38] sm:$0xff]
    %v2647 = vld [vmem:[#allocation22 + $0x40] sm:$0xff]
    %v2648 = vld [vmem:[#allocation22 + $0x48] sm:$0xff]
    %v2649 = vld [vmem:[#allocation22 + $0x50] sm:$0xff]
    %v2650 = vld [vmem:[#allocation22 + $0x58] sm:$0xff]
    %v2651 = vld [vmem:[#allocation22 + $0x60] sm:$0xff]
    %v2652 = vld [vmem:[#allocation22 + $0x68] sm:$0xff]
    %v2653 = vld [vmem:[#allocation22 + $0x70] sm:$0xff]
    %v2654 = vld [vmem:[#allocation22 + $0x78] sm:$0xff]
    %v2655 = vld [vmem:[%s20] sm:$0x1]
    %v2657 = vlaneseq
    %v2658 = vshrl.u32 %v2657, 7
    %v2659 = vsub.s32 0, %v2658
    %v2660 = vrot.slane %v2655, %v2659
    %2662 = vmatprep.subr.mxu0 0.0
    %2663 = vmatpush1.msra.mxu0 %v2639
    %2664 = vmatprep.subr.mxu0 0.0
    %2665 = vmatpush1.msra.mxu0 %v2640
    %2666 = vmatprep.subr.mxu0 0.0
    %2667 = vmatpush1.msra.mxu0 %v2641
    %2668 = vmatprep.subr.mxu0 0.0
    %2669 = vmatpush1.msra.mxu0 %v2642
    %2670 = vmatprep.subr.mxu0 0.0
    %2671 = vmatpush1.msra.mxu0 %v2643
    %2672 = vmatprep.subr.mxu0 0.0
    %2673 = vmatpush1.msra.mxu0 %v2644
    %2674 = vmatprep.subr.mxu0 0.0
    %2675 = vmatpush1.msra.mxu0 %v2645
    %2676 = vmatprep.subr.mxu0 0.0
    %2677 = vmatpush1.msra.mxu0 %v2646
    %2678 = vmatprep.subr.mxu0 0.0
    %2679 = vmatpush1.msra.mxu0 %v2647
    %2680 = vmatprep.subr.mxu0 0.0
    %2681 = vmatpush1.msra.mxu0 %v2648
    %2682 = vmatprep.subr.mxu0 0.0
    %2683 = vmatpush1.msra.mxu0 %v2649
    %2684 = vmatprep.subr.mxu0 0.0
    %2685 = vmatpush1.msra.mxu0 %v2650
    %2686 = vmatprep.subr.mxu0 0.0
    %2687 = vmatpush1.msra.mxu0 %v2651
    %2688 = vmatprep.subr.mxu0 0.0
    %2689 = vmatpush1.msra.mxu0 %v2652
    %2690 = vmatprep.subr.mxu0 0.0
    %2691 = vmatpush1.msra.mxu0 %v2653
    %2692 = vmatprep.subr.mxu0 0.0
    %2693 = vmatpush1.msra.mxu0 %v2654
    %2694 = vmatprep.subr.mxu0 0.0
    %2695 = vmatpush1.msra.mxu0 0.0
    %2696 = vmatprep.subr.mxu0 0.0
    %2697 = vmatpush1.msra.mxu0 0.0
    %2698 = vmatprep.subr.mxu0 0.0
    %2699 = vmatpush1.msra.mxu0 0.0
    %2700 = vmatprep.subr.mxu0 0.0
    %2701 = vmatpush1.msra.mxu0 0.0
    %2702 = vmatprep.subr.mxu0 0.0
    %2703 = vmatpush1.msra.mxu0 0.0
    %2704 = vmatprep.subr.mxu0 0.0
    %2705 = vmatpush1.msra.mxu0 0.0
    %2706 = vmatprep.subr.mxu0 0.0
    %2707 = vmatpush1.msra.mxu0 0.0
    %2708 = vmatprep.subr.mxu0 0.0
    %2709 = vmatpush1.msra.mxu0 0.0
    %2710 = vmatprep.subr.mxu0 0.0
    %2711 = vmatpush1.msra.mxu0 0.0
    %2712 = vmatprep.subr.mxu0 0.0
    %2713 = vmatpush1.msra.mxu0 0.0
    %2714 = vmatprep.subr.mxu0 0.0
    %2715 = vmatpush1.msra.mxu0 0.0
    %2716 = vmatprep.subr.mxu0 0.0
    %2717 = vmatpush1.msra.mxu0 0.0
    %2718 = vmatprep.subr.mxu0 0.0
    %2719 = vmatpush1.msra.mxu0 0.0
    %2720 = vmatprep.subr.mxu0 0.0
    %2721 = vmatpush1.msra.mxu0 0.0
    %2722 = vmatprep.subr.mxu0 0.0
    %2723 = vmatpush1.msra.mxu0 0.0
    %2724 = vmatprep.subr.mxu0 0.0
    %2725 = vmatpush1.msra.mxu0 0.0
    %2726 = vmatprep.mubr.f32.mxu0 0.0
    %2727 = vmatmul.mubr.f32.gmra.mrb[0].mxu0 %v2637
    %v2728 = vpop.f32.mrb[0].mxu0
    %v2729 = vadd.f32 %v2660, %v2728
    %v2730 = vpop.f32.mrb[0].mxu0
    %2731 = vmatprep.mubr.f32.mxu0 0.0
    %2732 = vmatmul.mubr.f32.gmra.mrb[0].mxu0 %v2638
    %v2733 = vpop.f32.mrb[0].mxu0
    %v2734 = vadd.f32 %v2660, %v2733
    %v2735 = vpop.f32.mrb[0].mxu0
    %2736 = vdwg.mxu0
    %2737 = vst [vmem:[#allocation23] sm:$0xff] %v2729
    %2738 = vst [vmem:[#allocation23 + $0x30] sm:$0xff] %v2734
    %s2739 = scalar_lea.vmem [#allocation19], 128
    %v2740 = vld [vmem:[%s2739] sm:$0xff]
    %v2741 = vld [vmem:[%s2739 + $0x8] sm:$0xff]
    %v2742 = vld [vmem:[%s2739 + $0x10] sm:$0xff]
    %v2743 = vld [vmem:[%s2739 + $0x18] sm:$0xff]
    %v2744 = vld [vmem:[%s2739 + $0x20] sm:$0xff]
    %v2745 = vld [vmem:[%s2739 + $0x28] sm:$0xff]
    %v2746 = vld [vmem:[%s2739 + $0x30] sm:$0xff]
    %v2747 = vld [vmem:[%s2739 + $0x38] sm:$0xff]
    %v2748 = vld [vmem:[%s2739 + $0x40] sm:$0xff]
    %v2749 = vld [vmem:[%s2739 + $0x48] sm:$0xff]
    %v2750 = vld [vmem:[%s2739 + $0x50] sm:$0xff]
    %v2751 = vld [vmem:[%s2739 + $0x58] sm:$0xff]
    %v2752 = vld [vmem:[%s2739 + $0x60] sm:$0xff]
    %v2753 = vld [vmem:[%s2739 + $0x68] sm:$0xff]
    %v2754 = vld [vmem:[%s2739 + $0x70] sm:$0xff]
    %v2755 = vld [vmem:[%s2739 + $0x78] sm:$0xff]
    %s2756 = scalar_lea.vmem %s16, 1
    %v2757 = vld [vmem:[%s2756] sm:$0x1]
    %v2759 = vlaneseq
    %v2760 = vshrl.u32 %v2759, 7
    %v2761 = vsub.s32 0, %v2760
    %v2762 = vrot.slane %v2757, %v2761
    %2764 = vmatprep.subr.mxu0 0.0
    %2765 = vmatpush1.msra.mxu0 %v2740
    %2766 = vmatprep.subr.mxu0 0.0
    %2767 = vmatpush1.msra.mxu0 %v2741
    %2768 = vmatprep.subr.mxu0 0.0
    %2769 = vmatpush1.msra.mxu0 %v2742
    %2770 = vmatprep.subr.mxu0 0.0
    %2771 = vmatpush1.msra.mxu0 %v2743
    %2772 = vmatprep.subr.mxu0 0.0
    %2773 = vmatpush1.msra.mxu0 %v2744
    %2774 = vmatprep.subr.mxu0 0.0
    %2775 = vmatpush1.msra.mxu0 %v2745
    %2776 = vmatprep.subr.mxu0 0.0
    %2777 = vmatpush1.msra.mxu0 %v2746
    %2778 = vmatprep.subr.mxu0 0.0
    %2779 = vmatpush1.msra.mxu0 %v2747
    %2780 = vmatprep.subr.mxu0 0.0
    %2781 = vmatpush1.msra.mxu0 %v2748
    %2782 = vmatprep.subr.mxu0 0.0
    %2783 = vmatpush1.msra.mxu0 %v2749
    %2784 = vmatprep.subr.mxu0 0.0
    %2785 = vmatpush1.msra.mxu0 %v2750
    %2786 = vmatprep.subr.mxu0 0.0
    %2787 = vmatpush1.msra.mxu0 %v2751
    %2788 = vmatprep.subr.mxu0 0.0
    %2789 = vmatpush1.msra.mxu0 %v2752
    %2790 = vmatprep.subr.mxu0 0.0
    %2791 = vmatpush1.msra.mxu0 %v2753
    %2792 = vmatprep.subr.mxu0 0.0
    %2793 = vmatpush1.msra.mxu0 %v2754
    %2794 = vmatprep.subr.mxu0 0.0
    %2795 = vmatpush1.msra.mxu0 %v2755
    %2796 = vmatprep.subr.mxu0 0.0
    %2797 = vmatpush1.msra.mxu0 0.0
    %2798 = vmatprep.subr.mxu0 0.0
    %2799 = vmatpush1.msra.mxu0 0.0
    %2800 = vmatprep.subr.mxu0 0.0
    %2801 = vmatpush1.msra.mxu0 0.0
    %2802 = vmatprep.subr.mxu0 0.0
    %2803 = vmatpush1.msra.mxu0 0.0
    %2804 = vmatprep.subr.mxu0 0.0
    %2805 = vmatpush1.msra.mxu0 0.0
    %2806 = vmatprep.subr.mxu0 0.0
    %2807 = vmatpush1.msra.mxu0 0.0
    %2808 = vmatprep.subr.mxu0 0.0
    %2809 = vmatpush1.msra.mxu0 0.0
    %2810 = vmatprep.subr.mxu0 0.0
    %2811 = vmatpush1.msra.mxu0 0.0
    %2812 = vmatprep.subr.mxu0 0.0
    %2813 = vmatpush1.msra.mxu0 0.0
    %2814 = vmatprep.subr.mxu0 0.0
    %2815 = vmatpush1.msra.mxu0 0.0
    %2816 = vmatprep.subr.mxu0 0.0
    %2817 = vmatpush1.msra.mxu0 0.0
    %2818 = vmatprep.subr.mxu0 0.0
    %2819 = vmatpush1.msra.mxu0 0.0
    %2820 = vmatprep.subr.mxu0 0.0
    %2821 = vmatpush1.msra.mxu0 0.0
    %2822 = vmatprep.subr.mxu0 0.0
    %2823 = vmatpush1.msra.mxu0 0.0
    %2824 = vmatprep.subr.mxu0 0.0
    %2825 = vmatpush1.msra.mxu0 0.0
    %2826 = vmatprep.subr.mxu0 0.0
    %2827 = vmatpush1.msra.mxu0 0.0
    %2828 = vmatprep.mubr.f32.mxu0 0.0
    %2829 = vmatmul.mubr.f32.gmra.mrb[0].mxu0 %v2439
    %v2830 = vpop.f32.mrb[0].mxu0
    %v2831 = vadd.f32 %v2762, %v2830
    %v2832 = vpop.f32.mrb[0].mxu0
    %2833 = vmatprep.mubr.f32.mxu0 0.0
    %2834 = vmatmul.mubr.f32.gmra.mrb[0].mxu0 %v2440
    %v2835 = vpop.f32.mrb[0].mxu0
    %v2836 = vadd.f32 %v2762, %v2835
    %v2837 = vpop.f32.mrb[0].mxu0
    %2838 = vdwg.mxu0
    %s2839 = scalar_lea.vmem [#allocation20], 128
    %v2840 = vld [vmem:[%s2839] sm:$0xff]
    %v2841 = vld [vmem:[%s2839 + $0x8] sm:$0xff]
    %v2842 = vld [vmem:[%s2839 + $0x10] sm:$0xff]
    %v2843 = vld [vmem:[%s2839 + $0x18] sm:$0xff]
    %v2844 = vld [vmem:[%s2839 + $0x20] sm:$0xff]
    %v2845 = vld [vmem:[%s2839 + $0x28] sm:$0xff]
    %v2846 = vld [vmem:[%s2839 + $0x30] sm:$0xff]
    %v2847 = vld [vmem:[%s2839 + $0x38] sm:$0xff]
    %v2848 = vld [vmem:[%s2839 + $0x40] sm:$0xff]
    %v2849 = vld [vmem:[%s2839 + $0x48] sm:$0xff]
    %v2850 = vld [vmem:[%s2839 + $0x50] sm:$0xff]
    %v2851 = vld [vmem:[%s2839 + $0x58] sm:$0xff]
    %v2852 = vld [vmem:[%s2839 + $0x60] sm:$0xff]
    %v2853 = vld [vmem:[%s2839 + $0x68] sm:$0xff]
    %v2854 = vld [vmem:[%s2839 + $0x70] sm:$0xff]
    %v2855 = vld [vmem:[%s2839 + $0x78] sm:$0xff]
    %s2856 = scalar_lea.vmem %s18, 1
    %v2857 = vld [vmem:[%s2856] sm:$0x1]
    %v2859 = vlaneseq
    %v2860 = vshrl.u32 %v2859, 7
    %v2861 = vsub.s32 0, %v2860
    %v2862 = vrot.slane %v2857, %v2861
    %2864 = vmatprep.subr.mxu0 0.0
    %2865 = vmatpush1.msra.mxu0 %v2840
    %2866 = vmatprep.subr.mxu0 0.0
    %2867 = vmatpush1.msra.mxu0 %v2841
    %2868 = vmatprep.subr.mxu0 0.0
    %2869 = vmatpush1.msra.mxu0 %v2842
    %2870 = vmatprep.subr.mxu0 0.0
    %2871 = vmatpush1.msra.mxu0 %v2843
    %2872 = vmatprep.subr.mxu0 0.0
    %2873 = vmatpush1.msra.mxu0 %v2844
    %2874 = vmatprep.subr.mxu0 0.0
    %2875 = vmatpush1.msra.mxu0 %v2845
    %2876 = vmatprep.subr.mxu0 0.0
    %2877 = vmatpush1.msra.mxu0 %v2846
    %2878 = vmatprep.subr.mxu0 0.0
    %2879 = vmatpush1.msra.mxu0 %v2847
    %2880 = vmatprep.subr.mxu0 0.0
    %2881 = vmatpush1.msra.mxu0 %v2848
    %2882 = vmatprep.subr.mxu0 0.0
    %2883 = vmatpush1.msra.mxu0 %v2849
    %2884 = vmatprep.subr.mxu0 0.0
    %2885 = vmatpush1.msra.mxu0 %v2850
    %2886 = vmatprep.subr.mxu0 0.0
    %2887 = vmatpush1.msra.mxu0 %v2851
    %2888 = vmatprep.subr.mxu0 0.0
    %2889 = vmatpush1.msra.mxu0 %v2852
    %2890 = vmatprep.subr.mxu0 0.0
    %2891 = vmatpush1.msra.mxu0 %v2853
    %2892 = vmatprep.subr.mxu0 0.0
    %2893 = vmatpush1.msra.mxu0 %v2854
    %2894 = vmatprep.subr.mxu0 0.0
    %2895 = vmatpush1.msra.mxu0 %v2855
    %2896 = vmatprep.subr.mxu0 0.0
    %2897 = vmatpush1.msra.mxu0 0.0
    %2898 = vmatprep.subr.mxu0 0.0
    %2899 = vmatpush1.msra.mxu0 0.0
    %2900 = vmatprep.subr.mxu0 0.0
    %2901 = vmatpush1.msra.mxu0 0.0
    %2902 = vmatprep.subr.mxu0 0.0
    %2903 = vmatpush1.msra.mxu0 0.0
    %2904 = vmatprep.subr.mxu0 0.0
    %2905 = vmatpush1.msra.mxu0 0.0
    %2906 = vmatprep.subr.mxu0 0.0
    %2907 = vmatpush1.msra.mxu0 0.0
    %2908 = vmatprep.subr.mxu0 0.0
    %2909 = vmatpush1.msra.mxu0 0.0
    %2910 = vmatprep.subr.mxu0 0.0
    %2911 = vmatpush1.msra.mxu0 0.0
    %2912 = vmatprep.subr.mxu0 0.0
    %2913 = vmatpush1.msra.mxu0 0.0
    %2914 = vmatprep.subr.mxu0 0.0
    %2915 = vmatpush1.msra.mxu0 0.0
    %2916 = vmatprep.subr.mxu0 0.0
    %2917 = vmatpush1.msra.mxu0 0.0
    %2918 = vmatprep.subr.mxu0 0.0
    %2919 = vmatpush1.msra.mxu0 0.0
    %2920 = vmatprep.subr.mxu0 0.0
    %2921 = vmatpush1.msra.mxu0 0.0
    %2922 = vmatprep.subr.mxu0 0.0
    %2923 = vmatpush1.msra.mxu0 0.0
    %2924 = vmatprep.subr.mxu0 0.0
    %2925 = vmatpush1.msra.mxu0 0.0
    %2926 = vmatprep.subr.mxu0 0.0
    %2927 = vmatpush1.msra.mxu0 0.0
    %2928 = vmatprep.mubr.f32.mxu0 0.0
    %2929 = vmatmul.mubr.f32.gmra.mrb[0].mxu0 %v2831
    %v2930 = vpop.f32.mrb[0].mxu0
    %v2931 = vadd.f32 %v2862, %v2930
    %v2932 = vpop.f32.mrb[0].mxu0
    %2933 = vmatprep.mubr.f32.mxu0 0.0
    %2934 = vmatmul.mubr.f32.gmra.mrb[0].mxu0 %v2836
    %v2935 = vpop.f32.mrb[0].mxu0
    %v2936 = vadd.f32 %v2862, %v2935
    %v2937 = vpop.f32.mrb[0].mxu0
    %2938 = vdwg.mxu0
    %v2939 = vmax.f32 %v2931, 0.0
    %v2940 = vmax.f32 %v2936, 0.0
    %s2941 = scalar_lea.vmem [#allocation22], 128
    %v2942 = vld [vmem:[%s2941] sm:$0xff]
    %v2943 = vld [vmem:[%s2941 + $0x8] sm:$0xff]
    %v2944 = vld [vmem:[%s2941 + $0x10] sm:$0xff]
    %v2945 = vld [vmem:[%s2941 + $0x18] sm:$0xff]
    %v2946 = vld [vmem:[%s2941 + $0x20] sm:$0xff]
    %v2947 = vld [vmem:[%s2941 + $0x28] sm:$0xff]
    %v2948 = vld [vmem:[%s2941 + $0x30] sm:$0xff]
    %v2949 = vld [vmem:[%s2941 + $0x38] sm:$0xff]
    %v2950 = vld [vmem:[%s2941 + $0x40] sm:$0xff]
    %v2951 = vld [vmem:[%s2941 + $0x48] sm:$0xff]
    %v2952 = vld [vmem:[%s2941 + $0x50] sm:$0xff]
    %v2953 = vld [vmem:[%s2941 + $0x58] sm:$0xff]
    %v2954 = vld [vmem:[%s2941 + $0x60] sm:$0xff]
    %v2955 = vld [vmem:[%s2941 + $0x68] sm:$0xff]
    %v2956 = vld [vmem:[%s2941 + $0x70] sm:$0xff]
    %v2957 = vld [vmem:[%s2941 + $0x78] sm:$0xff]
    %s2958 = scalar_lea.vmem %s20, 1
    %v2959 = vld [vmem:[%s2958] sm:$0x1]
    %v2961 = vlaneseq
    %v2962 = vshrl.u32 %v2961, 7
    %v2963 = vsub.s32 0, %v2962
    %v2964 = vrot.slane %v2959, %v2963
    %2966 = vmatprep.subr.mxu0 0.0
    %2967 = vmatpush1.msra.mxu0 %v2942
    %2968 = vmatprep.subr.mxu0 0.0
    %2969 = vmatpush1.msra.mxu0 %v2943
    %2970 = vmatprep.subr.mxu0 0.0
    %2971 = vmatpush1.msra.mxu0 %v2944
    %2972 = vmatprep.subr.mxu0 0.0
    %2973 = vmatpush1.msra.mxu0 %v2945
    %2974 = vmatprep.subr.mxu0 0.0
    %2975 = vmatpush1.msra.mxu0 %v2946
    %2976 = vmatprep.subr.mxu0 0.0
    %2977 = vmatpush1.msra.mxu0 %v2947
    %2978 = vmatprep.subr.mxu0 0.0
    %2979 = vmatpush1.msra.mxu0 %v2948
    %2980 = vmatprep.subr.mxu0 0.0
    %2981 = vmatpush1.msra.mxu0 %v2949
    %2982 = vmatprep.subr.mxu0 0.0
    %2983 = vmatpush1.msra.mxu0 %v2950
    %2984 = vmatprep.subr.mxu0 0.0
    %2985 = vmatpush1.msra.mxu0 %v2951
    %2986 = vmatprep.subr.mxu0 0.0
    %2987 = vmatpush1.msra.mxu0 %v2952
    %2988 = vmatprep.subr.mxu0 0.0
    %2989 = vmatpush1.msra.mxu0 %v2953
    %2990 = vmatprep.subr.mxu0 0.0
    %2991 = vmatpush1.msra.mxu0 %v2954
    %2992 = vmatprep.subr.mxu0 0.0
    %2993 = vmatpush1.msra.mxu0 %v2955
    %2994 = vmatprep.subr.mxu0 0.0
    %2995 = vmatpush1.msra.mxu0 %v2956
    %2996 = vmatprep.subr.mxu0 0.0
    %2997 = vmatpush1.msra.mxu0 %v2957
    %2998 = vmatprep.subr.mxu0 0.0
    %2999 = vmatpush1.msra.mxu0 0.0
    %3000 = vmatprep.subr.mxu0 0.0
    %3001 = vmatpush1.msra.mxu0 0.0
    %3002 = vmatprep.subr.mxu0 0.0
    %3003 = vmatpush1.msra.mxu0 0.0
    %3004 = vmatprep.subr.mxu0 0.0
    %3005 = vmatpush1.msra.mxu0 0.0
    %3006 = vmatprep.subr.mxu0 0.0
    %3007 = vmatpush1.msra.mxu0 0.0
    %3008 = vmatprep.subr.mxu0 0.0
    %3009 = vmatpush1.msra.mxu0 0.0
    %3010 = vmatprep.subr.mxu0 0.0
    %3011 = vmatpush1.msra.mxu0 0.0
    %3012 = vmatprep.subr.mxu0 0.0
    %3013 = vmatpush1.msra.mxu0 0.0
    %3014 = vmatprep.subr.mxu0 0.0
    %3015 = vmatpush1.msra.mxu0 0.0
    %3016 = vmatprep.subr.mxu0 0.0
    %3017 = vmatpush1.msra.mxu0 0.0
    %3018 = vmatprep.subr.mxu0 0.0
    %3019 = vmatpush1.msra.mxu0 0.0
    %3020 = vmatprep.subr.mxu0 0.0
    %3021 = vmatpush1.msra.mxu0 0.0
    %3022 = vmatprep.subr.mxu0 0.0
    %3023 = vmatpush1.msra.mxu0 0.0
    %3024 = vmatprep.subr.mxu0 0.0
    %3025 = vmatpush1.msra.mxu0 0.0
    %3026 = vmatprep.subr.mxu0 0.0
    %3027 = vmatpush1.msra.mxu0 0.0
    %3028 = vmatprep.subr.mxu0 0.0
    %3029 = vmatpush1.msra.mxu0 0.0
    %3030 = vmatprep.mubr.f32.mxu0 0.0
    %3031 = vmatmul.mubr.f32.gmra.mrb[0].mxu0 %v2939
    %v3032 = vpop.f32.mrb[0].mxu0
    %v3033 = vadd.f32 %v2964, %v3032
    %v3034 = vpop.f32.mrb[0].mxu0
    %3035 = vmatprep.mubr.f32.mxu0 0.0
    %3036 = vmatmul.mubr.f32.gmra.mrb[0].mxu0 %v2940
    %v3037 = vpop.f32.mrb[0].mxu0
    %v3038 = vadd.f32 %v2964, %v3037
    %v3039 = vpop.f32.mrb[0].mxu0
    %3040 = vdwg.mxu0
    %3041 = vst [vmem:[#allocation23 + $0x8] sm:$0xff] %v3033
    %3042 = vst [vmem:[#allocation23 + $0x38] sm:$0xff] %v3038
    %s3043 = scalar_lea.vmem [#allocation19], 256
    %v3044 = vld [vmem:[%s3043] sm:$0xff]
    %v3045 = vld [vmem:[%s3043 + $0x8] sm:$0xff]
    %v3046 = vld [vmem:[%s3043 + $0x10] sm:$0xff]
    %v3047 = vld [vmem:[%s3043 + $0x18] sm:$0xff]
    %v3048 = vld [vmem:[%s3043 + $0x20] sm:$0xff]
    %v3049 = vld [vmem:[%s3043 + $0x28] sm:$0xff]
    %v3050 = vld [vmem:[%s3043 + $0x30] sm:$0xff]
    %v3051 = vld [vmem:[%s3043 + $0x38] sm:$0xff]
    %v3052 = vld [vmem:[%s3043 + $0x40] sm:$0xff]
    %v3053 = vld [vmem:[%s3043 + $0x48] sm:$0xff]
    %v3054 = vld [vmem:[%s3043 + $0x50] sm:$0xff]
    %v3055 = vld [vmem:[%s3043 + $0x58] sm:$0xff]
    %v3056 = vld [vmem:[%s3043 + $0x60] sm:$0xff]
    %v3057 = vld [vmem:[%s3043 + $0x68] sm:$0xff]
    %v3058 = vld [vmem:[%s3043 + $0x70] sm:$0xff]
    %v3059 = vld [vmem:[%s3043 + $0x78] sm:$0xff]
    %s3060 = scalar_lea.vmem %s16, 2
    %v3061 = vld [vmem:[%s3060] sm:$0x1]
    %v3063 = vlaneseq
    %v3064 = vshrl.u32 %v3063, 7
    %v3065 = vsub.s32 0, %v3064
    %v3066 = vrot.slane %v3061, %v3065
    %3068 = vmatprep.subr.mxu0 0.0
    %3069 = vmatpush1.msra.mxu0 %v3044
    %3070 = vmatprep.subr.mxu0 0.0
    %3071 = vmatpush1.msra.mxu0 %v3045
    %3072 = vmatprep.subr.mxu0 0.0
    %3073 = vmatpush1.msra.mxu0 %v3046
    %3074 = vmatprep.subr.mxu0 0.0
    %3075 = vmatpush1.msra.mxu0 %v3047
    %3076 = vmatprep.subr.mxu0 0.0
    %3077 = vmatpush1.msra.mxu0 %v3048
    %3078 = vmatprep.subr.mxu0 0.0
    %3079 = vmatpush1.msra.mxu0 %v3049
    %3080 = vmatprep.subr.mxu0 0.0
    %3081 = vmatpush1.msra.mxu0 %v3050
    %3082 = vmatprep.subr.mxu0 0.0
    %3083 = vmatpush1.msra.mxu0 %v3051
    %3084 = vmatprep.subr.mxu0 0.0
    %3085 = vmatpush1.msra.mxu0 %v3052
    %3086 = vmatprep.subr.mxu0 0.0
    %3087 = vmatpush1.msra.mxu0 %v3053
    %3088 = vmatprep.subr.mxu0 0.0
    %3089 = vmatpush1.msra.mxu0 %v3054
    %3090 = vmatprep.subr.mxu0 0.0
    %3091 = vmatpush1.msra.mxu0 %v3055
    %3092 = vmatprep.subr.mxu0 0.0
    %3093 = vmatpush1.msra.mxu0 %v3056
    %3094 = vmatprep.subr.mxu0 0.0
    %3095 = vmatpush1.msra.mxu0 %v3057
    %3096 = vmatprep.subr.mxu0 0.0
    %3097 = vmatpush1.msra.mxu0 %v3058
    %3098 = vmatprep.subr.mxu0 0.0
    %3099 = vmatpush1.msra.mxu0 %v3059
    %3100 = vmatprep.subr.mxu0 0.0
    %3101 = vmatpush1.msra.mxu0 0.0
    %3102 = vmatprep.subr.mxu0 0.0
    %3103 = vmatpush1.msra.mxu0 0.0
    %3104 = vmatprep.subr.mxu0 0.0
    %3105 = vmatpush1.msra.mxu0 0.0
    %3106 = vmatprep.subr.mxu0 0.0
    %3107 = vmatpush1.msra.mxu0 0.0
    %3108 = vmatprep.subr.mxu0 0.0
    %3109 = vmatpush1.msra.mxu0 0.0
    %3110 = vmatprep.subr.mxu0 0.0
    %3111 = vmatpush1.msra.mxu0 0.0
    %3112 = vmatprep.subr.mxu0 0.0
    %3113 = vmatpush1.msra.mxu0 0.0
    %3114 = vmatprep.subr.mxu0 0.0
    %3115 = vmatpush1.msra.mxu0 0.0
    %3116 = vmatprep.subr.mxu0 0.0
    %3117 = vmatpush1.msra.mxu0 0.0
    %3118 = vmatprep.subr.mxu0 0.0
    %3119 = vmatpush1.msra.mxu0 0.0
    %3120 = vmatprep.subr.mxu0 0.0
    %3121 = vmatpush1.msra.mxu0 0.0
    %3122 = vmatprep.subr.mxu0 0.0
    %3123 = vmatpush1.msra.mxu0 0.0
    %3124 = vmatprep.subr.mxu0 0.0
    %3125 = vmatpush1.msra.mxu0 0.0
    %3126 = vmatprep.subr.mxu0 0.0
    %3127 = vmatpush1.msra.mxu0 0.0
    %3128 = vmatprep.subr.mxu0 0.0
    %3129 = vmatpush1.msra.mxu0 0.0
    %3130 = vmatprep.subr.mxu0 0.0
    %3131 = vmatpush1.msra.mxu0 0.0
    %3132 = vmatprep.mubr.f32.mxu0 0.0
    %3133 = vmatmul.mubr.f32.gmra.mrb[0].mxu0 %v2439
    %v3134 = vpop.f32.mrb[0].mxu0
    %v3135 = vadd.f32 %v3066, %v3134
    %v3136 = vpop.f32.mrb[0].mxu0
    %3137 = vmatprep.mubr.f32.mxu0 0.0
    %3138 = vmatmul.mubr.f32.gmra.mrb[0].mxu0 %v2440
    %v3139 = vpop.f32.mrb[0].mxu0
    %v3140 = vadd.f32 %v3066, %v3139
    %v3141 = vpop.f32.mrb[0].mxu0
    %3142 = vdwg.mxu0
    %s3143 = scalar_lea.vmem [#allocation20], 256
    %v3144 = vld [vmem:[%s3143] sm:$0xff]
    %v3145 = vld [vmem:[%s3143 + $0x8] sm:$0xff]
    %v3146 = vld [vmem:[%s3143 + $0x10] sm:$0xff]
    %v3147 = vld [vmem:[%s3143 + $0x18] sm:$0xff]
    %v3148 = vld [vmem:[%s3143 + $0x20] sm:$0xff]
    %v3149 = vld [vmem:[%s3143 + $0x28] sm:$0xff]
    %v3150 = vld [vmem:[%s3143 + $0x30] sm:$0xff]
    %v3151 = vld [vmem:[%s3143 + $0x38] sm:$0xff]
    %v3152 = vld [vmem:[%s3143 + $0x40] sm:$0xff]
    %v3153 = vld [vmem:[%s3143 + $0x48] sm:$0xff]
    %v3154 = vld [vmem:[%s3143 + $0x50] sm:$0xff]
    %v3155 = vld [vmem:[%s3143 + $0x58] sm:$0xff]
    %v3156 = vld [vmem:[%s3143 + $0x60] sm:$0xff]
    %v3157 = vld [vmem:[%s3143 + $0x68] sm:$0xff]
    %v3158 = vld [vmem:[%s3143 + $0x70] sm:$0xff]
    %v3159 = vld [vmem:[%s3143 + $0x78] sm:$0xff]
    %s3160 = scalar_lea.vmem %s18, 2
    %v3161 = vld [vmem:[%s3160] sm:$0x1]
    %v3163 = vlaneseq
    %v3164 = vshrl.u32 %v3163, 7
    %v3165 = vsub.s32 0, %v3164
    %v3166 = vrot.slane %v3161, %v3165
    %3168 = vmatprep.subr.mxu0 0.0
    %3169 = vmatpush1.msra.mxu0 %v3144
    %3170 = vmatprep.subr.mxu0 0.0
    %3171 = vmatpush1.msra.mxu0 %v3145
    %3172 = vmatprep.subr.mxu0 0.0
    %3173 = vmatpush1.msra.mxu0 %v3146
    %3174 = vmatprep.subr.mxu0 0.0
    %3175 = vmatpush1.msra.mxu0 %v3147
    %3176 = vmatprep.subr.mxu0 0.0
    %3177 = vmatpush1.msra.mxu0 %v3148
    %3178 = vmatprep.subr.mxu0 0.0
    %3179 = vmatpush1.msra.mxu0 %v3149
    %3180 = vmatprep.subr.mxu0 0.0
    %3181 = vmatpush1.msra.mxu0 %v3150
    %3182 = vmatprep.subr.mxu0 0.0
    %3183 = vmatpush1.msra.mxu0 %v3151
    %3184 = vmatprep.subr.mxu0 0.0
    %3185 = vmatpush1.msra.mxu0 %v3152
    %3186 = vmatprep.subr.mxu0 0.0
    %3187 = vmatpush1.msra.mxu0 %v3153
    %3188 = vmatprep.subr.mxu0 0.0
    %3189 = vmatpush1.msra.mxu0 %v3154
    %3190 = vmatprep.subr.mxu0 0.0
    %3191 = vmatpush1.msra.mxu0 %v3155
    %3192 = vmatprep.subr.mxu0 0.0
    %3193 = vmatpush1.msra.mxu0 %v3156
    %3194 = vmatprep.subr.mxu0 0.0
    %3195 = vmatpush1.msra.mxu0 %v3157
    %3196 = vmatprep.subr.mxu0 0.0
    %3197 = vmatpush1.msra.mxu0 %v3158
    %3198 = vmatprep.subr.mxu0 0.0
    %3199 = vmatpush1.msra.mxu0 %v3159
    %3200 = vmatprep.subr.mxu0 0.0
    %3201 = vmatpush1.msra.mxu0 0.0
    %3202 = vmatprep.subr.mxu0 0.0
    %3203 = vmatpush1.msra.mxu0 0.0
    %3204 = vmatprep.subr.mxu0 0.0
    %3205 = vmatpush1.msra.mxu0 0.0
    %3206 = vmatprep.subr.mxu0 0.0
    %3207 = vmatpush1.msra.mxu0 0.0
    %3208 = vmatprep.subr.mxu0 0.0
    %3209 = vmatpush1.msra.mxu0 0.0
    %3210 = vmatprep.subr.mxu0 0.0
    %3211 = vmatpush1.msra.mxu0 0.0
    %3212 = vmatprep.subr.mxu0 0.0
    %3213 = vmatpush1.msra.mxu0 0.0
    %3214 = vmatprep.subr.mxu0 0.0
    %3215 = vmatpush1.msra.mxu0 0.0
    %3216 = vmatprep.subr.mxu0 0.0
    %3217 = vmatpush1.msra.mxu0 0.0
    %3218 = vmatprep.subr.mxu0 0.0
    %3219 = vmatpush1.msra.mxu0 0.0
    %3220 = vmatprep.subr.mxu0 0.0
    %3221 = vmatpush1.msra.mxu0 0.0
    %3222 = vmatprep.subr.mxu0 0.0
    %3223 = vmatpush1.msra.mxu0 0.0
    %3224 = vmatprep.subr.mxu0 0.0
    %3225 = vmatpush1.msra.mxu0 0.0
    %3226 = vmatprep.subr.mxu0 0.0
    %3227 = vmatpush1.msra.mxu0 0.0
    %3228 = vmatprep.subr.mxu0 0.0
    %3229 = vmatpush1.msra.mxu0 0.0
    %3230 = vmatprep.subr.mxu0 0.0
    %3231 = vmatpush1.msra.mxu0 0.0
    %3232 = vmatprep.mubr.f32.mxu0 0.0
    %3233 = vmatmul.mubr.f32.gmra.mrb[0].mxu0 %v3135
    %v3234 = vpop.f32.mrb[0].mxu0
    %v3235 = vadd.f32 %v3166, %v3234
    %v3236 = vpop.f32.mrb[0].mxu0
    %3237 = vmatprep.mubr.f32.mxu0 0.0
    %3238 = vmatmul.mubr.f32.gmra.mrb[0].mxu0 %v3140
    %v3239 = vpop.f32.mrb[0].mxu0
    %v3240 = vadd.f32 %v3166, %v3239
    %v3241 = vpop.f32.mrb[0].mxu0
    %3242 = vdwg.mxu0
    %v3243 = vmax.f32 %v3235, 0.0
    %v3244 = vmax.f32 %v3240, 0.0
    %s3245 = scalar_lea.vmem [#allocation22], 256
    %v3246 = vld [vmem:[%s3245] sm:$0xff]
    %v3247 = vld [vmem:[%s3245 + $0x8] sm:$0xff]
    %v3248 = vld [vmem:[%s3245 + $0x10] sm:$0xff]
    %v3249 = vld [vmem:[%s3245 + $0x18] sm:$0xff]
    %v3250 = vld [vmem:[%s3245 + $0x20] sm:$0xff]
    %v3251 = vld [vmem:[%s3245 + $0x28] sm:$0xff]
    %v3252 = vld [vmem:[%s3245 + $0x30] sm:$0xff]
    %v3253 = vld [vmem:[%s3245 + $0x38] sm:$0xff]
    %v3254 = vld [vmem:[%s3245 + $0x40] sm:$0xff]
    %v3255 = vld [vmem:[%s3245 + $0x48] sm:$0xff]
    %v3256 = vld [vmem:[%s3245 + $0x50] sm:$0xff]
    %v3257 = vld [vmem:[%s3245 + $0x58] sm:$0xff]
    %v3258 = vld [vmem:[%s3245 + $0x60] sm:$0xff]
    %v3259 = vld [vmem:[%s3245 + $0x68] sm:$0xff]
    %v3260 = vld [vmem:[%s3245 + $0x70] sm:$0xff]
    %v3261 = vld [vmem:[%s3245 + $0x78] sm:$0xff]
    %s3262 = scalar_lea.vmem %s20, 2
    %v3263 = vld [vmem:[%s3262] sm:$0x1]
    %v3265 = vlaneseq
    %v3266 = vshrl.u32 %v3265, 7
    %v3267 = vsub.s32 0, %v3266
    %v3268 = vrot.slane %v3263, %v3267
    %3270 = vmatprep.subr.mxu0 0.0
    %3271 = vmatpush1.msra.mxu0 %v3246
    %3272 = vmatprep.subr.mxu0 0.0
    %3273 = vmatpush1.msra.mxu0 %v3247
    %3274 = vmatprep.subr.mxu0 0.0
    %3275 = vmatpush1.msra.mxu0 %v3248
    %3276 = vmatprep.subr.mxu0 0.0
    %3277 = vmatpush1.msra.mxu0 %v3249
    %3278 = vmatprep.subr.mxu0 0.0
    %3279 = vmatpush1.msra.mxu0 %v3250
    %3280 = vmatprep.subr.mxu0 0.0
    %3281 = vmatpush1.msra.mxu0 %v3251
    %3282 = vmatprep.subr.mxu0 0.0
    %3283 = vmatpush1.msra.mxu0 %v3252
    %3284 = vmatprep.subr.mxu0 0.0
    %3285 = vmatpush1.msra.mxu0 %v3253
    %3286 = vmatprep.subr.mxu0 0.0
    %3287 = vmatpush1.msra.mxu0 %v3254
    %3288 = vmatprep.subr.mxu0 0.0
    %3289 = vmatpush1.msra.mxu0 %v3255
    %3290 = vmatprep.subr.mxu0 0.0
    %3291 = vmatpush1.msra.mxu0 %v3256
    %3292 = vmatprep.subr.mxu0 0.0
    %3293 = vmatpush1.msra.mxu0 %v3257
    %3294 = vmatprep.subr.mxu0 0.0
    %3295 = vmatpush1.msra.mxu0 %v3258
    %3296 = vmatprep.subr.mxu0 0.0
    %3297 = vmatpush1.msra.mxu0 %v3259
    %3298 = vmatprep.subr.mxu0 0.0
    %3299 = vmatpush1.msra.mxu0 %v3260
    %3300 = vmatprep.subr.mxu0 0.0
    %3301 = vmatpush1.msra.mxu0 %v3261
    %3302 = vmatprep.subr.mxu0 0.0
    %3303 = vmatpush1.msra.mxu0 0.0
    %3304 = vmatprep.subr.mxu0 0.0
    %3305 = vmatpush1.msra.mxu0 0.0
    %3306 = vmatprep.subr.mxu0 0.0
    %3307 = vmatpush1.msra.mxu0 0.0
    %3308 = vmatprep.subr.mxu0 0.0
    %3309 = vmatpush1.msra.mxu0 0.0
    %3310 = vmatprep.subr.mxu0 0.0
    %3311 = vmatpush1.msra.mxu0 0.0
    %3312 = vmatprep.subr.mxu0 0.0
    %3313 = vmatpush1.msra.mxu0 0.0
    %3314 = vmatprep.subr.mxu0 0.0
    %3315 = vmatpush1.msra.mxu0 0.0
    %3316 = vmatprep.subr.mxu0 0.0
    %3317 = vmatpush1.msra.mxu0 0.0
    %3318 = vmatprep.subr.mxu0 0.0
    %3319 = vmatpush1.msra.mxu0 0.0
    %3320 = vmatprep.subr.mxu0 0.0
    %3321 = vmatpush1.msra.mxu0 0.0
    %3322 = vmatprep.subr.mxu0 0.0
    %3323 = vmatpush1.msra.mxu0 0.0
    %3324 = vmatprep.subr.mxu0 0.0
    %3325 = vmatpush1.msra.mxu0 0.0
    %3326 = vmatprep.subr.mxu0 0.0
    %3327 = vmatpush1.msra.mxu0 0.0
    %3328 = vmatprep.subr.mxu0 0.0
    %3329 = vmatpush1.msra.mxu0 0.0
    %3330 = vmatprep.subr.mxu0 0.0
    %3331 = vmatpush1.msra.mxu0 0.0
    %3332 = vmatprep.subr.mxu0 0.0
    %3333 = vmatpush1.msra.mxu0 0.0
    %3334 = vmatprep.mubr.f32.mxu0 0.0
    %3335 = vmatmul.mubr.f32.gmra.mrb[0].mxu0 %v3243
    %v3336 = vpop.f32.mrb[0].mxu0
    %v3337 = vadd.f32 %v3268, %v3336
    %v3338 = vpop.f32.mrb[0].mxu0
    %3339 = vmatprep.mubr.f32.mxu0 0.0
    %3340 = vmatmul.mubr.f32.gmra.mrb[0].mxu0 %v3244
    %v3341 = vpop.f32.mrb[0].mxu0
    %v3342 = vadd.f32 %v3268, %v3341
    %v3343 = vpop.f32.mrb[0].mxu0
    %3344 = vdwg.mxu0
    %3345 = vst [vmem:[#allocation23 + $0x10] sm:$0xff] %v3337
    %3346 = vst [vmem:[#allocation23 + $0x40] sm:$0xff] %v3342
    %s3347 = scalar_lea.vmem [#allocation19], 384
    %v3348 = vld [vmem:[%s3347] sm:$0xff]
    %v3349 = vld [vmem:[%s3347 + $0x8] sm:$0xff]
    %v3350 = vld [vmem:[%s3347 + $0x10] sm:$0xff]
    %v3351 = vld [vmem:[%s3347 + $0x18] sm:$0xff]
    %v3352 = vld [vmem:[%s3347 + $0x20] sm:$0xff]
    %v3353 = vld [vmem:[%s3347 + $0x28] sm:$0xff]
    %v3354 = vld [vmem:[%s3347 + $0x30] sm:$0xff]
    %v3355 = vld [vmem:[%s3347 + $0x38] sm:$0xff]
    %v3356 = vld [vmem:[%s3347 + $0x40] sm:$0xff]
    %v3357 = vld [vmem:[%s3347 + $0x48] sm:$0xff]
    %v3358 = vld [vmem:[%s3347 + $0x50] sm:$0xff]
    %v3359 = vld [vmem:[%s3347 + $0x58] sm:$0xff]
    %v3360 = vld [vmem:[%s3347 + $0x60] sm:$0xff]
    %v3361 = vld [vmem:[%s3347 + $0x68] sm:$0xff]
    %v3362 = vld [vmem:[%s3347 + $0x70] sm:$0xff]
    %v3363 = vld [vmem:[%s3347 + $0x78] sm:$0xff]
    %s3364 = scalar_lea.vmem %s16, 3
    %v3365 = vld [vmem:[%s3364] sm:$0x1]
    %v3367 = vlaneseq
    %v3368 = vshrl.u32 %v3367, 7
    %v3369 = vsub.s32 0, %v3368
    %v3370 = vrot.slane %v3365, %v3369
    %3372 = vmatprep.subr.mxu0 0.0
    %3373 = vmatpush1.msra.mxu0 %v3348
    %3374 = vmatprep.subr.mxu0 0.0
    %3375 = vmatpush1.msra.mxu0 %v3349
    %3376 = vmatprep.subr.mxu0 0.0
    %3377 = vmatpush1.msra.mxu0 %v3350
    %3378 = vmatprep.subr.mxu0 0.0
    %3379 = vmatpush1.msra.mxu0 %v3351
    %3380 = vmatprep.subr.mxu0 0.0
    %3381 = vmatpush1.msra.mxu0 %v3352
    %3382 = vmatprep.subr.mxu0 0.0
    %3383 = vmatpush1.msra.mxu0 %v3353
    %3384 = vmatprep.subr.mxu0 0.0
    %3385 = vmatpush1.msra.mxu0 %v3354
    %3386 = vmatprep.subr.mxu0 0.0
    %3387 = vmatpush1.msra.mxu0 %v3355
    %3388 = vmatprep.subr.mxu0 0.0
    %3389 = vmatpush1.msra.mxu0 %v3356
    %3390 = vmatprep.subr.mxu0 0.0
    %3391 = vmatpush1.msra.mxu0 %v3357
    %3392 = vmatprep.subr.mxu0 0.0
    %3393 = vmatpush1.msra.mxu0 %v3358
    %3394 = vmatprep.subr.mxu0 0.0
    %3395 = vmatpush1.msra.mxu0 %v3359
    %3396 = vmatprep.subr.mxu0 0.0
    %3397 = vmatpush1.msra.mxu0 %v3360
    %3398 = vmatprep.subr.mxu0 0.0
    %3399 = vmatpush1.msra.mxu0 %v3361
    %3400 = vmatprep.subr.mxu0 0.0
    %3401 = vmatpush1.msra.mxu0 %v3362
    %3402 = vmatprep.subr.mxu0 0.0
    %3403 = vmatpush1.msra.mxu0 %v3363
    %3404 = vmatprep.subr.mxu0 0.0
    %3405 = vmatpush1.msra.mxu0 0.0
    %3406 = vmatprep.subr.mxu0 0.0
    %3407 = vmatpush1.msra.mxu0 0.0
    %3408 = vmatprep.subr.mxu0 0.0
    %3409 = vmatpush1.msra.mxu0 0.0
    %3410 = vmatprep.subr.mxu0 0.0
    %3411 = vmatpush1.msra.mxu0 0.0
    %3412 = vmatprep.subr.mxu0 0.0
    %3413 = vmatpush1.msra.mxu0 0.0
    %3414 = vmatprep.subr.mxu0 0.0
    %3415 = vmatpush1.msra.mxu0 0.0
    %3416 = vmatprep.subr.mxu0 0.0
    %3417 = vmatpush1.msra.mxu0 0.0
    %3418 = vmatprep.subr.mxu0 0.0
    %3419 = vmatpush1.msra.mxu0 0.0
    %3420 = vmatprep.subr.mxu0 0.0
    %3421 = vmatpush1.msra.mxu0 0.0
    %3422 = vmatprep.subr.mxu0 0.0
    %3423 = vmatpush1.msra.mxu0 0.0
    %3424 = vmatprep.subr.mxu0 0.0
    %3425 = vmatpush1.msra.mxu0 0.0
    %3426 = vmatprep.subr.mxu0 0.0
    %3427 = vmatpush1.msra.mxu0 0.0
    %3428 = vmatprep.subr.mxu0 0.0
    %3429 = vmatpush1.msra.mxu0 0.0
    %3430 = vmatprep.subr.mxu0 0.0
    %3431 = vmatpush1.msra.mxu0 0.0
    %3432 = vmatprep.subr.mxu0 0.0
    %3433 = vmatpush1.msra.mxu0 0.0
    %3434 = vmatprep.subr.mxu0 0.0
    %3435 = vmatpush1.msra.mxu0 0.0
    %3436 = vmatprep.mubr.f32.mxu0 0.0
    %3437 = vmatmul.mubr.f32.gmra.mrb[0].mxu0 %v2439
    %v3438 = vpop.f32.mrb[0].mxu0
    %v3439 = vadd.f32 %v3370, %v3438
    %v3440 = vpop.f32.mrb[0].mxu0
    %3441 = vmatprep.mubr.f32.mxu0 0.0
    %3442 = vmatmul.mubr.f32.gmra.mrb[0].mxu0 %v2440
    %v3443 = vpop.f32.mrb[0].mxu0
    %v3444 = vadd.f32 %v3370, %v3443
    %v3445 = vpop.f32.mrb[0].mxu0
    %3446 = vdwg.mxu0
    %s3447 = scalar_lea.vmem [#allocation20], 384
    %v3448 = vld [vmem:[%s3447] sm:$0xff]
    %v3449 = vld [vmem:[%s3447 + $0x8] sm:$0xff]
    %v3450 = vld [vmem:[%s3447 + $0x10] sm:$0xff]
    %v3451 = vld [vmem:[%s3447 + $0x18] sm:$0xff]
    %v3452 = vld [vmem:[%s3447 + $0x20] sm:$0xff]
    %v3453 = vld [vmem:[%s3447 + $0x28] sm:$0xff]
    %v3454 = vld [vmem:[%s3447 + $0x30] sm:$0xff]
    %v3455 = vld [vmem:[%s3447 + $0x38] sm:$0xff]
    %v3456 = vld [vmem:[%s3447 + $0x40] sm:$0xff]
    %v3457 = vld [vmem:[%s3447 + $0x48] sm:$0xff]
    %v3458 = vld [vmem:[%s3447 + $0x50] sm:$0xff]
    %v3459 = vld [vmem:[%s3447 + $0x58] sm:$0xff]
    %v3460 = vld [vmem:[%s3447 + $0x60] sm:$0xff]
    %v3461 = vld [vmem:[%s3447 + $0x68] sm:$0xff]
    %v3462 = vld [vmem:[%s3447 + $0x70] sm:$0xff]
    %v3463 = vld [vmem:[%s3447 + $0x78] sm:$0xff]
    %s3464 = scalar_lea.vmem %s18, 3
    %v3465 = vld [vmem:[%s3464] sm:$0x1]
    %v3467 = vlaneseq
    %v3468 = vshrl.u32 %v3467, 7
    %v3469 = vsub.s32 0, %v3468
    %v3470 = vrot.slane %v3465, %v3469
    %3472 = vmatprep.subr.mxu0 0.0
    %3473 = vmatpush1.msra.mxu0 %v3448
    %3474 = vmatprep.subr.mxu0 0.0
    %3475 = vmatpush1.msra.mxu0 %v3449
    %3476 = vmatprep.subr.mxu0 0.0
    %3477 = vmatpush1.msra.mxu0 %v3450
    %3478 = vmatprep.subr.mxu0 0.0
    %3479 = vmatpush1.msra.mxu0 %v3451
    %3480 = vmatprep.subr.mxu0 0.0
    %3481 = vmatpush1.msra.mxu0 %v3452
    %3482 = vmatprep.subr.mxu0 0.0
    %3483 = vmatpush1.msra.mxu0 %v3453
    %3484 = vmatprep.subr.mxu0 0.0
    %3485 = vmatpush1.msra.mxu0 %v3454
    %3486 = vmatprep.subr.mxu0 0.0
    %3487 = vmatpush1.msra.mxu0 %v3455
    %3488 = vmatprep.subr.mxu0 0.0
    %3489 = vmatpush1.msra.mxu0 %v3456
    %3490 = vmatprep.subr.mxu0 0.0
    %3491 = vmatpush1.msra.mxu0 %v3457
    %3492 = vmatprep.subr.mxu0 0.0
    %3493 = vmatpush1.msra.mxu0 %v3458
    %3494 = vmatprep.subr.mxu0 0.0
    %3495 = vmatpush1.msra.mxu0 %v3459
    %3496 = vmatprep.subr.mxu0 0.0
    %3497 = vmatpush1.msra.mxu0 %v3460
    %3498 = vmatprep.subr.mxu0 0.0
    %3499 = vmatpush1.msra.mxu0 %v3461
    %3500 = vmatprep.subr.mxu0 0.0
    %3501 = vmatpush1.msra.mxu0 %v3462
    %3502 = vmatprep.subr.mxu0 0.0
    %3503 = vmatpush1.msra.mxu0 %v3463
    %3504 = vmatprep.subr.mxu0 0.0
    %3505 = vmatpush1.msra.mxu0 0.0
    %3506 = vmatprep.subr.mxu0 0.0
    %3507 = vmatpush1.msra.mxu0 0.0
    %3508 = vmatprep.subr.mxu0 0.0
    %3509 = vmatpush1.msra.mxu0 0.0
    %3510 = vmatprep.subr.mxu0 0.0
    %3511 = vmatpush1.msra.mxu0 0.0
    %3512 = vmatprep.subr.mxu0 0.0
    %3513 = vmatpush1.msra.mxu0 0.0
    %3514 = vmatprep.subr.mxu0 0.0
    %3515 = vmatpush1.msra.mxu0 0.0
    %3516 = vmatprep.subr.mxu0 0.0
    %3517 = vmatpush1.msra.mxu0 0.0
    %3518 = vmatprep.subr.mxu0 0.0
    %3519 = vmatpush1.msra.mxu0 0.0
    %3520 = vmatprep.subr.mxu0 0.0
    %3521 = vmatpush1.msra.mxu0 0.0
    %3522 = vmatprep.subr.mxu0 0.0
    %3523 = vmatpush1.msra.mxu0 0.0
    %3524 = vmatprep.subr.mxu0 0.0
    %3525 = vmatpush1.msra.mxu0 0.0
    %3526 = vmatprep.subr.mxu0 0.0
    %3527 = vmatpush1.msra.mxu0 0.0
    %3528 = vmatprep.subr.mxu0 0.0
    %3529 = vmatpush1.msra.mxu0 0.0
    %3530 = vmatprep.subr.mxu0 0.0
    %3531 = vmatpush1.msra.mxu0 0.0
    %3532 = vmatprep.subr.mxu0 0.0
    %3533 = vmatpush1.msra.mxu0 0.0
    %3534 = vmatprep.subr.mxu0 0.0
    %3535 = vmatpush1.msra.mxu0 0.0
    %3536 = vmatprep.mubr.f32.mxu0 0.0
    %3537 = vmatmul.mubr.f32.gmra.mrb[0].mxu0 %v3439
    %v3538 = vpop.f32.mrb[0].mxu0
    %v3539 = vadd.f32 %v3470, %v3538
    %v3540 = vpop.f32.mrb[0].mxu0
    %3541 = vmatprep.mubr.f32.mxu0 0.0
    %3542 = vmatmul.mubr.f32.gmra.mrb[0].mxu0 %v3444
    %v3543 = vpop.f32.mrb[0].mxu0
    %v3544 = vadd.f32 %v3470, %v3543
    %v3545 = vpop.f32.mrb[0].mxu0
    %3546 = vdwg.mxu0
    %v3547 = vmax.f32 %v3539, 0.0
    %v3548 = vmax.f32 %v3544, 0.0
    %s3549 = scalar_lea.vmem [#allocation22], 384
    %v3550 = vld [vmem:[%s3549] sm:$0xff]
    %v3551 = vld [vmem:[%s3549 + $0x8] sm:$0xff]
    %v3552 = vld [vmem:[%s3549 + $0x10] sm:$0xff]
    %v3553 = vld [vmem:[%s3549 + $0x18] sm:$0xff]
    %v3554 = vld [vmem:[%s3549 + $0x20] sm:$0xff]
    %v3555 = vld [vmem:[%s3549 + $0x28] sm:$0xff]
    %v3556 = vld [vmem:[%s3549 + $0x30] sm:$0xff]
    %v3557 = vld [vmem:[%s3549 + $0x38] sm:$0xff]
    %v3558 = vld [vmem:[%s3549 + $0x40] sm:$0xff]
    %v3559 = vld [vmem:[%s3549 + $0x48] sm:$0xff]
    %v3560 = vld [vmem:[%s3549 + $0x50] sm:$0xff]
    %v3561 = vld [vmem:[%s3549 + $0x58] sm:$0xff]
    %v3562 = vld [vmem:[%s3549 + $0x60] sm:$0xff]
    %v3563 = vld [vmem:[%s3549 + $0x68] sm:$0xff]
    %v3564 = vld [vmem:[%s3549 + $0x70] sm:$0xff]
    %v3565 = vld [vmem:[%s3549 + $0x78] sm:$0xff]
    %s3566 = scalar_lea.vmem %s20, 3
    %v3567 = vld [vmem:[%s3566] sm:$0x1]
    %v3569 = vlaneseq
    %v3570 = vshrl.u32 %v3569, 7
    %v3571 = vsub.s32 0, %v3570
    %v3572 = vrot.slane %v3567, %v3571
    %3574 = vmatprep.subr.mxu0 0.0
    %3575 = vmatpush1.msra.mxu0 %v3550
    %3576 = vmatprep.subr.mxu0 0.0
    %3577 = vmatpush1.msra.mxu0 %v3551
    %3578 = vmatprep.subr.mxu0 0.0
    %3579 = vmatpush1.msra.mxu0 %v3552
    %3580 = vmatprep.subr.mxu0 0.0
    %3581 = vmatpush1.msra.mxu0 %v3553
    %3582 = vmatprep.subr.mxu0 0.0
    %3583 = vmatpush1.msra.mxu0 %v3554
    %3584 = vmatprep.subr.mxu0 0.0
    %3585 = vmatpush1.msra.mxu0 %v3555
    %3586 = vmatprep.subr.mxu0 0.0
    %3587 = vmatpush1.msra.mxu0 %v3556
    %3588 = vmatprep.subr.mxu0 0.0
    %3589 = vmatpush1.msra.mxu0 %v3557
    %3590 = vmatprep.subr.mxu0 0.0
    %3591 = vmatpush1.msra.mxu0 %v3558
    %3592 = vmatprep.subr.mxu0 0.0
    %3593 = vmatpush1.msra.mxu0 %v3559
    %3594 = vmatprep.subr.mxu0 0.0
    %3595 = vmatpush1.msra.mxu0 %v3560
    %3596 = vmatprep.subr.mxu0 0.0
    %3597 = vmatpush1.msra.mxu0 %v3561
    %3598 = vmatprep.subr.mxu0 0.0
    %3599 = vmatpush1.msra.mxu0 %v3562
    %3600 = vmatprep.subr.mxu0 0.0
    %3601 = vmatpush1.msra.mxu0 %v3563
    %3602 = vmatprep.subr.mxu0 0.0
    %3603 = vmatpush1.msra.mxu0 %v3564
    %3604 = vmatprep.subr.mxu0 0.0
    %3605 = vmatpush1.msra.mxu0 %v3565
    %3606 = vmatprep.subr.mxu0 0.0
    %3607 = vmatpush1.msra.mxu0 0.0
    %3608 = vmatprep.subr.mxu0 0.0
    %3609 = vmatpush1.msra.mxu0 0.0
    %3610 = vmatprep.subr.mxu0 0.0
    %3611 = vmatpush1.msra.mxu0 0.0
    %3612 = vmatprep.subr.mxu0 0.0
    %3613 = vmatpush1.msra.mxu0 0.0
    %3614 = vmatprep.subr.mxu0 0.0
    %3615 = vmatpush1.msra.mxu0 0.0
    %3616 = vmatprep.subr.mxu0 0.0
    %3617 = vmatpush1.msra.mxu0 0.0
    %3618 = vmatprep.subr.mxu0 0.0
    %3619 = vmatpush1.msra.mxu0 0.0
    %3620 = vmatprep.subr.mxu0 0.0
    %3621 = vmatpush1.msra.mxu0 0.0
    %3622 = vmatprep.subr.mxu0 0.0
    %3623 = vmatpush1.msra.mxu0 0.0
    %3624 = vmatprep.subr.mxu0 0.0
    %3625 = vmatpush1.msra.mxu0 0.0
    %3626 = vmatprep.subr.mxu0 0.0
    %3627 = vmatpush1.msra.mxu0 0.0
    %3628 = vmatprep.subr.mxu0 0.0
    %3629 = vmatpush1.msra.mxu0 0.0
    %3630 = vmatprep.subr.mxu0 0.0
    %3631 = vmatpush1.msra.mxu0 0.0
    %3632 = vmatprep.subr.mxu0 0.0
    %3633 = vmatpush1.msra.mxu0 0.0
    %3634 = vmatprep.subr.mxu0 0.0
    %3635 = vmatpush1.msra.mxu0 0.0
    %3636 = vmatprep.subr.mxu0 0.0
    %3637 = vmatpush1.msra.mxu0 0.0
    %3638 = vmatprep.mubr.f32.mxu0 0.0
    %3639 = vmatmul.mubr.f32.gmra.mrb[0].mxu0 %v3547
    %v3640 = vpop.f32.mrb[0].mxu0
    %v3641 = vadd.f32 %v3572, %v3640
    %v3642 = vpop.f32.mrb[0].mxu0
    %3643 = vmatprep.mubr.f32.mxu0 0.0
    %3644 = vmatmul.mubr.f32.gmra.mrb[0].mxu0 %v3548
    %v3645 = vpop.f32.mrb[0].mxu0
    %v3646 = vadd.f32 %v3572, %v3645
    %v3647 = vpop.f32.mrb[0].mxu0
    %3648 = vdwg.mxu0
    %3649 = vst [vmem:[#allocation23 + $0x18] sm:$0xff] %v3641
    %3650 = vst [vmem:[#allocation23 + $0x48] sm:$0xff] %v3646
    %s3651 = scalar_lea.vmem [#allocation19], 512
    %v3652 = vld [vmem:[%s3651] sm:$0xff]
    %v3653 = vld [vmem:[%s3651 + $0x8] sm:$0xff]
    %v3654 = vld [vmem:[%s3651 + $0x10] sm:$0xff]
    %v3655 = vld [vmem:[%s3651 + $0x18] sm:$0xff]
    %v3656 = vld [vmem:[%s3651 + $0x20] sm:$0xff]
    %v3657 = vld [vmem:[%s3651 + $0x28] sm:$0xff]
    %v3658 = vld [vmem:[%s3651 + $0x30] sm:$0xff]
    %v3659 = vld [vmem:[%s3651 + $0x38] sm:$0xff]
    %v3660 = vld [vmem:[%s3651 + $0x40] sm:$0xff]
    %v3661 = vld [vmem:[%s3651 + $0x48] sm:$0xff]
    %v3662 = vld [vmem:[%s3651 + $0x50] sm:$0xff]
    %v3663 = vld [vmem:[%s3651 + $0x58] sm:$0xff]
    %v3664 = vld [vmem:[%s3651 + $0x60] sm:$0xff]
    %v3665 = vld [vmem:[%s3651 + $0x68] sm:$0xff]
    %v3666 = vld [vmem:[%s3651 + $0x70] sm:$0xff]
    %v3667 = vld [vmem:[%s3651 + $0x78] sm:$0xff]
    %s3668 = scalar_lea.vmem %s16, 4
    %v3669 = vld [vmem:[%s3668] sm:$0x1]
    %v3671 = vlaneseq
    %v3672 = vshrl.u32 %v3671, 7
    %v3673 = vsub.s32 0, %v3672
    %v3674 = vrot.slane %v3669, %v3673
    %3676 = vmatprep.subr.mxu0 0.0
    %3677 = vmatpush1.msra.mxu0 %v3652
    %3678 = vmatprep.subr.mxu0 0.0
    %3679 = vmatpush1.msra.mxu0 %v3653
    %3680 = vmatprep.subr.mxu0 0.0
    %3681 = vmatpush1.msra.mxu0 %v3654
    %3682 = vmatprep.subr.mxu0 0.0
    %3683 = vmatpush1.msra.mxu0 %v3655
    %3684 = vmatprep.subr.mxu0 0.0
    %3685 = vmatpush1.msra.mxu0 %v3656
    %3686 = vmatprep.subr.mxu0 0.0
    %3687 = vmatpush1.msra.mxu0 %v3657
    %3688 = vmatprep.subr.mxu0 0.0
    %3689 = vmatpush1.msra.mxu0 %v3658
    %3690 = vmatprep.subr.mxu0 0.0
    %3691 = vmatpush1.msra.mxu0 %v3659
    %3692 = vmatprep.subr.mxu0 0.0
    %3693 = vmatpush1.msra.mxu0 %v3660
    %3694 = vmatprep.subr.mxu0 0.0
    %3695 = vmatpush1.msra.mxu0 %v3661
    %3696 = vmatprep.subr.mxu0 0.0
    %3697 = vmatpush1.msra.mxu0 %v3662
    %3698 = vmatprep.subr.mxu0 0.0
    %3699 = vmatpush1.msra.mxu0 %v3663
    %3700 = vmatprep.subr.mxu0 0.0
    %3701 = vmatpush1.msra.mxu0 %v3664
    %3702 = vmatprep.subr.mxu0 0.0
    %3703 = vmatpush1.msra.mxu0 %v3665
    %3704 = vmatprep.subr.mxu0 0.0
    %3705 = vmatpush1.msra.mxu0 %v3666
    %3706 = vmatprep.subr.mxu0 0.0
    %3707 = vmatpush1.msra.mxu0 %v3667
    %3708 = vmatprep.subr.mxu0 0.0
    %3709 = vmatpush1.msra.mxu0 0.0
    %3710 = vmatprep.subr.mxu0 0.0
    %3711 = vmatpush1.msra.mxu0 0.0
    %3712 = vmatprep.subr.mxu0 0.0
    %3713 = vmatpush1.msra.mxu0 0.0
    %3714 = vmatprep.subr.mxu0 0.0
    %3715 = vmatpush1.msra.mxu0 0.0
    %3716 = vmatprep.subr.mxu0 0.0
    %3717 = vmatpush1.msra.mxu0 0.0
    %3718 = vmatprep.subr.mxu0 0.0
    %3719 = vmatpush1.msra.mxu0 0.0
    %3720 = vmatprep.subr.mxu0 0.0
    %3721 = vmatpush1.msra.mxu0 0.0
    %3722 = vmatprep.subr.mxu0 0.0
    %3723 = vmatpush1.msra.mxu0 0.0
    %3724 = vmatprep.subr.mxu0 0.0
    %3725 = vmatpush1.msra.mxu0 0.0
    %3726 = vmatprep.subr.mxu0 0.0
    %3727 = vmatpush1.msra.mxu0 0.0
    %3728 = vmatprep.subr.mxu0 0.0
    %3729 = vmatpush1.msra.mxu0 0.0
    %3730 = vmatprep.subr.mxu0 0.0
    %3731 = vmatpush1.msra.mxu0 0.0
    %3732 = vmatprep.subr.mxu0 0.0
    %3733 = vmatpush1.msra.mxu0 0.0
    %3734 = vmatprep.subr.mxu0 0.0
    %3735 = vmatpush1.msra.mxu0 0.0
    %3736 = vmatprep.subr.mxu0 0.0
    %3737 = vmatpush1.msra.mxu0 0.0
    %3738 = vmatprep.subr.mxu0 0.0
    %3739 = vmatpush1.msra.mxu0 0.0
    %3740 = vmatprep.mubr.f32.mxu0 0.0
    %3741 = vmatmul.mubr.f32.gmra.mrb[0].mxu0 %v2439
    %v3742 = vpop.f32.mrb[0].mxu0
    %v3743 = vadd.f32 %v3674, %v3742
    %v3744 = vpop.f32.mrb[0].mxu0
    %3745 = vmatprep.mubr.f32.mxu0 0.0
    %3746 = vmatmul.mubr.f32.gmra.mrb[0].mxu0 %v2440
    %v3747 = vpop.f32.mrb[0].mxu0
    %v3748 = vadd.f32 %v3674, %v3747
    %v3749 = vpop.f32.mrb[0].mxu0
    %3750 = vdwg.mxu0
    %s3751 = scalar_lea.vmem [#allocation20], 512
    %v3752 = vld [vmem:[%s3751] sm:$0xff]
    %v3753 = vld [vmem:[%s3751 + $0x8] sm:$0xff]
    %v3754 = vld [vmem:[%s3751 + $0x10] sm:$0xff]
    %v3755 = vld [vmem:[%s3751 + $0x18] sm:$0xff]
    %v3756 = vld [vmem:[%s3751 + $0x20] sm:$0xff]
    %v3757 = vld [vmem:[%s3751 + $0x28] sm:$0xff]
    %v3758 = vld [vmem:[%s3751 + $0x30] sm:$0xff]
    %v3759 = vld [vmem:[%s3751 + $0x38] sm:$0xff]
    %v3760 = vld [vmem:[%s3751 + $0x40] sm:$0xff]
    %v3761 = vld [vmem:[%s3751 + $0x48] sm:$0xff]
    %v3762 = vld [vmem:[%s3751 + $0x50] sm:$0xff]
    %v3763 = vld [vmem:[%s3751 + $0x58] sm:$0xff]
    %v3764 = vld [vmem:[%s3751 + $0x60] sm:$0xff]
    %v3765 = vld [vmem:[%s3751 + $0x68] sm:$0xff]
    %v3766 = vld [vmem:[%s3751 + $0x70] sm:$0xff]
    %v3767 = vld [vmem:[%s3751 + $0x78] sm:$0xff]
    %s3768 = scalar_lea.vmem %s18, 4
    %v3769 = vld [vmem:[%s3768] sm:$0x1]
    %v3771 = vlaneseq
    %v3772 = vshrl.u32 %v3771, 7
    %v3773 = vsub.s32 0, %v3772
    %v3774 = vrot.slane %v3769, %v3773
    %3776 = vmatprep.subr.mxu0 0.0
    %3777 = vmatpush1.msra.mxu0 %v3752
    %3778 = vmatprep.subr.mxu0 0.0
    %3779 = vmatpush1.msra.mxu0 %v3753
    %3780 = vmatprep.subr.mxu0 0.0
    %3781 = vmatpush1.msra.mxu0 %v3754
    %3782 = vmatprep.subr.mxu0 0.0
    %3783 = vmatpush1.msra.mxu0 %v3755
    %3784 = vmatprep.subr.mxu0 0.0
    %3785 = vmatpush1.msra.mxu0 %v3756
    %3786 = vmatprep.subr.mxu0 0.0
    %3787 = vmatpush1.msra.mxu0 %v3757
    %3788 = vmatprep.subr.mxu0 0.0
    %3789 = vmatpush1.msra.mxu0 %v3758
    %3790 = vmatprep.subr.mxu0 0.0
    %3791 = vmatpush1.msra.mxu0 %v3759
    %3792 = vmatprep.subr.mxu0 0.0
    %3793 = vmatpush1.msra.mxu0 %v3760
    %3794 = vmatprep.subr.mxu0 0.0
    %3795 = vmatpush1.msra.mxu0 %v3761
    %3796 = vmatprep.subr.mxu0 0.0
    %3797 = vmatpush1.msra.mxu0 %v3762
    %3798 = vmatprep.subr.mxu0 0.0
    %3799 = vmatpush1.msra.mxu0 %v3763
    %3800 = vmatprep.subr.mxu0 0.0
    %3801 = vmatpush1.msra.mxu0 %v3764
    %3802 = vmatprep.subr.mxu0 0.0
    %3803 = vmatpush1.msra.mxu0 %v3765
    %3804 = vmatprep.subr.mxu0 0.0
    %3805 = vmatpush1.msra.mxu0 %v3766
    %3806 = vmatprep.subr.mxu0 0.0
    %3807 = vmatpush1.msra.mxu0 %v3767
    %3808 = vmatprep.subr.mxu0 0.0
    %3809 = vmatpush1.msra.mxu0 0.0
    %3810 = vmatprep.subr.mxu0 0.0
    %3811 = vmatpush1.msra.mxu0 0.0
    %3812 = vmatprep.subr.mxu0 0.0
    %3813 = vmatpush1.msra.mxu0 0.0
    %3814 = vmatprep.subr.mxu0 0.0
    %3815 = vmatpush1.msra.mxu0 0.0
    %3816 = vmatprep.subr.mxu0 0.0
    %3817 = vmatpush1.msra.mxu0 0.0
    %3818 = vmatprep.subr.mxu0 0.0
    %3819 = vmatpush1.msra.mxu0 0.0
    %3820 = vmatprep.subr.mxu0 0.0
    %3821 = vmatpush1.msra.mxu0 0.0
    %3822 = vmatprep.subr.mxu0 0.0
    %3823 = vmatpush1.msra.mxu0 0.0
    %3824 = vmatprep.subr.mxu0 0.0
    %3825 = vmatpush1.msra.mxu0 0.0
    %3826 = vmatprep.subr.mxu0 0.0
    %3827 = vmatpush1.msra.mxu0 0.0
    %3828 = vmatprep.subr.mxu0 0.0
    %3829 = vmatpush1.msra.mxu0 0.0
    %3830 = vmatprep.subr.mxu0 0.0
    %3831 = vmatpush1.msra.mxu0 0.0
    %3832 = vmatprep.subr.mxu0 0.0
    %3833 = vmatpush1.msra.mxu0 0.0
    %3834 = vmatprep.subr.mxu0 0.0
    %3835 = vmatpush1.msra.mxu0 0.0
    %3836 = vmatprep.subr.mxu0 0.0
    %3837 = vmatpush1.msra.mxu0 0.0
    %3838 = vmatprep.subr.mxu0 0.0
    %3839 = vmatpush1.msra.mxu0 0.0
    %3840 = vmatprep.mubr.f32.mxu0 0.0
    %3841 = vmatmul.mubr.f32.gmra.mrb[0].mxu0 %v3743
    %v3842 = vpop.f32.mrb[0].mxu0
    %v3843 = vadd.f32 %v3774, %v3842
    %v3844 = vpop.f32.mrb[0].mxu0
    %3845 = vmatprep.mubr.f32.mxu0 0.0
    %3846 = vmatmul.mubr.f32.gmra.mrb[0].mxu0 %v3748
    %v3847 = vpop.f32.mrb[0].mxu0
    %v3848 = vadd.f32 %v3774, %v3847
    %v3849 = vpop.f32.mrb[0].mxu0
    %3850 = vdwg.mxu0
    %v3851 = vmax.f32 %v3843, 0.0
    %v3852 = vmax.f32 %v3848, 0.0
    %s3853 = scalar_lea.vmem [#allocation22], 512
    %v3854 = vld [vmem:[%s3853] sm:$0xff]
    %v3855 = vld [vmem:[%s3853 + $0x8] sm:$0xff]
    %v3856 = vld [vmem:[%s3853 + $0x10] sm:$0xff]
    %v3857 = vld [vmem:[%s3853 + $0x18] sm:$0xff]
    %v3858 = vld [vmem:[%s3853 + $0x20] sm:$0xff]
    %v3859 = vld [vmem:[%s3853 + $0x28] sm:$0xff]
    %v3860 = vld [vmem:[%s3853 + $0x30] sm:$0xff]
    %v3861 = vld [vmem:[%s3853 + $0x38] sm:$0xff]
    %v3862 = vld [vmem:[%s3853 + $0x40] sm:$0xff]
    %v3863 = vld [vmem:[%s3853 + $0x48] sm:$0xff]
    %v3864 = vld [vmem:[%s3853 + $0x50] sm:$0xff]
    %v3865 = vld [vmem:[%s3853 + $0x58] sm:$0xff]
    %v3866 = vld [vmem:[%s3853 + $0x60] sm:$0xff]
    %v3867 = vld [vmem:[%s3853 + $0x68] sm:$0xff]
    %v3868 = vld [vmem:[%s3853 + $0x70] sm:$0xff]
    %v3869 = vld [vmem:[%s3853 + $0x78] sm:$0xff]
    %s3870 = scalar_lea.vmem %s20, 4
    %v3871 = vld [vmem:[%s3870] sm:$0x1]
    %v3873 = vlaneseq
    %v3874 = vshrl.u32 %v3873, 7
    %v3875 = vsub.s32 0, %v3874
    %v3876 = vrot.slane %v3871, %v3875
    %3878 = vmatprep.subr.mxu0 0.0
    %3879 = vmatpush1.msra.mxu0 %v3854
    %3880 = vmatprep.subr.mxu0 0.0
    %3881 = vmatpush1.msra.mxu0 %v3855
    %3882 = vmatprep.subr.mxu0 0.0
    %3883 = vmatpush1.msra.mxu0 %v3856
    %3884 = vmatprep.subr.mxu0 0.0
    %3885 = vmatpush1.msra.mxu0 %v3857
    %3886 = vmatprep.subr.mxu0 0.0
    %3887 = vmatpush1.msra.mxu0 %v3858
    %3888 = vmatprep.subr.mxu0 0.0
    %3889 = vmatpush1.msra.mxu0 %v3859
    %3890 = vmatprep.subr.mxu0 0.0
    %3891 = vmatpush1.msra.mxu0 %v3860
    %3892 = vmatprep.subr.mxu0 0.0
    %3893 = vmatpush1.msra.mxu0 %v3861
    %3894 = vmatprep.subr.mxu0 0.0
    %3895 = vmatpush1.msra.mxu0 %v3862
    %3896 = vmatprep.subr.mxu0 0.0
    %3897 = vmatpush1.msra.mxu0 %v3863
    %3898 = vmatprep.subr.mxu0 0.0
    %3899 = vmatpush1.msra.mxu0 %v3864
    %3900 = vmatprep.subr.mxu0 0.0
    %3901 = vmatpush1.msra.mxu0 %v3865
    %3902 = vmatprep.subr.mxu0 0.0
    %3903 = vmatpush1.msra.mxu0 %v3866
    %3904 = vmatprep.subr.mxu0 0.0
    %3905 = vmatpush1.msra.mxu0 %v3867
    %3906 = vmatprep.subr.mxu0 0.0
    %3907 = vmatpush1.msra.mxu0 %v3868
    %3908 = vmatprep.subr.mxu0 0.0
    %3909 = vmatpush1.msra.mxu0 %v3869
    %3910 = vmatprep.subr.mxu0 0.0
    %3911 = vmatpush1.msra.mxu0 0.0
    %3912 = vmatprep.subr.mxu0 0.0
    %3913 = vmatpush1.msra.mxu0 0.0
    %3914 = vmatprep.subr.mxu0 0.0
    %3915 = vmatpush1.msra.mxu0 0.0
    %3916 = vmatprep.subr.mxu0 0.0
    %3917 = vmatpush1.msra.mxu0 0.0
    %3918 = vmatprep.subr.mxu0 0.0
    %3919 = vmatpush1.msra.mxu0 0.0
    %3920 = vmatprep.subr.mxu0 0.0
    %3921 = vmatpush1.msra.mxu0 0.0
    %3922 = vmatprep.subr.mxu0 0.0
    %3923 = vmatpush1.msra.mxu0 0.0
    %3924 = vmatprep.subr.mxu0 0.0
    %3925 = vmatpush1.msra.mxu0 0.0
    %3926 = vmatprep.subr.mxu0 0.0
    %3927 = vmatpush1.msra.mxu0 0.0
    %3928 = vmatprep.subr.mxu0 0.0
    %3929 = vmatpush1.msra.mxu0 0.0
    %3930 = vmatprep.subr.mxu0 0.0
    %3931 = vmatpush1.msra.mxu0 0.0
    %3932 = vmatprep.subr.mxu0 0.0
    %3933 = vmatpush1.msra.mxu0 0.0
    %3934 = vmatprep.subr.mxu0 0.0
    %3935 = vmatpush1.msra.mxu0 0.0
    %3936 = vmatprep.subr.mxu0 0.0
    %3937 = vmatpush1.msra.mxu0 0.0
    %3938 = vmatprep.subr.mxu0 0.0
    %3939 = vmatpush1.msra.mxu0 0.0
    %3940 = vmatprep.subr.mxu0 0.0
    %3941 = vmatpush1.msra.mxu0 0.0
    %3942 = vmatprep.mubr.f32.mxu0 0.0
    %3943 = vmatmul.mubr.f32.gmra.mrb[0].mxu0 %v3851
    %v3944 = vpop.f32.mrb[0].mxu0
    %v3945 = vadd.f32 %v3876, %v3944
    %v3946 = vpop.f32.mrb[0].mxu0
    %3947 = vmatprep.mubr.f32.mxu0 0.0
    %3948 = vmatmul.mubr.f32.gmra.mrb[0].mxu0 %v3852
    %v3949 = vpop.f32.mrb[0].mxu0
    %v3950 = vadd.f32 %v3876, %v3949
    %v3951 = vpop.f32.mrb[0].mxu0
    %3952 = vdwg.mxu0
    %3953 = vst [vmem:[#allocation23 + $0x20] sm:$0xff] %v3945
    %3954 = vst [vmem:[#allocation23 + $0x50] sm:$0xff] %v3950
    %s3955 = scalar_lea.vmem [#allocation19], 640
    %v3956 = vld [vmem:[%s3955] sm:$0xff]
    %v3957 = vld [vmem:[%s3955 + $0x8] sm:$0xff]
    %v3958 = vld [vmem:[%s3955 + $0x10] sm:$0xff]
    %v3959 = vld [vmem:[%s3955 + $0x18] sm:$0xff]
    %v3960 = vld [vmem:[%s3955 + $0x20] sm:$0xff]
    %v3961 = vld [vmem:[%s3955 + $0x28] sm:$0xff]
    %v3962 = vld [vmem:[%s3955 + $0x30] sm:$0xff]
    %v3963 = vld [vmem:[%s3955 + $0x38] sm:$0xff]
    %v3964 = vld [vmem:[%s3955 + $0x40] sm:$0xff]
    %v3965 = vld [vmem:[%s3955 + $0x48] sm:$0xff]
    %v3966 = vld [vmem:[%s3955 + $0x50] sm:$0xff]
    %v3967 = vld [vmem:[%s3955 + $0x58] sm:$0xff]
    %v3968 = vld [vmem:[%s3955 + $0x60] sm:$0xff]
    %v3969 = vld [vmem:[%s3955 + $0x68] sm:$0xff]
    %v3970 = vld [vmem:[%s3955 + $0x70] sm:$0xff]
    %v3971 = vld [vmem:[%s3955 + $0x78] sm:$0xff]
    %s3972 = scalar_lea.vmem %s16, 5
    %v3973 = vld [vmem:[%s3972] sm:$0x1]
    %v3975 = vlaneseq
    %v3976 = vshrl.u32 %v3975, 7
    %v3977 = vsub.s32 0, %v3976
    %v3978 = vrot.slane %v3973, %v3977
    %3980 = vmatprep.subr.mxu0 0.0
    %3981 = vmatpush1.msra.mxu0 %v3956
    %3982 = vmatprep.subr.mxu0 0.0
    %3983 = vmatpush1.msra.mxu0 %v3957
    %3984 = vmatprep.subr.mxu0 0.0
    %3985 = vmatpush1.msra.mxu0 %v3958
    %3986 = vmatprep.subr.mxu0 0.0
    %3987 = vmatpush1.msra.mxu0 %v3959
    %3988 = vmatprep.subr.mxu0 0.0
    %3989 = vmatpush1.msra.mxu0 %v3960
    %3990 = vmatprep.subr.mxu0 0.0
    %3991 = vmatpush1.msra.mxu0 %v3961
    %3992 = vmatprep.subr.mxu0 0.0
    %3993 = vmatpush1.msra.mxu0 %v3962
    %3994 = vmatprep.subr.mxu0 0.0
    %3995 = vmatpush1.msra.mxu0 %v3963
    %3996 = vmatprep.subr.mxu0 0.0
    %3997 = vmatpush1.msra.mxu0 %v3964
    %3998 = vmatprep.subr.mxu0 0.0
    %3999 = vmatpush1.msra.mxu0 %v3965
    %4000 = vmatprep.subr.mxu0 0.0
    %4001 = vmatpush1.msra.mxu0 %v3966
    %4002 = vmatprep.subr.mxu0 0.0
    %4003 = vmatpush1.msra.mxu0 %v3967
    %4004 = vmatprep.subr.mxu0 0.0
    %4005 = vmatpush1.msra.mxu0 %v3968
    %4006 = vmatprep.subr.mxu0 0.0
    %4007 = vmatpush1.msra.mxu0 %v3969
    %4008 = vmatprep.subr.mxu0 0.0
    %4009 = vmatpush1.msra.mxu0 %v3970
    %4010 = vmatprep.subr.mxu0 0.0
    %4011 = vmatpush1.msra.mxu0 %v3971
    %4012 = vmatprep.subr.mxu0 0.0
    %4013 = vmatpush1.msra.mxu0 0.0
    %4014 = vmatprep.subr.mxu0 0.0
    %4015 = vmatpush1.msra.mxu0 0.0
    %4016 = vmatprep.subr.mxu0 0.0
    %4017 = vmatpush1.msra.mxu0 0.0
    %4018 = vmatprep.subr.mxu0 0.0
    %4019 = vmatpush1.msra.mxu0 0.0
    %4020 = vmatprep.subr.mxu0 0.0
    %4021 = vmatpush1.msra.mxu0 0.0
    %4022 = vmatprep.subr.mxu0 0.0
    %4023 = vmatpush1.msra.mxu0 0.0
    %4024 = vmatprep.subr.mxu0 0.0
    %4025 = vmatpush1.msra.mxu0 0.0
    %4026 = vmatprep.subr.mxu0 0.0
    %4027 = vmatpush1.msra.mxu0 0.0
    %4028 = vmatprep.subr.mxu0 0.0
    %4029 = vmatpush1.msra.mxu0 0.0
    %4030 = vmatprep.subr.mxu0 0.0
    %4031 = vmatpush1.msra.mxu0 0.0
    %4032 = vmatprep.subr.mxu0 0.0
    %4033 = vmatpush1.msra.mxu0 0.0
    %4034 = vmatprep.subr.mxu0 0.0
    %4035 = vmatpush1.msra.mxu0 0.0
    %4036 = vmatprep.subr.mxu0 0.0
    %4037 = vmatpush1.msra.mxu0 0.0
    %4038 = vmatprep.subr.mxu0 0.0
    %4039 = vmatpush1.msra.mxu0 0.0
    %4040 = vmatprep.subr.mxu0 0.0
    %4041 = vmatpush1.msra.mxu0 0.0
    %4042 = vmatprep.subr.mxu0 0.0
    %4043 = vmatpush1.msra.mxu0 0.0
    %4044 = vmatprep.mubr.f32.mxu0 0.0
    %4045 = vmatmul.mubr.f32.gmra.mrb[0].mxu0 %v2439
    %v4046 = vpop.f32.mrb[0].mxu0
    %v4047 = vadd.f32 %v3978, %v4046
    %v4048 = vpop.f32.mrb[0].mxu0
    %4049 = vmatprep.mubr.f32.mxu0 0.0
    %4050 = vmatmul.mubr.f32.gmra.mrb[0].mxu0 %v2440
    %v4051 = vpop.f32.mrb[0].mxu0
    %v4052 = vadd.f32 %v3978, %v4051
    %v4053 = vpop.f32.mrb[0].mxu0
    %4054 = vdwg.mxu0
    %s4055 = scalar_lea.vmem [#allocation20], 640
    %v4056 = vld [vmem:[%s4055] sm:$0xff]
    %v4057 = vld [vmem:[%s4055 + $0x8] sm:$0xff]
    %v4058 = vld [vmem:[%s4055 + $0x10] sm:$0xff]
    %v4059 = vld [vmem:[%s4055 + $0x18] sm:$0xff]
    %v4060 = vld [vmem:[%s4055 + $0x20] sm:$0xff]
    %v4061 = vld [vmem:[%s4055 + $0x28] sm:$0xff]
    %v4062 = vld [vmem:[%s4055 + $0x30] sm:$0xff]
    %v4063 = vld [vmem:[%s4055 + $0x38] sm:$0xff]
    %v4064 = vld [vmem:[%s4055 + $0x40] sm:$0xff]
    %v4065 = vld [vmem:[%s4055 + $0x48] sm:$0xff]
    %v4066 = vld [vmem:[%s4055 + $0x50] sm:$0xff]
    %v4067 = vld [vmem:[%s4055 + $0x58] sm:$0xff]
    %v4068 = vld [vmem:[%s4055 + $0x60] sm:$0xff]
    %v4069 = vld [vmem:[%s4055 + $0x68] sm:$0xff]
    %v4070 = vld [vmem:[%s4055 + $0x70] sm:$0xff]
    %v4071 = vld [vmem:[%s4055 + $0x78] sm:$0xff]
    %s4072 = scalar_lea.vmem %s18, 5
    %v4073 = vld [vmem:[%s4072] sm:$0x1]
    %v4075 = vlaneseq
    %v4076 = vshrl.u32 %v4075, 7
    %v4077 = vsub.s32 0, %v4076
    %v4078 = vrot.slane %v4073, %v4077
    %4080 = vmatprep.subr.mxu0 0.0
    %4081 = vmatpush1.msra.mxu0 %v4056
    %4082 = vmatprep.subr.mxu0 0.0
    %4083 = vmatpush1.msra.mxu0 %v4057
    %4084 = vmatprep.subr.mxu0 0.0
    %4085 = vmatpush1.msra.mxu0 %v4058
    %4086 = vmatprep.subr.mxu0 0.0
    %4087 = vmatpush1.msra.mxu0 %v4059
    %4088 = vmatprep.subr.mxu0 0.0
    %4089 = vmatpush1.msra.mxu0 %v4060
    %4090 = vmatprep.subr.mxu0 0.0
    %4091 = vmatpush1.msra.mxu0 %v4061
    %4092 = vmatprep.subr.mxu0 0.0
    %4093 = vmatpush1.msra.mxu0 %v4062
    %4094 = vmatprep.subr.mxu0 0.0
    %4095 = vmatpush1.msra.mxu0 %v4063
    %4096 = vmatprep.subr.mxu0 0.0
    %4097 = vmatpush1.msra.mxu0 %v4064
    %4098 = vmatprep.subr.mxu0 0.0
    %4099 = vmatpush1.msra.mxu0 %v4065
    %4100 = vmatprep.subr.mxu0 0.0
    %4101 = vmatpush1.msra.mxu0 %v4066
    %4102 = vmatprep.subr.mxu0 0.0
    %4103 = vmatpush1.msra.mxu0 %v4067
    %4104 = vmatprep.subr.mxu0 0.0
    %4105 = vmatpush1.msra.mxu0 %v4068
    %4106 = vmatprep.subr.mxu0 0.0
    %4107 = vmatpush1.msra.mxu0 %v4069
    %4108 = vmatprep.subr.mxu0 0.0
    %4109 = vmatpush1.msra.mxu0 %v4070
    %4110 = vmatprep.subr.mxu0 0.0
    %4111 = vmatpush1.msra.mxu0 %v4071
    %4112 = vmatprep.subr.mxu0 0.0
    %4113 = vmatpush1.msra.mxu0 0.0
    %4114 = vmatprep.subr.mxu0 0.0
    %4115 = vmatpush1.msra.mxu0 0.0
    %4116 = vmatprep.subr.mxu0 0.0
    %4117 = vmatpush1.msra.mxu0 0.0
    %4118 = vmatprep.subr.mxu0 0.0
    %4119 = vmatpush1.msra.mxu0 0.0
    %4120 = vmatprep.subr.mxu0 0.0
    %4121 = vmatpush1.msra.mxu0 0.0
    %4122 = vmatprep.subr.mxu0 0.0
    %4123 = vmatpush1.msra.mxu0 0.0
    %4124 = vmatprep.subr.mxu0 0.0
    %4125 = vmatpush1.msra.mxu0 0.0
    %4126 = vmatprep.subr.mxu0 0.0
    %4127 = vmatpush1.msra.mxu0 0.0
    %4128 = vmatprep.subr.mxu0 0.0
    %4129 = vmatpush1.msra.mxu0 0.0
    %4130 = vmatprep.subr.mxu0 0.0
    %4131 = vmatpush1.msra.mxu0 0.0
    %4132 = vmatprep.subr.mxu0 0.0
    %4133 = vmatpush1.msra.mxu0 0.0
    %4134 = vmatprep.subr.mxu0 0.0
    %4135 = vmatpush1.msra.mxu0 0.0
    %4136 = vmatprep.subr.mxu0 0.0
    %4137 = vmatpush1.msra.mxu0 0.0
    %4138 = vmatprep.subr.mxu0 0.0
    %4139 = vmatpush1.msra.mxu0 0.0
    %4140 = vmatprep.subr.mxu0 0.0
    %4141 = vmatpush1.msra.mxu0 0.0
    %4142 = vmatprep.subr.mxu0 0.0
    %4143 = vmatpush1.msra.mxu0 0.0
    %4144 = vmatprep.mubr.f32.mxu0 0.0
    %4145 = vmatmul.mubr.f32.gmra.mrb[0].mxu0 %v4047
    %v4146 = vpop.f32.mrb[0].mxu0
    %v4147 = vadd.f32 %v4078, %v4146
    %v4148 = vpop.f32.mrb[0].mxu0
    %4149 = vmatprep.mubr.f32.mxu0 0.0
    %4150 = vmatmul.mubr.f32.gmra.mrb[0].mxu0 %v4052
    %v4151 = vpop.f32.mrb[0].mxu0
    %v4152 = vadd.f32 %v4078, %v4151
    %v4153 = vpop.f32.mrb[0].mxu0
    %4154 = vdwg.mxu0
    %v4155 = vmax.f32 %v4147, 0.0
    %v4156 = vmax.f32 %v4152, 0.0
    %s4157 = scalar_lea.vmem [#allocation22], 640
    %v4158 = vld [vmem:[%s4157] sm:$0xff]
    %v4159 = vld [vmem:[%s4157 + $0x8] sm:$0xff]
    %v4160 = vld [vmem:[%s4157 + $0x10] sm:$0xff]
    %v4161 = vld [vmem:[%s4157 + $0x18] sm:$0xff]
    %v4162 = vld [vmem:[%s4157 + $0x20] sm:$0xff]
    %v4163 = vld [vmem:[%s4157 + $0x28] sm:$0xff]
    %v4164 = vld [vmem:[%s4157 + $0x30] sm:$0xff]
    %v4165 = vld [vmem:[%s4157 + $0x38] sm:$0xff]
    %v4166 = vld [vmem:[%s4157 + $0x40] sm:$0xff]
    %v4167 = vld [vmem:[%s4157 + $0x48] sm:$0xff]
    %v4168 = vld [vmem:[%s4157 + $0x50] sm:$0xff]
    %v4169 = vld [vmem:[%s4157 + $0x58] sm:$0xff]
    %v4170 = vld [vmem:[%s4157 + $0x60] sm:$0xff]
    %v4171 = vld [vmem:[%s4157 + $0x68] sm:$0xff]
    %v4172 = vld [vmem:[%s4157 + $0x70] sm:$0xff]
    %v4173 = vld [vmem:[%s4157 + $0x78] sm:$0xff]
    %s4174 = scalar_lea.vmem %s20, 5
    %v4175 = vld [vmem:[%s4174] sm:$0x1]
    %v4177 = vlaneseq
    %v4178 = vshrl.u32 %v4177, 7
    %v4179 = vsub.s32 0, %v4178
    %v4180 = vrot.slane %v4175, %v4179
    %4182 = vmatprep.subr.mxu0 0.0
    %4183 = vmatpush1.msra.mxu0 %v4158
    %4184 = vmatprep.subr.mxu0 0.0
    %4185 = vmatpush1.msra.mxu0 %v4159
    %4186 = vmatprep.subr.mxu0 0.0
    %4187 = vmatpush1.msra.mxu0 %v4160
    %4188 = vmatprep.subr.mxu0 0.0
    %4189 = vmatpush1.msra.mxu0 %v4161
    %4190 = vmatprep.subr.mxu0 0.0
    %4191 = vmatpush1.msra.mxu0 %v4162
    %4192 = vmatprep.subr.mxu0 0.0
    %4193 = vmatpush1.msra.mxu0 %v4163
    %4194 = vmatprep.subr.mxu0 0.0
    %4195 = vmatpush1.msra.mxu0 %v4164
    %4196 = vmatprep.subr.mxu0 0.0
    %4197 = vmatpush1.msra.mxu0 %v4165
    %4198 = vmatprep.subr.mxu0 0.0
    %4199 = vmatpush1.msra.mxu0 %v4166
    %4200 = vmatprep.subr.mxu0 0.0
    %4201 = vmatpush1.msra.mxu0 %v4167
    %4202 = vmatprep.subr.mxu0 0.0
    %4203 = vmatpush1.msra.mxu0 %v4168
    %4204 = vmatprep.subr.mxu0 0.0
    %4205 = vmatpush1.msra.mxu0 %v4169
    %4206 = vmatprep.subr.mxu0 0.0
    %4207 = vmatpush1.msra.mxu0 %v4170
    %4208 = vmatprep.subr.mxu0 0.0
    %4209 = vmatpush1.msra.mxu0 %v4171
    %4210 = vmatprep.subr.mxu0 0.0
    %4211 = vmatpush1.msra.mxu0 %v4172
    %4212 = vmatprep.subr.mxu0 0.0
    %4213 = vmatpush1.msra.mxu0 %v4173
    %4214 = vmatprep.subr.mxu0 0.0
    %4215 = vmatpush1.msra.mxu0 0.0
    %4216 = vmatprep.subr.mxu0 0.0
    %4217 = vmatpush1.msra.mxu0 0.0
    %4218 = vmatprep.subr.mxu0 0.0
    %4219 = vmatpush1.msra.mxu0 0.0
    %4220 = vmatprep.subr.mxu0 0.0
    %4221 = vmatpush1.msra.mxu0 0.0
    %4222 = vmatprep.subr.mxu0 0.0
    %4223 = vmatpush1.msra.mxu0 0.0
    %4224 = vmatprep.subr.mxu0 0.0
    %4225 = vmatpush1.msra.mxu0 0.0
    %4226 = vmatprep.subr.mxu0 0.0
    %4227 = vmatpush1.msra.mxu0 0.0
    %4228 = vmatprep.subr.mxu0 0.0
    %4229 = vmatpush1.msra.mxu0 0.0
    %4230 = vmatprep.subr.mxu0 0.0
    %4231 = vmatpush1.msra.mxu0 0.0
    %4232 = vmatprep.subr.mxu0 0.0
    %4233 = vmatpush1.msra.mxu0 0.0
    %4234 = vmatprep.subr.mxu0 0.0
    %4235 = vmatpush1.msra.mxu0 0.0
    %4236 = vmatprep.subr.mxu0 0.0
    %4237 = vmatpush1.msra.mxu0 0.0
    %4238 = vmatprep.subr.mxu0 0.0
    %4239 = vmatpush1.msra.mxu0 0.0
    %4240 = vmatprep.subr.mxu0 0.0
    %4241 = vmatpush1.msra.mxu0 0.0
    %4242 = vmatprep.subr.mxu0 0.0
    %4243 = vmatpush1.msra.mxu0 0.0
    %4244 = vmatprep.subr.mxu0 0.0
    %4245 = vmatpush1.msra.mxu0 0.0
    %4246 = vmatprep.mubr.f32.mxu0 0.0
    %4247 = vmatmul.mubr.f32.gmra.mrb[0].mxu0 %v4155
    %v4248 = vpop.f32.mrb[0].mxu0
    %v4249 = vadd.f32 %v4180, %v4248
    %v4250 = vpop.f32.mrb[0].mxu0
    %4251 = vmatprep.mubr.f32.mxu0 0.0
    %4252 = vmatmul.mubr.f32.gmra.mrb[0].mxu0 %v4156
    %v4253 = vpop.f32.mrb[0].mxu0
    %v4254 = vadd.f32 %v4180, %v4253
    %v4255 = vpop.f32.mrb[0].mxu0
    %4256 = vdwg.mxu0
    %4257 = vst [vmem:[#allocation23 + $0x28] sm:$0xff] %v4249
    %4258 = vst [vmem:[#allocation23 + $0x58] sm:$0xff] %v4254
    // Predicated region
    $region138: #{tpu_custom_call.1} parent=1 // pred_check
      _
    $region139: #{tpu_custom_call.1} parent=1 // pred_check_branch
      %4260 = sbr.rel (0) target = $region141
    $region140: #{tpu_custom_call.1} parent=1 // pred_region
      %s4262 = ssub.s32 1536, 1536
      %4263 = vsyncadd [#allocation4], %s4262
      %s4264 = sshll.u32 [#allocation23], 4
      %s4265 = int_to_ptr.vmem [resolvable:$true] %s4264
      %4270 = dma.vmem_to_hbm [thread:$0]  %s4265, 1536, %s21, [#allocation4], 768, 768, 48
    $region141: #{tpu_custom_call.1} parent=1 // pred_fallthru
      _
    // Predicated region
    $region142: #{tpu_custom_call.1} parent=1 // pred_check
      _
    $region143: #{tpu_custom_call.1} parent=1 // pred_check_branch
      %4272 = sbr.rel (0) target = $region145
    $region144: #{tpu_custom_call.1} parent=1 // pred_region
      %4273 = dma.done [#allocation4], 1536
    $region145: #{tpu_custom_call.1} parent=1 // pred_fallthru
      _
    %4274 = vsyncpa [#allocation3], 1
    %4275 = vsyncpa [#allocation6], 1
    %4276 = vsyncpa [#allocation9], 1
    %4277 = vsyncpa [#allocation12], 1
    %4278 = vsyncpa [#allocation15], 1
    %4279 = vsyncpa [#allocation18], 1
    %4280 = vsyncpa [#allocation21], 1
    %4281 = vsyncpa [#allocation4], 1

</llo_original>
